<compile_context>
chip_gen: v6e
topology: v6e:2x2x1
jax: 0.10.0
libtpu: 0.0.40
codegen_flags: <defaults>
</compile_context>

<pallas_src>
import functools

import jax
import jax.numpy as jnp
import numpy as np
from jax.experimental import pallas as pl
from jax.experimental.pallas import tpu as pltpu

_BN_EPS = 1e-5


def _double_conv_kernel(x_ref, w1_ref, s1_ref, t1_ref, w2_ref, s2_ref, t2_ref,
                        o_ref, xp_ref, hp_ref, pat1_ref, pat2_ref, *, use_bf16):
    """Fused double conv for one batch element.

    x_ref : (1, H, W, Cin)          input tile
    w1_ref: (9*Cin, Cout)           conv1 taps folded along K (dy, dx, cin)
    s1/t1 : (1, Cout)               folded BN scale / shift (or 1 / bias)
    w2_ref: (9*Cout, Cout)          conv2 taps folded along K
    s2/t2 : (1, Cout)
    o_ref : (1, H, W, Cout)         output tile
    xp_ref: (H+2, W+2, Cin)  VMEM   zero-padded input scratch
    hp_ref: (H+2, W+2, Cout) VMEM   zero-padded intermediate scratch (never hits HBM)
    pat*  : (H*W, 9*C)       VMEM   im2col patch scratch for the single large-K dot
    """
    H, W, cout = o_ref.shape[1], o_ref.shape[2], o_ref.shape[3]
    cin = x_ref.shape[3]

    def conv_bn_relu(src_ref, pat_ref, c, w_ref, s_ref, t_ref):
        # Pack the 3x3 halo taps into an im2col matrix (H*W, 9*c) held in VMEM, then
        # do a single K=9*c MXU contraction instead of 9 small K=c matmuls.
        for idx in range(9):
            dy, dx = idx // 3, idx % 3
            pat_ref[:, idx * c:(idx + 1) * c] = (
                src_ref[dy:dy + H, dx:dx + W, :].reshape(H * W, c))
        a = pat_ref[...]
        w = w_ref[...]
        if use_bf16:  # optional half-precision MXU path (f32 accumulate kept)
            a = a.astype(jnp.bfloat16)
            w = w.astype(jnp.bfloat16)
        y = jnp.dot(a, w, preferred_element_type=jnp.float32)   # (H*W, cout) f32
        y = y * s_ref[...] + t_ref[...]                          # folded BN / bias
        return jnp.maximum(y, 0.0)                               # ReLU

    # In-kernel zero padding (replaces the wrapper-side jnp.pad + extra HBM pass):
    # zero the padded scratch, then overwrite the interior with the input tile.
    xp_ref[...] = jnp.zeros_like(xp_ref)
    xp_ref[1:H + 1, 1:W + 1, :] = x_ref[0]

    h = conv_bn_relu(xp_ref, pat1_ref, cin, w1_ref, s1_ref, t1_ref)

    # Intermediate activation stays in VMEM (padded so conv2 can read its halo).
    hp_ref[...] = jnp.zeros_like(hp_ref)
    hp_ref[1:H + 1, 1:W + 1, :] = h.reshape(H, W, cout)

    y = conv_bn_relu(hp_ref, pat2_ref, cout, w2_ref, s2_ref, t2_ref)
    o_ref[0] = y.reshape(H, W, cout).astype(o_ref.dtype)


def double_conv_pallas(x_nhwc, w1f, s1, t1, w2f, s2, t2, *, use_bf16=False):
    N, H, W, cin = x_nhwc.shape
    cout = w1f.shape[1]
    kernel = functools.partial(_double_conv_kernel, use_bf16=use_bf16)
    return pl.pallas_call(
        kernel,
        out_shape=jax.ShapeDtypeStruct((N, H, W, cout), x_nhwc.dtype),
        grid_spec=pltpu.PrefetchScalarGridSpec(
            num_scalar_prefetch=0,
            grid=(N,),
            in_specs=[
                pl.BlockSpec((1, H, W, cin), lambda n: (n, 0, 0, 0)),
                pl.BlockSpec((9 * cin, cout), lambda n: (0, 0)),
                pl.BlockSpec((1, cout), lambda n: (0, 0)),
                pl.BlockSpec((1, cout), lambda n: (0, 0)),
                pl.BlockSpec((9 * cout, cout), lambda n: (0, 0)),
                pl.BlockSpec((1, cout), lambda n: (0, 0)),
                pl.BlockSpec((1, cout), lambda n: (0, 0)),
            ],
            out_specs=pl.BlockSpec((1, H, W, cout), lambda n: (n, 0, 0, 0)),
            scratch_shapes=[
                pltpu.VMEM((H + 2, W + 2, cin), jnp.float32),    # padded input
                pltpu.VMEM((H + 2, W + 2, cout), jnp.float32),   # padded intermediate
                pltpu.VMEM((H * W, 9 * cin), jnp.float32),       # im2col for conv1
                pltpu.VMEM((H * W, 9 * cout), jnp.float32),      # im2col for conv2
            ],
        ),
        compiler_params=pltpu.CompilerParams(dimension_semantics=("parallel",)),
    )(x_nhwc, w1f, s1, t1, w2f, s2, t2)


def init_double_conv_params(key, in_channels, out_channels, batch_norm=True):
    """Deterministic synthetic params; PyTorch Conv2d weight layout (Cout, Cin, 3, 3)."""
    ks = jax.random.split(key, 6)

    def conv_w(k, cin, cout):
        bound = 1.0 / np.sqrt(cin * 9)
        return jax.random.uniform(k, (cout, cin, 3, 3), jnp.float32, -bound, bound)

    params = {"w1": conv_w(ks[0], in_channels, out_channels),
              "w2": conv_w(ks[1], out_channels, out_channels)}
    if batch_norm:
        def bn(k4, c):
            kg, kb, km, kv = jax.random.split(k4, 4)
            return {"gamma": jax.random.uniform(kg, (c,), jnp.float32, 0.5, 1.5),
                    "beta": 0.1 * jax.random.normal(kb, (c,), jnp.float32),
                    "mean": 0.1 * jax.random.normal(km, (c,), jnp.float32),
                    "var": jax.random.uniform(kv, (c,), jnp.float32, 0.5, 1.5)}
        params["bn1"] = bn(ks[2], out_channels)
        params["bn2"] = bn(ks[3], out_channels)
    else:
        def conv_b(k, cin, c):
            bound = 1.0 / np.sqrt(cin * 9)
            return jax.random.uniform(k, (c,), jnp.float32, -bound, bound)
        params["b1"] = conv_b(ks[4], in_channels, out_channels)
        params["b2"] = conv_b(ks[5], out_channels, out_channels)
    return params


def _fold_weight(w_pt):
    # (Cout, Cin, 3, 3) -> (9*Cin, Cout); K ordered (dy, dx) row-major, cin fastest,
    # matching the im2col packing in the kernel.
    cout, cin = w_pt.shape[0], w_pt.shape[1]
    return jnp.transpose(w_pt, (2, 3, 1, 0)).reshape(9 * cin, cout)


def _fold_affine(params):
    # TODO(synk): training-mode BatchNorm (batch statistics + running-stat updates)
    # is not implemented; this is eval-mode BN folded to per-channel scale/shift.
    if "bn1" in params:
        def fold(bn):
            scale = bn["gamma"] / jnp.sqrt(bn["var"] + _BN_EPS)
            shift = bn["beta"] - bn["mean"] * scale
            return scale[None, :].astype(jnp.float32), shift[None, :].astype(jnp.float32)
        s1, t1 = fold(params["bn1"])
        s2, t2 = fold(params["bn2"])
    else:
        cout = params["b1"].shape[0]
        s1 = jnp.ones((1, cout), jnp.float32)
        t1 = params["b1"][None, :]
        s2 = jnp.ones((1, cout), jnp.float32)
        t2 = params["b2"][None, :]
    return s1, t1, s2, t2


@functools.partial(jax.jit, static_argnames=("use_bf16",))
def double_conv_forward(params, x_nchw, use_bf16=False):
    """Matches DoubleConv_2.forward (eval mode): returns NCHW activation."""
    x = jnp.transpose(x_nchw, (0, 2, 3, 1)).astype(jnp.float32)   # NCHW -> NHWC
    w1f = _fold_weight(params["w1"])
    w2f = _fold_weight(params["w2"])
    s1, t1, s2, t2 = _fold_affine(params)
    y = double_conv_pallas(x, w1f, s1, t1, w2f, s2, t2, use_bf16=use_bf16)
    return jnp.transpose(y, (0, 3, 1, 2))                         # NHWC -> NCHW


def _reference(params, x_nchw):
    """Pure-JAX reference (XLA conv, explicit eval-mode BN), NCHW like PyTorch."""
    def conv(x, w):
        return jax.lax.conv_general_dilated(
            x, w, (1, 1), ((1, 1), (1, 1)),
            dimension_numbers=("NCHW", "OIHW", "NCHW"))

    def bn(x, p):
        inv = (p["gamma"] / jnp.sqrt(p["var"] + _BN_EPS))[None, :, None, None]
        return (x - p["mean"][None, :, None, None]) * inv + p["beta"][None, :, None, None]

    h = conv(x_nchw, params["w1"])
    h = bn(h, params["bn1"]) if "bn1" in params else h + params["b1"][None, :, None, None]
    h = jax.nn.relu(h)
    y = conv(h, params["w2"])
    y = bn(y, params["bn2"]) if "bn2" in params else y + params["b2"][None, :, None, None]
    return jax.nn.relu(y)


if __name__ == "__main__":
    key = jax.random.PRNGKey(0)
    k_x, k_p = jax.random.split(key)

    N, Cin, Cout, H, W = 2, 4, 8, 16, 16
    x = jax.random.normal(k_x, (N, Cin, H, W), dtype=jnp.float32)
    params = init_double_conv_params(k_p, Cin, Cout, batch_norm=True)

    y = double_conv_forward(params, x)
    y = jax.block_until_ready(y)
    assert y.shape == (N, Cout, H, W), y.shape

    y_ref = _reference(params, x)
    np.testing.assert_allclose(np.asarray(y), np.asarray(y_ref), rtol=1e-4, atol=1e-4)

    print("KERNEL_OK")
</pallas_src>

<mosaic_0001>
module attributes {stable_mosaic.version = 11 : i64} {
  func.func @_double_conv_kernel(%arg0: i32, %arg1: memref<1x16x16x4xf32, #tpu.memory_space<vmem>>, %arg2: memref<36x8xf32, #tpu.memory_space<vmem>>, %arg3: memref<1x8xf32, #tpu.memory_space<vmem>>, %arg4: memref<1x8xf32, #tpu.memory_space<vmem>>, %arg5: memref<72x8xf32, #tpu.memory_space<vmem>>, %arg6: memref<1x8xf32, #tpu.memory_space<vmem>>, %arg7: memref<1x8xf32, #tpu.memory_space<vmem>>, %arg8: memref<1x16x16x8xf32, #tpu.memory_space<vmem>>, %arg9: memref<18x18x4xf32, #tpu.memory_space<vmem>>, %arg10: memref<18x18x8xf32, #tpu.memory_space<vmem>>, %arg11: memref<256x36xf32, #tpu.memory_space<vmem>>, %arg12: memref<256x72xf32, #tpu.memory_space<vmem>>) attributes {dimension_semantics = [#tpu.dimension_semantics<parallel>], iteration_bounds = array<i64: 2>, scalar_prefetch = 0 : i64, scratch_operands = 4 : i64, tpu.core_type = #tpu.core_type<tc>, window_params = [{transform_indices = @transform_0, window_bounds = array<i64: 1, 16, 16, 4>}, {pipeline_mode = #tpu.pipeline_mode<synchronous>, transform_indices = @transform_1, window_bounds = array<i64: 36, 8>}, {pipeline_mode = #tpu.pipeline_mode<synchronous>, transform_indices = @transform_2, window_bounds = array<i64: 1, 8>}, {pipeline_mode = #tpu.pipeline_mode<synchronous>, transform_indices = @transform_3, window_bounds = array<i64: 1, 8>}, {pipeline_mode = #tpu.pipeline_mode<synchronous>, transform_indices = @transform_4, window_bounds = array<i64: 72, 8>}, {pipeline_mode = #tpu.pipeline_mode<synchronous>, transform_indices = @transform_5, window_bounds = array<i64: 1, 8>}, {pipeline_mode = #tpu.pipeline_mode<synchronous>, transform_indices = @transform_6, window_bounds = array<i64: 1, 8>}, {transform_indices = @transform_7, window_bounds = array<i64: 1, 16, 16, 8>}]} {
    %cst = arith.constant 0.000000e+00 : f32
    %0 = vector.broadcast %cst : f32 to vector<18x18x4xf32>
    %c0 = arith.constant 0 : index
    %c0_0 = arith.constant 0 : index
    %c0_1 = arith.constant 0 : index
    %1 = vector.load %arg9[%c0, %c0_0, %c0_1] : memref<18x18x4xf32, #tpu.memory_space<vmem>>, vector<18x18x4xf32>
    tpu.vector_store %arg9[%c0, %c0_0, %c0_1], %0 {strides = array<i32>} : memref<18x18x4xf32, #tpu.memory_space<vmem>>, vector<18x18x4xf32>,
    %c0_2 = arith.constant 0 : index
    %c0_3 = arith.constant 0 : index
    %c0_4 = arith.constant 0 : index
    %c0_5 = arith.constant 0 : index
    %2 = vector.load %arg1[%c0_2, %c0_3, %c0_4, %c0_5] : memref<1x16x16x4xf32, #tpu.memory_space<vmem>>, vector<1x16x16x4xf32>
    %3 = vector.shape_cast %2 : vector<1x16x16x4xf32> to vector<16x16x4xf32>
    %c1 = arith.constant 1 : index
    %c1_6 = arith.constant 1 : index
    %c0_7 = arith.constant 0 : index
    %4 = vector.load %arg9[%c1, %c1_6, %c0_7] : memref<18x18x4xf32, #tpu.memory_space<vmem>>, vector<16x16x4xf32>
    tpu.vector_store %arg9[%c1, %c1_6, %c0_7], %3 {strides = array<i32>} : memref<18x18x4xf32, #tpu.memory_space<vmem>>, vector<16x16x4xf32>,
    %c0_8 = arith.constant 0 : index
    %c0_9 = arith.constant 0 : index
    %c0_10 = arith.constant 0 : index
    %5 = vector.load %arg9[%c0_8, %c0_9, %c0_10] : memref<18x18x4xf32, #tpu.memory_space<vmem>>, vector<16x16x4xf32>
    %6 = vector.shape_cast %5 : vector<16x16x4xf32> to vector<256x4xf32>
    %c0_11 = arith.constant 0 : index
    %c0_12 = arith.constant 0 : index
    %7 = vector.load %arg11[%c0_11, %c0_12] : memref<256x36xf32, #tpu.memory_space<vmem>>, vector<256x4xf32>
    tpu.vector_store %arg11[%c0_11, %c0_12], %6 {strides = array<i32>} : memref<256x36xf32, #tpu.memory_space<vmem>>, vector<256x4xf32>,
    %c0_13 = arith.constant 0 : index
    %c1_14 = arith.constant 1 : index
    %c0_15 = arith.constant 0 : index
    %8 = vector.load %arg9[%c0_13, %c1_14, %c0_15] : memref<18x18x4xf32, #tpu.memory_space<vmem>>, vector<16x16x4xf32>
    %9 = vector.shape_cast %8 : vector<16x16x4xf32> to vector<256x4xf32>
    %c0_16 = arith.constant 0 : index
    %c4 = arith.constant 4 : index
    %10 = vector.load %arg11[%c0_16, %c4] : memref<256x36xf32, #tpu.memory_space<vmem>>, vector<256x4xf32>
    tpu.vector_store %arg11[%c0_16, %c4], %9 {strides = array<i32>} : memref<256x36xf32, #tpu.memory_space<vmem>>, vector<256x4xf32>,
    %c0_17 = arith.constant 0 : index
    %c2 = arith.constant 2 : index
    %c0_18 = arith.constant 0 : index
    %11 = vector.load %arg9[%c0_17, %c2, %c0_18] : memref<18x18x4xf32, #tpu.memory_space<vmem>>, vector<16x16x4xf32>
    %12 = vector.shape_cast %11 : vector<16x16x4xf32> to vector<256x4xf32>
    %c0_19 = arith.constant 0 : index
    %c8 = arith.constant 8 : index
    %13 = vector.load %arg11[%c0_19, %c8] : memref<256x36xf32, #tpu.memory_space<vmem>>, vector<256x4xf32>
    tpu.vector_store %arg11[%c0_19, %c8], %12 {strides = array<i32>} : memref<256x36xf32, #tpu.memory_space<vmem>>, vector<256x4xf32>,
    %c1_20 = arith.constant 1 : index
    %c0_21 = arith.constant 0 : index
    %c0_22 = arith.constant 0 : index
    %14 = vector.load %arg9[%c1_20, %c0_21, %c0_22] : memref<18x18x4xf32, #tpu.memory_space<vmem>>, vector<16x16x4xf32>
    %15 = vector.shape_cast %14 : vector<16x16x4xf32> to vector<256x4xf32>
    %c0_23 = arith.constant 0 : index
    %c12 = arith.constant 12 : index
    %16 = vector.load %arg11[%c0_23, %c12] : memref<256x36xf32, #tpu.memory_space<vmem>>, vector<256x4xf32>
    tpu.vector_store %arg11[%c0_23, %c12], %15 {strides = array<i32>} : memref<256x36xf32, #tpu.memory_space<vmem>>, vector<256x4xf32>,
    %c1_24 = arith.constant 1 : index
    %c1_25 = arith.constant 1 : index
    %c0_26 = arith.constant 0 : index
    %17 = vector.load %arg9[%c1_24, %c1_25, %c0_26] : memref<18x18x4xf32, #tpu.memory_space<vmem>>, vector<16x16x4xf32>
    %18 = vector.shape_cast %17 : vector<16x16x4xf32> to vector<256x4xf32>
    %c0_27 = arith.constant 0 : index
    %c16 = arith.constant 16 : index
    %19 = vector.load %arg11[%c0_27, %c16] : memref<256x36xf32, #tpu.memory_space<vmem>>, vector<256x4xf32>
    tpu.vector_store %arg11[%c0_27, %c16], %18 {strides = array<i32>} : memref<256x36xf32, #tpu.memory_space<vmem>>, vector<256x4xf32>,
    %c1_28 = arith.constant 1 : index
    %c2_29 = arith.constant 2 : index
    %c0_30 = arith.constant 0 : index
    %20 = vector.load %arg9[%c1_28, %c2_29, %c0_30] : memref<18x18x4xf32, #tpu.memory_space<vmem>>, vector<16x16x4xf32>
    %21 = vector.shape_cast %20 : vector<16x16x4xf32> to vector<256x4xf32>
    %c0_31 = arith.constant 0 : index
    %c20 = arith.constant 20 : index
    %22 = vector.load %arg11[%c0_31, %c20] : memref<256x36xf32, #tpu.memory_space<vmem>>, vector<256x4xf32>
    tpu.vector_store %arg11[%c0_31, %c20], %21 {strides = array<i32>} : memref<256x36xf32, #tpu.memory_space<vmem>>, vector<256x4xf32>,
    %c2_32 = arith.constant 2 : index
    %c0_33 = arith.constant 0 : index
    %c0_34 = arith.constant 0 : index
    %23 = vector.load %arg9[%c2_32, %c0_33, %c0_34] : memref<18x18x4xf32, #tpu.memory_space<vmem>>, vector<16x16x4xf32>
    %24 = vector.shape_cast %23 : vector<16x16x4xf32> to vector<256x4xf32>
    %c0_35 = arith.constant 0 : index
    %c24 = arith.constant 24 : index
    %25 = vector.load %arg11[%c0_35, %c24] : memref<256x36xf32, #tpu.memory_space<vmem>>, vector<256x4xf32>
    tpu.vector_store %arg11[%c0_35, %c24], %24 {strides = array<i32>} : memref<256x36xf32, #tpu.memory_space<vmem>>, vector<256x4xf32>,
    %c2_36 = arith.constant 2 : index
    %c1_37 = arith.constant 1 : index
    %c0_38 = arith.constant 0 : index
    %26 = vector.load %arg9[%c2_36, %c1_37, %c0_38] : memref<18x18x4xf32, #tpu.memory_space<vmem>>, vector<16x16x4xf32>
    %27 = vector.shape_cast %26 : vector<16x16x4xf32> to vector<256x4xf32>
    %c0_39 = arith.constant 0 : index
    %c28 = arith.constant 28 : index
    %28 = vector.load %arg11[%c0_39, %c28] : memref<256x36xf32, #tpu.memory_space<vmem>>, vector<256x4xf32>
    tpu.vector_store %arg11[%c0_39, %c28], %27 {strides = array<i32>} : memref<256x36xf32, #tpu.memory_space<vmem>>, vector<256x4xf32>,
    %c2_40 = arith.constant 2 : index
    %c2_41 = arith.constant 2 : index
    %c0_42 = arith.constant 0 : index
    %29 = vector.load %arg9[%c2_40, %c2_41, %c0_42] : memref<18x18x4xf32, #tpu.memory_space<vmem>>, vector<16x16x4xf32>
    %30 = vector.shape_cast %29 : vector<16x16x4xf32> to vector<256x4xf32>
    %c0_43 = arith.constant 0 : index
    %c32 = arith.constant 32 : index
    %31 = vector.load %arg11[%c0_43, %c32] : memref<256x36xf32, #tpu.memory_space<vmem>>, vector<256x4xf32>
    tpu.vector_store %arg11[%c0_43, %c32], %30 {strides = array<i32>} : memref<256x36xf32, #tpu.memory_space<vmem>>, vector<256x4xf32>,
    %c0_44 = arith.constant 0 : index
    %c0_45 = arith.constant 0 : index
    %32 = vector.load %arg11[%c0_44, %c0_45] : memref<256x36xf32, #tpu.memory_space<vmem>>, vector<256x36xf32>
    %c0_46 = arith.constant 0 : index
    %c0_47 = arith.constant 0 : index
    %33 = vector.load %arg2[%c0_46, %c0_47] : memref<36x8xf32, #tpu.memory_space<vmem>>, vector<36x8xf32>
    %cst_48 = arith.constant dense<0.000000e+00> : vector<256x8xf32>
    %34 = tpu.matmul %32, %33, %cst_48 {dimension_numbers = #tpu.dot_dimension_numbers<[1], [0], [0], [1], [0, 0, 1, 1], [], []>} : vector<256x36xf32>, vector<36x8xf32>, vector<256x8xf32> -> vector<256x8xf32>
    %c0_49 = arith.constant 0 : index
    %c0_50 = arith.constant 0 : index
    %35 = vector.load %arg3[%c0_49, %c0_50] : memref<1x8xf32, #tpu.memory_space<vmem>>, vector<1x8xf32>
    %36 = vector.broadcast %35 : vector<1x8xf32> to vector<256x8xf32>
    %37 = arith.mulf %34, %36 : vector<256x8xf32>
    %c0_51 = arith.constant 0 : index
    %c0_52 = arith.constant 0 : index
    %38 = vector.load %arg4[%c0_51, %c0_52] : memref<1x8xf32, #tpu.memory_space<vmem>>, vector<1x8xf32>
    %39 = vector.broadcast %38 : vector<1x8xf32> to vector<256x8xf32>
    %40 = arith.addf %37, %39 : vector<256x8xf32>
    %cst_53 = arith.constant 0.000000e+00 : f32
    %41 = vector.broadcast %cst_53 : f32 to vector<256x8xf32>
    %42 = arith.maximumf %40, %41 : vector<256x8xf32>
    %cst_54 = arith.constant 0.000000e+00 : f32
    %43 = vector.broadcast %cst_54 : f32 to vector<18x18x8xf32>
    %c0_55 = arith.constant 0 : index
    %c0_56 = arith.constant 0 : index
    %c0_57 = arith.constant 0 : index
    %44 = vector.load %arg10[%c0_55, %c0_56, %c0_57] : memref<18x18x8xf32, #tpu.memory_space<vmem>>, vector<18x18x8xf32>
    tpu.vector_store %arg10[%c0_55, %c0_56, %c0_57], %43 {strides = array<i32>} : memref<18x18x8xf32, #tpu.memory_space<vmem>>, vector<18x18x8xf32>,
    %45 = vector.shape_cast %42 : vector<256x8xf32> to vector<16x16x8xf32>
    %c1_58 = arith.constant 1 : index
    %c1_59 = arith.constant 1 : index
    %c0_60 = arith.constant 0 : index
    %46 = vector.load %arg10[%c1_58, %c1_59, %c0_60] : memref<18x18x8xf32, #tpu.memory_space<vmem>>, vector<16x16x8xf32>
    tpu.vector_store %arg10[%c1_58, %c1_59, %c0_60], %45 {strides = array<i32>} : memref<18x18x8xf32, #tpu.memory_space<vmem>>, vector<16x16x8xf32>,
    %c0_61 = arith.constant 0 : index
    %c0_62 = arith.constant 0 : index
    %c0_63 = arith.constant 0 : index
    %47 = vector.load %arg10[%c0_61, %c0_62, %c0_63] : memref<18x18x8xf32, #tpu.memory_space<vmem>>, vector<16x16x8xf32>
    %48 = vector.shape_cast %47 : vector<16x16x8xf32> to vector<256x8xf32>
    %c0_64 = arith.constant 0 : index
    %c0_65 = arith.constant 0 : index
    %49 = vector.load %arg12[%c0_64, %c0_65] : memref<256x72xf32, #tpu.memory_space<vmem>>, vector<256x8xf32>
    tpu.vector_store %arg12[%c0_64, %c0_65], %48 {strides = array<i32>} : memref<256x72xf32, #tpu.memory_space<vmem>>, vector<256x8xf32>,
    %c0_66 = arith.constant 0 : index
    %c1_67 = arith.constant 1 : index
    %c0_68 = arith.constant 0 : index
    %50 = vector.load %arg10[%c0_66, %c1_67, %c0_68] : memref<18x18x8xf32, #tpu.memory_space<vmem>>, vector<16x16x8xf32>
    %51 = vector.shape_cast %50 : vector<16x16x8xf32> to vector<256x8xf32>
    %c0_69 = arith.constant 0 : index
    %c8_70 = arith.constant 8 : index
    %52 = vector.load %arg12[%c0_69, %c8_70] : memref<256x72xf32, #tpu.memory_space<vmem>>, vector<256x8xf32>
    tpu.vector_store %arg12[%c0_69, %c8_70], %51 {strides = array<i32>} : memref<256x72xf32, #tpu.memory_space<vmem>>, vector<256x8xf32>,
    %c0_71 = arith.constant 0 : index
    %c2_72 = arith.constant 2 : index
    %c0_73 = arith.constant 0 : index
    %53 = vector.load %arg10[%c0_71, %c2_72, %c0_73] : memref<18x18x8xf32, #tpu.memory_space<vmem>>, vector<16x16x8xf32>
    %54 = vector.shape_cast %53 : vector<16x16x8xf32> to vector<256x8xf32>
    %c0_74 = arith.constant 0 : index
    %c16_75 = arith.constant 16 : index
    %55 = vector.load %arg12[%c0_74, %c16_75] : memref<256x72xf32, #tpu.memory_space<vmem>>, vector<256x8xf32>
    tpu.vector_store %arg12[%c0_74, %c16_75], %54 {strides = array<i32>} : memref<256x72xf32, #tpu.memory_space<vmem>>, vector<256x8xf32>,
    %c1_76 = arith.constant 1 : index
    %c0_77 = arith.constant 0 : index
    %c0_78 = arith.constant 0 : index
    %56 = vector.load %arg10[%c1_76, %c0_77, %c0_78] : memref<18x18x8xf32, #tpu.memory_space<vmem>>, vector<16x16x8xf32>
    %57 = vector.shape_cast %56 : vector<16x16x8xf32> to vector<256x8xf32>
    %c0_79 = arith.constant 0 : index
    %c24_80 = arith.constant 24 : index
    %58 = vector.load %arg12[%c0_79, %c24_80] : memref<256x72xf32, #tpu.memory_space<vmem>>, vector<256x8xf32>
    tpu.vector_store %arg12[%c0_79, %c24_80], %57 {strides = array<i32>} : memref<256x72xf32, #tpu.memory_space<vmem>>, vector<256x8xf32>,
    %c1_81 = arith.constant 1 : index
    %c1_82 = arith.constant 1 : index
    %c0_83 = arith.constant 0 : index
    %59 = vector.load %arg10[%c1_81, %c1_82, %c0_83] : memref<18x18x8xf32, #tpu.memory_space<vmem>>, vector<16x16x8xf32>
    %60 = vector.shape_cast %59 : vector<16x16x8xf32> to vector<256x8xf32>
    %c0_84 = arith.constant 0 : index
    %c32_85 = arith.constant 32 : index
    %61 = vector.load %arg12[%c0_84, %c32_85] : memref<256x72xf32, #tpu.memory_space<vmem>>, vector<256x8xf32>
    tpu.vector_store %arg12[%c0_84, %c32_85], %60 {strides = array<i32>} : memref<256x72xf32, #tpu.memory_space<vmem>>, vector<256x8xf32>,
    %c1_86 = arith.constant 1 : index
    %c2_87 = arith.constant 2 : index
    %c0_88 = arith.constant 0 : index
    %62 = vector.load %arg10[%c1_86, %c2_87, %c0_88] : memref<18x18x8xf32, #tpu.memory_space<vmem>>, vector<16x16x8xf32>
    %63 = vector.shape_cast %62 : vector<16x16x8xf32> to vector<256x8xf32>
    %c0_89 = arith.constant 0 : index
    %c40 = arith.constant 40 : index
    %64 = vector.load %arg12[%c0_89, %c40] : memref<256x72xf32, #tpu.memory_space<vmem>>, vector<256x8xf32>
    tpu.vector_store %arg12[%c0_89, %c40], %63 {strides = array<i32>} : memref<256x72xf32, #tpu.memory_space<vmem>>, vector<256x8xf32>,
    %c2_90 = arith.constant 2 : index
    %c0_91 = arith.constant 0 : index
    %c0_92 = arith.constant 0 : index
    %65 = vector.load %arg10[%c2_90, %c0_91, %c0_92] : memref<18x18x8xf32, #tpu.memory_space<vmem>>, vector<16x16x8xf32>
    %66 = vector.shape_cast %65 : vector<16x16x8xf32> to vector<256x8xf32>
    %c0_93 = arith.constant 0 : index
    %c48 = arith.constant 48 : index
    %67 = vector.load %arg12[%c0_93, %c48] : memref<256x72xf32, #tpu.memory_space<vmem>>, vector<256x8xf32>
    tpu.vector_store %arg12[%c0_93, %c48], %66 {strides = array<i32>} : memref<256x72xf32, #tpu.memory_space<vmem>>, vector<256x8xf32>,
    %c2_94 = arith.constant 2 : index
    %c1_95 = arith.constant 1 : index
    %c0_96 = arith.constant 0 : index
    %68 = vector.load %arg10[%c2_94, %c1_95, %c0_96] : memref<18x18x8xf32, #tpu.memory_space<vmem>>, vector<16x16x8xf32>
    %69 = vector.shape_cast %68 : vector<16x16x8xf32> to vector<256x8xf32>
    %c0_97 = arith.constant 0 : index
    %c56 = arith.constant 56 : index
    %70 = vector.load %arg12[%c0_97, %c56] : memref<256x72xf32, #tpu.memory_space<vmem>>, vector<256x8xf32>
    tpu.vector_store %arg12[%c0_97, %c56], %69 {strides = array<i32>} : memref<256x72xf32, #tpu.memory_space<vmem>>, vector<256x8xf32>,
    %c2_98 = arith.constant 2 : index
    %c2_99 = arith.constant 2 : index
    %c0_100 = arith.constant 0 : index
    %71 = vector.load %arg10[%c2_98, %c2_99, %c0_100] : memref<18x18x8xf32, #tpu.memory_space<vmem>>, vector<16x16x8xf32>
    %72 = vector.shape_cast %71 : vector<16x16x8xf32> to vector<256x8xf32>
    %c0_101 = arith.constant 0 : index
    %c64 = arith.constant 64 : index
    %73 = vector.load %arg12[%c0_101, %c64] : memref<256x72xf32, #tpu.memory_space<vmem>>, vector<256x8xf32>
    tpu.vector_store %arg12[%c0_101, %c64], %72 {strides = array<i32>} : memref<256x72xf32, #tpu.memory_space<vmem>>, vector<256x8xf32>,
    %c0_102 = arith.constant 0 : index
    %c0_103 = arith.constant 0 : index
    %74 = vector.load %arg12[%c0_102, %c0_103] : memref<256x72xf32, #tpu.memory_space<vmem>>, vector<256x72xf32>
    %c0_104 = arith.constant 0 : index
    %c0_105 = arith.constant 0 : index
    %75 = vector.load %arg5[%c0_104, %c0_105] : memref<72x8xf32, #tpu.memory_space<vmem>>, vector<72x8xf32>
    %cst_106 = arith.constant dense<0.000000e+00> : vector<256x8xf32>
    %76 = tpu.matmul %74, %75, %cst_106 {dimension_numbers = #tpu.dot_dimension_numbers<[1], [0], [0], [1], [0, 0, 1, 1], [], []>} : vector<256x72xf32>, vector<72x8xf32>, vector<256x8xf32> -> vector<256x8xf32>
    %c0_107 = arith.constant 0 : index
    %c0_108 = arith.constant 0 : index
    %77 = vector.load %arg6[%c0_107, %c0_108] : memref<1x8xf32, #tpu.memory_space<vmem>>, vector<1x8xf32>
    %78 = vector.broadcast %77 : vector<1x8xf32> to vector<256x8xf32>
    %79 = arith.mulf %76, %78 : vector<256x8xf32>
    %c0_109 = arith.constant 0 : index
    %c0_110 = arith.constant 0 : index
    %80 = vector.load %arg7[%c0_109, %c0_110] : memref<1x8xf32, #tpu.memory_space<vmem>>, vector<1x8xf32>
    %81 = vector.broadcast %80 : vector<1x8xf32> to vector<256x8xf32>
    %82 = arith.addf %79, %81 : vector<256x8xf32>
    %cst_111 = arith.constant 0.000000e+00 : f32
    %83 = vector.broadcast %cst_111 : f32 to vector<256x8xf32>
    %84 = arith.maximumf %82, %83 : vector<256x8xf32>
    %85 = vector.shape_cast %84 : vector<256x8xf32> to vector<16x16x8xf32>
    %c0_112 = arith.constant 0 : index
    %c0_113 = arith.constant 0 : index
    %c0_114 = arith.constant 0 : index
    %c0_115 = arith.constant 0 : index
    %86 = vector.load %arg8[%c0_112, %c0_113, %c0_114, %c0_115] : memref<1x16x16x8xf32, #tpu.memory_space<vmem>>, vector<1x16x16x8xf32>
    %87 = vector.shape_cast %86 : vector<1x16x16x8xf32> to vector<16x16x8xf32>
    %88 = vector.shape_cast %85 : vector<16x16x8xf32> to vector<1x16x16x8xf32>
    tpu.vector_store %arg8[%c0_112, %c0_113, %c0_114, %c0_115], %88 {strides = array<i32>} : memref<1x16x16x8xf32, #tpu.memory_space<vmem>>, vector<1x16x16x8xf32>,
    return
  }
  func.func @transform_0(%arg0: i32) -> (i32, i32, i32, i32) {
    %c0_i32 = arith.constant 0 : i32
    %c0_i32_0 = arith.constant 0 : i32
    %c0_i32_1 = arith.constant 0 : i32
    %c0_i32_2 = arith.constant 0 : i32
    return %arg0, %c0_i32, %c0_i32_0, %c0_i32_1 : i32, i32, i32, i32
  }
  func.func @transform_1(%arg0: i32) -> (i32, i32) {
    %c0_i32 = arith.constant 0 : i32
    %c0_i32_0 = arith.constant 0 : i32
    %c0_i32_1 = arith.constant 0 : i32
    return %c0_i32, %c0_i32_0 : i32, i32
  }
  func.func @transform_2(%arg0: i32) -> (i32, i32) {
    %c0_i32 = arith.constant 0 : i32
    %c0_i32_0 = arith.constant 0 : i32
    %c0_i32_1 = arith.constant 0 : i32
    return %c0_i32, %c0_i32_0 : i32, i32
  }
  func.func @transform_3(%arg0: i32) -> (i32, i32) {
    %c0_i32 = arith.constant 0 : i32
    %c0_i32_0 = arith.constant 0 : i32
    %c0_i32_1 = arith.constant 0 : i32
    return %c0_i32, %c0_i32_0 : i32, i32
  }
  func.func @transform_4(%arg0: i32) -> (i32, i32) {
    %c0_i32 = arith.constant 0 : i32
    %c0_i32_0 = arith.constant 0 : i32
    %c0_i32_1 = arith.constant 0 : i32
    return %c0_i32, %c0_i32_0 : i32, i32
  }
  func.func @transform_5(%arg0: i32) -> (i32, i32) {
    %c0_i32 = arith.constant 0 : i32
    %c0_i32_0 = arith.constant 0 : i32
    %c0_i32_1 = arith.constant 0 : i32
    return %c0_i32, %c0_i32_0 : i32, i32
  }
  func.func @transform_6(%arg0: i32) -> (i32, i32) {
    %c0_i32 = arith.constant 0 : i32
    %c0_i32_0 = arith.constant 0 : i32
    %c0_i32_1 = arith.constant 0 : i32
    return %c0_i32, %c0_i32_0 : i32, i32
  }
  func.func @transform_7(%arg0: i32) -> (i32, i32, i32, i32) {
    %c0_i32 = arith.constant 0 : i32
    %c0_i32_0 = arith.constant 0 : i32
    %c0_i32_1 = arith.constant 0 : i32
    %c0_i32_2 = arith.constant 0 : i32
    return %arg0, %c0_i32, %c0_i32_0, %c0_i32_1 : i32, i32, i32, i32
  }
}

</mosaic_0001>

<llo_original>
// kernel: double_conv_forward.1
$region0: #{double_conv_forward.1}
  #allocation0 [shape = 'u32[]', space=smem, size = 0x4, offset = 0x4, fixed_abs, tag = 'smem constant byte address 0x4 - core index']
  #allocation1 [shape = 'u32[144,128]{1,0:T(1,128)}', space=vmem, size = 0x12000, scoped, tag = 'internal scratch']
  #allocation2 [shape = 'f32[18,18,4]{2,1,0:T(8,128)}', space=vmem, size = 0x36000, scoped, tag = 'scratch operand']
  #allocation3 [shape = 'f32[18,18,8]{2,1,0:T(8,128)}', space=vmem, size = 0x36000, scoped, tag = 'scratch operand']
  #allocation4 [shape = 'f32[256,36]{1,0:T(8,128)}', space=vmem, size = 0x20000, scoped, tag = 'scratch operand']
  #allocation5 [shape = 'f32[256,72]{1,0:T(8,128)}', space=vmem, size = 0x20000, scoped, tag = 'scratch operand']
  %s0 = inlined_call_operand.vmem [shape: f32[2,16,16,4], index: 0, kind: input, shape index: {}]
  %s1 = inlined_call_operand.vmem [shape: f32[36,8], index: 1, kind: input, shape index: {}]
  %s2 = inlined_call_operand.vmem [shape: f32[1,8], index: 2, kind: input, shape index: {}]
  %s3 = inlined_call_operand.vmem [shape: f32[1,8], index: 3, kind: input, shape index: {}]
  %s4 = inlined_call_operand.vmem [shape: f32[72,8], index: 4, kind: input, shape index: {}]
  %s5 = inlined_call_operand.vmem [shape: f32[1,8], index: 5, kind: input, shape index: {}]
  %s6 = inlined_call_operand.vmem [shape: f32[1,8], index: 6, kind: input, shape index: {}]
  %s7 = inlined_call_operand.vmem [shape: f32[2,16,16,8], index: 7, kind: output, shape index: {}]
  %s8 = sld [smem:[#allocation0]]
  $region61: #{double_conv_forward.1} parent=0
    _
  %s10 = ssub.s32 1, %s8
  %s11 = scalar_select 0, %s10, %s8
  loop: start=0, step=1, limit=4
  $region2: #{double_conv_forward.1} parent=0 // loop_pre_header
    _
  $region3: #{double_conv_forward.1} parent=0 // loop_header
    %s13 = sphi 0, %s17
    %p14 = scmp.ge.s32.totalorder %s13, 4
    %s23 = sphi 0, %s25
    %s26 = sphi 0, %s23
    %s27 = sphi 0, %s26
    %s43 = sphi 0, %s27
    %s47 = sphi 0, %s47
    %s49 = sphi 0, %s47
    %s50 = sphi 0, %s49
    %s64 = sphi 0, %s50
    %s68 = sphi 0, %s68
    %s70 = sphi 0, %s68
    %s71 = sphi 0, %s70
    %s85 = sphi 0, %s71
    %s89 = sphi 0, %s89
    %s91 = sphi 0, %s89
    %s92 = sphi 0, %s91
    %s106 = sphi 0, %s92
    %s110 = sphi 0, %s110
    %s112 = sphi 0, %s110
    %s113 = sphi 0, %s112
    %s127 = sphi 0, %s113
    %s131 = sphi 0, %s131
    %s133 = sphi 0, %s131
    %s134 = sphi 0, %s133
    %s148 = sphi 0, %s134
    %s152 = sphi 0, %s152
    %s154 = sphi 0, %s152
    %s155 = sphi 0, %s154
    %s169 = sphi 0, %s155
    %s175 = sphi 0, %s177
    %s178 = sphi 0, %s175
    %s179 = sphi 0, %s178
    %s195 = sphi 0, %s179
  $region4: #{double_conv_forward.1} parent=0 // loop_header_branch
    %16 = sbr.rel (%p14) target = $region8
  $region5: #{double_conv_forward.1} parent=0 // loop_body
    %s18 = ssub.s32 %s13, 1
    %s19 = ssub.s32 %s13, 2
    %s20 = sadd.s32 %s13, 1
    %s21 = ssub.s32 %s13, %s20
    %p22 = scmp.eq.s32.totalorder %s21, 0
    %s24 = sadd.s32 %s23, 1
    %s25 = scalar_select %p22, %s23, %s24
    %p28 = pneg %p22
    %p29 = scmp.eq.s32.totalorder %s13, 1
    %p30 = por %p28, %p29
    %p31 = scmp.ne.s32.totalorder %s23, %s26
    %p32 = scmp.eq.s32.totalorder %s13, 0
    %p33 = por %p31, %p32
    %p34 = scmp.ne.s32.totalorder %s23, %s26
    %p35 = scmp.eq.s32.totalorder %s18, 1
    %p36 = por %p34, %p35
    %p37 = scmp.ne.s32.totalorder %s26, %s27
    %p38 = scmp.eq.s32.totalorder %s18, 0
    %p39 = por %p37, %p38
    %p40 = scmp.ne.s32.totalorder %s26, %s27
    %p41 = scmp.eq.s32.totalorder %s19, 1
    %p42 = por %p40, %p41
    %p44 = scmp.ne.s32.totalorder %s27, %s43
    %p45 = scmp.eq.s32.totalorder %s19, 0
    %p46 = por %p44, %p45
    %s48 = sadd.s32 %s47, 1
    %p51 = scmp.eq.s32.totalorder %s13, 1
    %p52 = scmp.ne.s32.totalorder %s47, %s49
    %p53 = scmp.eq.s32.totalorder %s13, 0
    %p54 = por %p52, %p53
    %p55 = scmp.ne.s32.totalorder %s47, %s49
    %p56 = scmp.eq.s32.totalorder %s18, 1
    %p57 = por %p55, %p56
    %p58 = scmp.ne.s32.totalorder %s49, %s50
    %p59 = scmp.eq.s32.totalorder %s18, 0
    %p60 = por %p58, %p59
    %p61 = scmp.ne.s32.totalorder %s49, %s50
    %p62 = scmp.eq.s32.totalorder %s19, 1
    %p63 = por %p61, %p62
    %p65 = scmp.ne.s32.totalorder %s50, %s64
    %p66 = scmp.eq.s32.totalorder %s19, 0
    %p67 = por %p65, %p66
    %s69 = sadd.s32 %s68, 1
    %p72 = scmp.eq.s32.totalorder %s13, 1
    %p73 = scmp.ne.s32.totalorder %s68, %s70
    %p74 = scmp.eq.s32.totalorder %s13, 0
    %p75 = por %p73, %p74
    %p76 = scmp.ne.s32.totalorder %s68, %s70
    %p77 = scmp.eq.s32.totalorder %s18, 1
    %p78 = por %p76, %p77
    %p79 = scmp.ne.s32.totalorder %s70, %s71
    %p80 = scmp.eq.s32.totalorder %s18, 0
    %p81 = por %p79, %p80
    %p82 = scmp.ne.s32.totalorder %s70, %s71
    %p83 = scmp.eq.s32.totalorder %s19, 1
    %p84 = por %p82, %p83
    %p86 = scmp.ne.s32.totalorder %s71, %s85
    %p87 = scmp.eq.s32.totalorder %s19, 0
    %p88 = por %p86, %p87
    %s90 = sadd.s32 %s89, 1
    %p93 = scmp.eq.s32.totalorder %s13, 1
    %p94 = scmp.ne.s32.totalorder %s89, %s91
    %p95 = scmp.eq.s32.totalorder %s13, 0
    %p96 = por %p94, %p95
    %p97 = scmp.ne.s32.totalorder %s89, %s91
    %p98 = scmp.eq.s32.totalorder %s18, 1
    %p99 = por %p97, %p98
    %p100 = scmp.ne.s32.totalorder %s91, %s92
    %p101 = scmp.eq.s32.totalorder %s18, 0
    %p102 = por %p100, %p101
    %p103 = scmp.ne.s32.totalorder %s91, %s92
    %p104 = scmp.eq.s32.totalorder %s19, 1
    %p105 = por %p103, %p104
    %p107 = scmp.ne.s32.totalorder %s92, %s106
    %p108 = scmp.eq.s32.totalorder %s19, 0
    %p109 = por %p107, %p108
    %s111 = sadd.s32 %s110, 1
    %p114 = scmp.eq.s32.totalorder %s13, 1
    %p115 = scmp.ne.s32.totalorder %s110, %s112
    %p116 = scmp.eq.s32.totalorder %s13, 0
    %p117 = por %p115, %p116
    %p118 = scmp.ne.s32.totalorder %s110, %s112
    %p119 = scmp.eq.s32.totalorder %s18, 1
    %p120 = por %p118, %p119
    %p121 = scmp.ne.s32.totalorder %s112, %s113
    %p122 = scmp.eq.s32.totalorder %s18, 0
    %p123 = por %p121, %p122
    %p124 = scmp.ne.s32.totalorder %s112, %s113
    %p125 = scmp.eq.s32.totalorder %s19, 1
    %p126 = por %p124, %p125
    %p128 = scmp.ne.s32.totalorder %s113, %s127
    %p129 = scmp.eq.s32.totalorder %s19, 0
    %p130 = por %p128, %p129
    %s132 = sadd.s32 %s131, 1
    %p135 = scmp.eq.s32.totalorder %s13, 1
    %p136 = scmp.ne.s32.totalorder %s131, %s133
    %p137 = scmp.eq.s32.totalorder %s13, 0
    %p138 = por %p136, %p137
    %p139 = scmp.ne.s32.totalorder %s131, %s133
    %p140 = scmp.eq.s32.totalorder %s18, 1
    %p141 = por %p139, %p140
    %p142 = scmp.ne.s32.totalorder %s133, %s134
    %p143 = scmp.eq.s32.totalorder %s18, 0
    %p144 = por %p142, %p143
    %p145 = scmp.ne.s32.totalorder %s133, %s134
    %p146 = scmp.eq.s32.totalorder %s19, 1
    %p147 = por %p145, %p146
    %p149 = scmp.ne.s32.totalorder %s134, %s148
    %p150 = scmp.eq.s32.totalorder %s19, 0
    %p151 = por %p149, %p150
    %s153 = sadd.s32 %s152, 1
    %p156 = scmp.eq.s32.totalorder %s13, 1
    %p157 = scmp.ne.s32.totalorder %s152, %s154
    %p158 = scmp.eq.s32.totalorder %s13, 0
    %p159 = por %p157, %p158
    %p160 = scmp.ne.s32.totalorder %s152, %s154
    %p161 = scmp.eq.s32.totalorder %s18, 1
    %p162 = por %p160, %p161
    %p163 = scmp.ne.s32.totalorder %s154, %s155
    %p164 = scmp.eq.s32.totalorder %s18, 0
    %p165 = por %p163, %p164
    %p166 = scmp.ne.s32.totalorder %s154, %s155
    %p167 = scmp.eq.s32.totalorder %s19, 1
    %p168 = por %p166, %p167
    %p170 = scmp.ne.s32.totalorder %s155, %s169
    %p171 = scmp.eq.s32.totalorder %s19, 0
    %p172 = por %p170, %p171
    %s173 = ssub.s32 %s13, %s20
    %p174 = scmp.eq.s32.totalorder %s173, 0
    %s176 = sadd.s32 %s175, 1
    %s177 = scalar_select %p174, %s175, %s176
    %p180 = pneg %p174
    %p181 = scmp.eq.s32.totalorder %s13, 1
    %p182 = por %p180, %p181
    %p183 = scmp.ne.s32.totalorder %s175, %s178
    %p184 = scmp.eq.s32.totalorder %s13, 0
    %p185 = por %p183, %p184
    %p186 = scmp.ne.s32.totalorder %s175, %s178
    %p187 = scmp.eq.s32.totalorder %s18, 1
    %p188 = por %p186, %p187
    %p189 = scmp.ne.s32.totalorder %s178, %s179
    %p190 = scmp.eq.s32.totalorder %s18, 0
    %p191 = por %p189, %p190
    %p192 = scmp.ne.s32.totalorder %s178, %s179
    %p193 = scmp.eq.s32.totalorder %s19, 1
    %p194 = por %p192, %p193
    %p196 = scmp.ne.s32.totalorder %s179, %s195
    %p197 = scmp.eq.s32.totalorder %s19, 0
    %p198 = por %p196, %p197
    %p199 = scmp.le.s32.totalorder 1, %s13
    %p200 = scmp.lt.s32.totalorder %s13, 3
    %p201 = pnand %p199, %p200
    %p202 = pneg %p201
    // Predicated region
    $region9: #{double_conv_forward.1} parent=5 // pred_check
      _
    $region10: #{double_conv_forward.1} parent=5 // pred_check_branch
      %204 = sbr.rel (%p201) target = $region12
    $region11: #{double_conv_forward.1} parent=5 // pred_region
      %s205 = ssub.s32 %s13, 1
      // Predicated region
      $region13: #{double_conv_forward.1} parent=11 // pred_check
        %p206 = pneg %p60
      $region14: #{double_conv_forward.1} parent=11 // pred_check_branch
        %208 = sbr.rel (%p206) target = $region16
      $region15: #{double_conv_forward.1} parent=11 // pred_region
        _
      $region16: #{double_conv_forward.1} parent=11 // pred_fallthru
        _
      // Predicated region
      $region17: #{double_conv_forward.1} parent=11 // pred_check
        %p209 = pneg %p81
      $region18: #{double_conv_forward.1} parent=11 // pred_check_branch
        %211 = sbr.rel (%p209) target = $region20
      $region19: #{double_conv_forward.1} parent=11 // pred_region
        _
      $region20: #{double_conv_forward.1} parent=11 // pred_fallthru
        _
      // Predicated region
      $region21: #{double_conv_forward.1} parent=11 // pred_check
        %p212 = pneg %p102
      $region22: #{double_conv_forward.1} parent=11 // pred_check_branch
        %214 = sbr.rel (%p212) target = $region24
      $region23: #{double_conv_forward.1} parent=11 // pred_region
        _
      $region24: #{double_conv_forward.1} parent=11 // pred_fallthru
        _
      // Predicated region
      $region25: #{double_conv_forward.1} parent=11 // pred_check
        %p215 = pneg %p123
      $region26: #{double_conv_forward.1} parent=11 // pred_check_branch
        %217 = sbr.rel (%p215) target = $region28
      $region27: #{double_conv_forward.1} parent=11 // pred_region
        _
      $region28: #{double_conv_forward.1} parent=11 // pred_fallthru
        _
      // Predicated region
      $region29: #{double_conv_forward.1} parent=11 // pred_check
        %p218 = pneg %p144
      $region30: #{double_conv_forward.1} parent=11 // pred_check_branch
        %220 = sbr.rel (%p218) target = $region32
      $region31: #{double_conv_forward.1} parent=11 // pred_region
        _
      $region32: #{double_conv_forward.1} parent=11 // pred_fallthru
        _
      // Predicated region
      $region33: #{double_conv_forward.1} parent=11 // pred_check
        %p221 = pneg %p165
      $region34: #{double_conv_forward.1} parent=11 // pred_check_branch
        %223 = sbr.rel (%p221) target = $region36
      $region35: #{double_conv_forward.1} parent=11 // pred_region
        _
      $region36: #{double_conv_forward.1} parent=11 // pred_fallthru
        _
    $region12: #{double_conv_forward.1} parent=5 // pred_fallthru
      _
    %p224 = scmp.lt.s32.totalorder %s13, 2
    // Predicated region
    $region37: #{double_conv_forward.1} parent=5 // pred_check
      %p225 = pneg %p224
    $region38: #{double_conv_forward.1} parent=5 // pred_check_branch
      %227 = sbr.rel (%p225) target = $region40
    $region39: #{double_conv_forward.1} parent=5 // pred_region
      // Predicated region
      $region41: #{double_conv_forward.1} parent=39 // pred_check
        %p228 = pneg %p33
      $region42: #{double_conv_forward.1} parent=39 // pred_check_branch
        %230 = sbr.rel (%p228) target = $region44
      $region43: #{double_conv_forward.1} parent=39 // pred_region
        %p231 = scmp.lt.s32.totalorder %s13, 1
        %s232 = scalar_select %p231, %s13, 1
        %s233 = smul.addr %s232, 32
        %s234 = smul.addr %s233, 8
        %s235 = scalar_lea.vmem %s0, %s234
      $region44: #{double_conv_forward.1} parent=39 // pred_fallthru
        _
    $region40: #{double_conv_forward.1} parent=5 // pred_fallthru
      _
    %p236 = scmp.le.s32.totalorder 1, %s13
    %p237 = scmp.lt.s32.totalorder %s13, 3
    %p238 = pnand %p236, %p237
    %p239 = pneg %p238
    // Predicated region
    $region45: #{double_conv_forward.1} parent=5 // pred_check
      _
    $region46: #{double_conv_forward.1} parent=5 // pred_check_branch
      %241 = sbr.rel (%p238) target = $region48
    $region47: #{double_conv_forward.1} parent=5 // pred_region
      %s242 = ssub.s32 %s13, 1
      %p243 = scmp.lt.s32.totalorder %s18, 1
      %s244 = scalar_select %p243, %s18, 1
      %s245 = smul.addr %s244, 32
      %s246 = smul.addr %s245, 8
      %s247 = scalar_lea.vmem %s0, %s246
      %p248 = pneg %p39
      %p249 = pneg %p36
      %p250 = pneg %p60
      %p251 = pneg %p57
      %p252 = pneg %p81
      %p253 = pneg %p78
      %p254 = pneg %p102
      %p255 = pneg %p99
      %p256 = pneg %p123
      %p257 = pneg %p120
      %p258 = pneg %p144
      %p259 = pneg %p141
      %p260 = pneg %p165
      %p261 = pneg %p162
      %p262 = pneg %p191
      %p263 = pneg %p188
      %p264 = scmp.lt.s32.totalorder %s18, 1
      %s265 = scalar_select %p264, %s18, 1
      %s266 = smul.addr %s265, 32
      %s267 = smul.addr %s266, 8
      %s268 = scalar_lea.vmem %s7, %s267
      %p269 = scmp.lt.s32.totalorder %s18, 1
      %s270 = scalar_select %p269, %s18, 1
      %s271 = smul.addr %s270, 32
      %s272 = smul.addr %s271, 8
      %s273 = scalar_lea.vmem %s0, %s272
      %p274 = scmp.lt.s32.totalorder %s18, 1
      %s275 = scalar_select %p274, %s18, 1
      %s276 = smul.addr %s275, 32
      %s277 = smul.addr %s276, 8
      %s278 = scalar_lea.vmem %s7, %s277
      %vm279 = vcmask 31744
      %280 = vst.msk [vmem:[#allocation2] sm:$0xff] %vm279, 0.0
      %281 = vst.msk [vmem:[#allocation2 + $0x8] sm:$0xff] %vm279, 0.0
      %vm282 = vcmask 25600
      %283 = vst.msk [vmem:[#allocation2 + $0x10] sm:$0x3] %vm282, 0.0
      %284 = vst.msk [vmem:[#allocation2 + $0x18] sm:$0xff] %vm279, 0.0
      %285 = vst.msk [vmem:[#allocation2 + $0x20] sm:$0xff] %vm279, 0.0
      %286 = vst.msk [vmem:[#allocation2 + $0x28] sm:$0x3] %vm282, 0.0
      %287 = vst.msk [vmem:[#allocation2 + $0x30] sm:$0xff] %vm279, 0.0
      %288 = vst.msk [vmem:[#allocation2 + $0x38] sm:$0xff] %vm279, 0.0
      %289 = vst.msk [vmem:[#allocation2 + $0x40] sm:$0x3] %vm282, 0.0
      %290 = vst.msk [vmem:[#allocation2 + $0x48] sm:$0xff] %vm279, 0.0
      %291 = vst.msk [vmem:[#allocation2 + $0x50] sm:$0xff] %vm279, 0.0
      %292 = vst.msk [vmem:[#allocation2 + $0x58] sm:$0x3] %vm282, 0.0
      %293 = vst.msk [vmem:[#allocation2 + $0x60] sm:$0xff] %vm279, 0.0
      %294 = vst.msk [vmem:[#allocation2 + $0x68] sm:$0xff] %vm279, 0.0
      %295 = vst.msk [vmem:[#allocation2 + $0x70] sm:$0x3] %vm282, 0.0
      %296 = vst.msk [vmem:[#allocation2 + $0x78] sm:$0xff] %vm279, 0.0
      %297 = vst.msk [vmem:[#allocation2 + $0x80] sm:$0xff] %vm279, 0.0
      %298 = vst.msk [vmem:[#allocation2 + $0x88] sm:$0x3] %vm282, 0.0
      %299 = vst.msk [vmem:[#allocation2 + $0x90] sm:$0xff] %vm279, 0.0
      %300 = vst.msk [vmem:[#allocation2 + $0x98] sm:$0xff] %vm279, 0.0
      %301 = vst.msk [vmem:[#allocation2 + $0xa0] sm:$0x3] %vm282, 0.0
      %302 = vst.msk [vmem:[#allocation2 + $0xa8] sm:$0xff] %vm279, 0.0
      %303 = vst.msk [vmem:[#allocation2 + $0xb0] sm:$0xff] %vm279, 0.0
      %304 = vst.msk [vmem:[#allocation2 + $0xb8] sm:$0x3] %vm282, 0.0
      %305 = vst.msk [vmem:[#allocation2 + $0xc0] sm:$0xff] %vm279, 0.0
      %306 = vst.msk [vmem:[#allocation2 + $0xc8] sm:$0xff] %vm279, 0.0
      %307 = vst.msk [vmem:[#allocation2 + $0xd0] sm:$0x3] %vm282, 0.0
      %308 = vst.msk [vmem:[#allocation2 + $0xd8] sm:$0xff] %vm279, 0.0
      %309 = vst.msk [vmem:[#allocation2 + $0xe0] sm:$0xff] %vm279, 0.0
      %310 = vst.msk [vmem:[#allocation2 + $0xe8] sm:$0x3] %vm282, 0.0
      %311 = vst.msk [vmem:[#allocation2 + $0xf0] sm:$0xff] %vm279, 0.0
      %312 = vst.msk [vmem:[#allocation2 + $0xf8] sm:$0xff] %vm279, 0.0
      %313 = vst.msk [vmem:[#allocation2 + $0x100] sm:$0x3] %vm282, 0.0
      %314 = vst.msk [vmem:[#allocation2 + $0x108] sm:$0xff] %vm279, 0.0
      %315 = vst.msk [vmem:[#allocation2 + $0x110] sm:$0xff] %vm279, 0.0
      %316 = vst.msk [vmem:[#allocation2 + $0x118] sm:$0x3] %vm282, 0.0
      %317 = vst.msk [vmem:[#allocation2 + $0x120] sm:$0xff] %vm279, 0.0
      %318 = vst.msk [vmem:[#allocation2 + $0x128] sm:$0xff] %vm279, 0.0
      %319 = vst.msk [vmem:[#allocation2 + $0x130] sm:$0x3] %vm282, 0.0
      %320 = vst.msk [vmem:[#allocation2 + $0x138] sm:$0xff] %vm279, 0.0
      %321 = vst.msk [vmem:[#allocation2 + $0x140] sm:$0xff] %vm279, 0.0
      %322 = vst.msk [vmem:[#allocation2 + $0x148] sm:$0x3] %vm282, 0.0
      %323 = vst.msk [vmem:[#allocation2 + $0x150] sm:$0xff] %vm279, 0.0
      %324 = vst.msk [vmem:[#allocation2 + $0x158] sm:$0xff] %vm279, 0.0
      %325 = vst.msk [vmem:[#allocation2 + $0x160] sm:$0x3] %vm282, 0.0
      %326 = vst.msk [vmem:[#allocation2 + $0x168] sm:$0xff] %vm279, 0.0
      %327 = vst.msk [vmem:[#allocation2 + $0x170] sm:$0xff] %vm279, 0.0
      %328 = vst.msk [vmem:[#allocation2 + $0x178] sm:$0x3] %vm282, 0.0
      %329 = vst.msk [vmem:[#allocation2 + $0x180] sm:$0xff] %vm279, 0.0
      %330 = vst.msk [vmem:[#allocation2 + $0x188] sm:$0xff] %vm279, 0.0
      %331 = vst.msk [vmem:[#allocation2 + $0x190] sm:$0x3] %vm282, 0.0
      %332 = vst.msk [vmem:[#allocation2 + $0x198] sm:$0xff] %vm279, 0.0
      %333 = vst.msk [vmem:[#allocation2 + $0x1a0] sm:$0xff] %vm279, 0.0
      %334 = vst.msk [vmem:[#allocation2 + $0x1a8] sm:$0x3] %vm282, 0.0
      %v335 = vld [vmem:[%s273] sm:$0xff]
      %v336 = vld [vmem:[%s273 + $0x8] sm:$0xff]
      %v337 = vld [vmem:[%s273 + $0x10] sm:$0xff]
      %v338 = vld [vmem:[%s273 + $0x18] sm:$0xff]
      %v339 = vld [vmem:[%s273 + $0x20] sm:$0xff]
      %v340 = vld [vmem:[%s273 + $0x28] sm:$0xff]
      %v341 = vld [vmem:[%s273 + $0x30] sm:$0xff]
      %v342 = vld [vmem:[%s273 + $0x38] sm:$0xff]
      %v343 = vld [vmem:[%s273 + $0x40] sm:$0xff]
      %v344 = vld [vmem:[%s273 + $0x48] sm:$0xff]
      %v345 = vld [vmem:[%s273 + $0x50] sm:$0xff]
      %v346 = vld [vmem:[%s273 + $0x58] sm:$0xff]
      %v347 = vld [vmem:[%s273 + $0x60] sm:$0xff]
      %v348 = vld [vmem:[%s273 + $0x68] sm:$0xff]
      %v349 = vld [vmem:[%s273 + $0x70] sm:$0xff]
      %v350 = vld [vmem:[%s273 + $0x78] sm:$0xff]
      %v351 = vld [vmem:[%s273 + $0x80] sm:$0xff]
      %v352 = vld [vmem:[%s273 + $0x88] sm:$0xff]
      %v353 = vld [vmem:[%s273 + $0x90] sm:$0xff]
      %v354 = vld [vmem:[%s273 + $0x98] sm:$0xff]
      %v355 = vld [vmem:[%s273 + $0xa0] sm:$0xff]
      %v356 = vld [vmem:[%s273 + $0xa8] sm:$0xff]
      %v357 = vld [vmem:[%s273 + $0xb0] sm:$0xff]
      %v358 = vld [vmem:[%s273 + $0xb8] sm:$0xff]
      %v359 = vld [vmem:[%s273 + $0xc0] sm:$0xff]
      %v360 = vld [vmem:[%s273 + $0xc8] sm:$0xff]
      %v361 = vld [vmem:[%s273 + $0xd0] sm:$0xff]
      %v362 = vld [vmem:[%s273 + $0xd8] sm:$0xff]
      %v363 = vld [vmem:[%s273 + $0xe0] sm:$0xff]
      %v364 = vld [vmem:[%s273 + $0xe8] sm:$0xff]
      %v365 = vld [vmem:[%s273 + $0xf0] sm:$0xff]
      %v366 = vld [vmem:[%s273 + $0xf8] sm:$0xff]
      %s367 = scalar_lea.vmem [#allocation2], 24
      %368 = vst.msk [vmem:[%s367 + $0x1] sm:$0xff] %vm279, %v335
      %369 = vst.msk [vmem:[%s367 + $0x9] sm:$0xff] %vm279, %v336
      %370 = vst.msk [vmem:[%s367 + $0x19] sm:$0xff] %vm279, %v337
      %371 = vst.msk [vmem:[%s367 + $0x21] sm:$0xff] %vm279, %v338
      %372 = vst.msk [vmem:[%s367 + $0x31] sm:$0xff] %vm279, %v339
      %373 = vst.msk [vmem:[%s367 + $0x39] sm:$0xff] %vm279, %v340
      %374 = vst.msk [vmem:[%s367 + $0x49] sm:$0xff] %vm279, %v341
      %375 = vst.msk [vmem:[%s367 + $0x51] sm:$0xff] %vm279, %v342
      %376 = vst.msk [vmem:[%s367 + $0x61] sm:$0xff] %vm279, %v343
      %377 = vst.msk [vmem:[%s367 + $0x69] sm:$0xff] %vm279, %v344
      %378 = vst.msk [vmem:[%s367 + $0x79] sm:$0xff] %vm279, %v345
      %379 = vst.msk [vmem:[%s367 + $0x81] sm:$0xff] %vm279, %v346
      %380 = vst.msk [vmem:[%s367 + $0x91] sm:$0xff] %vm279, %v347
      %381 = vst.msk [vmem:[%s367 + $0x99] sm:$0xff] %vm279, %v348
      %382 = vst.msk [vmem:[%s367 + $0xa9] sm:$0xff] %vm279, %v349
      %383 = vst.msk [vmem:[%s367 + $0xb1] sm:$0xff] %vm279, %v350
      %384 = vst.msk [vmem:[%s367 + $0xc1] sm:$0xff] %vm279, %v351
      %385 = vst.msk [vmem:[%s367 + $0xc9] sm:$0xff] %vm279, %v352
      %386 = vst.msk [vmem:[%s367 + $0xd9] sm:$0xff] %vm279, %v353
      %387 = vst.msk [vmem:[%s367 + $0xe1] sm:$0xff] %vm279, %v354
      %388 = vst.msk [vmem:[%s367 + $0xf1] sm:$0xff] %vm279, %v355
      %389 = vst.msk [vmem:[%s367 + $0xf9] sm:$0xff] %vm279, %v356
      %390 = vst.msk [vmem:[%s367 + $0x109] sm:$0xff] %vm279, %v357
      %391 = vst.msk [vmem:[%s367 + $0x111] sm:$0xff] %vm279, %v358
      %392 = vst.msk [vmem:[%s367 + $0x121] sm:$0xff] %vm279, %v359
      %393 = vst.msk [vmem:[%s367 + $0x129] sm:$0xff] %vm279, %v360
      %394 = vst.msk [vmem:[%s367 + $0x139] sm:$0xff] %vm279, %v361
      %395 = vst.msk [vmem:[%s367 + $0x141] sm:$0xff] %vm279, %v362
      %396 = vst.msk [vmem:[%s367 + $0x151] sm:$0xff] %vm279, %v363
      %397 = vst.msk [vmem:[%s367 + $0x159] sm:$0xff] %vm279, %v364
      %398 = vst.msk [vmem:[%s367 + $0x169] sm:$0xff] %vm279, %v365
      %399 = vst.msk [vmem:[%s367 + $0x171] sm:$0xff] %vm279, %v366
      %v400 = vld [vmem:[#allocation2] sm:$0xff]
      %v401 = vld [vmem:[#allocation2 + $0x8] sm:$0xff]
      %v402 = vld [vmem:[#allocation2 + $0x18] sm:$0xff]
      %v403 = vld [vmem:[#allocation2 + $0x20] sm:$0xff]
      %v404 = vld [vmem:[#allocation2 + $0x30] sm:$0xff]
      %v405 = vld [vmem:[#allocation2 + $0x38] sm:$0xff]
      %v406 = vld [vmem:[#allocation2 + $0x48] sm:$0xff]
      %v407 = vld [vmem:[#allocation2 + $0x50] sm:$0xff]
      %v408 = vld [vmem:[#allocation2 + $0x60] sm:$0xff]
      %v409 = vld [vmem:[#allocation2 + $0x68] sm:$0xff]
      %v410 = vld [vmem:[#allocation2 + $0x78] sm:$0xff]
      %v411 = vld [vmem:[#allocation2 + $0x80] sm:$0xff]
      %v412 = vld [vmem:[#allocation2 + $0x90] sm:$0xff]
      %v413 = vld [vmem:[#allocation2 + $0x98] sm:$0xff]
      %v414 = vld [vmem:[#allocation2 + $0xa8] sm:$0xff]
      %v415 = vld [vmem:[#allocation2 + $0xb0] sm:$0xff]
      %v416 = vld [vmem:[#allocation2 + $0xc0] sm:$0xff]
      %v417 = vld [vmem:[#allocation2 + $0xc8] sm:$0xff]
      %v418 = vld [vmem:[#allocation2 + $0xd8] sm:$0xff]
      %v419 = vld [vmem:[#allocation2 + $0xe0] sm:$0xff]
      %v420 = vld [vmem:[#allocation2 + $0xf0] sm:$0xff]
      %v421 = vld [vmem:[#allocation2 + $0xf8] sm:$0xff]
      %v422 = vld [vmem:[#allocation2 + $0x108] sm:$0xff]
      %v423 = vld [vmem:[#allocation2 + $0x110] sm:$0xff]
      %v424 = vld [vmem:[#allocation2 + $0x120] sm:$0xff]
      %v425 = vld [vmem:[#allocation2 + $0x128] sm:$0xff]
      %v426 = vld [vmem:[#allocation2 + $0x138] sm:$0xff]
      %v427 = vld [vmem:[#allocation2 + $0x140] sm:$0xff]
      %v428 = vld [vmem:[#allocation2 + $0x150] sm:$0xff]
      %v429 = vld [vmem:[#allocation2 + $0x158] sm:$0xff]
      %v430 = vld [vmem:[#allocation2 + $0x168] sm:$0xff]
      %v431 = vld [vmem:[#allocation2 + $0x170] sm:$0xff]
      %432 = vst.msk [vmem:[#allocation4] sm:$0xff] %vm279, %v400
      %433 = vst.msk [vmem:[#allocation4 + $0x8] sm:$0xff] %vm279, %v401
      %434 = vst.msk [vmem:[#allocation4 + $0x10] sm:$0xff] %vm279, %v402
      %435 = vst.msk [vmem:[#allocation4 + $0x18] sm:$0xff] %vm279, %v403
      %436 = vst.msk [vmem:[#allocation4 + $0x20] sm:$0xff] %vm279, %v404
      %437 = vst.msk [vmem:[#allocation4 + $0x28] sm:$0xff] %vm279, %v405
      %438 = vst.msk [vmem:[#allocation4 + $0x30] sm:$0xff] %vm279, %v406
      %439 = vst.msk [vmem:[#allocation4 + $0x38] sm:$0xff] %vm279, %v407
      %440 = vst.msk [vmem:[#allocation4 + $0x40] sm:$0xff] %vm279, %v408
      %441 = vst.msk [vmem:[#allocation4 + $0x48] sm:$0xff] %vm279, %v409
      %442 = vst.msk [vmem:[#allocation4 + $0x50] sm:$0xff] %vm279, %v410
      %443 = vst.msk [vmem:[#allocation4 + $0x58] sm:$0xff] %vm279, %v411
      %444 = vst.msk [vmem:[#allocation4 + $0x60] sm:$0xff] %vm279, %v412
      %445 = vst.msk [vmem:[#allocation4 + $0x68] sm:$0xff] %vm279, %v413
      %446 = vst.msk [vmem:[#allocation4 + $0x70] sm:$0xff] %vm279, %v414
      %447 = vst.msk [vmem:[#allocation4 + $0x78] sm:$0xff] %vm279, %v415
      %448 = vst.msk [vmem:[#allocation4 + $0x80] sm:$0xff] %vm279, %v416
      %449 = vst.msk [vmem:[#allocation4 + $0x88] sm:$0xff] %vm279, %v417
      %450 = vst.msk [vmem:[#allocation4 + $0x90] sm:$0xff] %vm279, %v418
      %451 = vst.msk [vmem:[#allocation4 + $0x98] sm:$0xff] %vm279, %v419
      %452 = vst.msk [vmem:[#allocation4 + $0xa0] sm:$0xff] %vm279, %v420
      %453 = vst.msk [vmem:[#allocation4 + $0xa8] sm:$0xff] %vm279, %v421
      %454 = vst.msk [vmem:[#allocation4 + $0xb0] sm:$0xff] %vm279, %v422
      %455 = vst.msk [vmem:[#allocation4 + $0xb8] sm:$0xff] %vm279, %v423
      %456 = vst.msk [vmem:[#allocation4 + $0xc0] sm:$0xff] %vm279, %v424
      %457 = vst.msk [vmem:[#allocation4 + $0xc8] sm:$0xff] %vm279, %v425
      %458 = vst.msk [vmem:[#allocation4 + $0xd0] sm:$0xff] %vm279, %v426
      %459 = vst.msk [vmem:[#allocation4 + $0xd8] sm:$0xff] %vm279, %v427
      %460 = vst.msk [vmem:[#allocation4 + $0xe0] sm:$0xff] %vm279, %v428
      %461 = vst.msk [vmem:[#allocation4 + $0xe8] sm:$0xff] %vm279, %v429
      %462 = vst.msk [vmem:[#allocation4 + $0xf0] sm:$0xff] %vm279, %v430
      %463 = vst.msk [vmem:[#allocation4 + $0xf8] sm:$0xff] %vm279, %v431
      %v464 = vld [vmem:[#allocation2 + $0x1] sm:$0xff]
      %v465 = vld [vmem:[#allocation2 + $0x9] sm:$0xff]
      %v466 = vld [vmem:[#allocation2 + $0x19] sm:$0xff]
      %v467 = vld [vmem:[#allocation2 + $0x21] sm:$0xff]
      %v468 = vld [vmem:[#allocation2 + $0x31] sm:$0xff]
      %v469 = vld [vmem:[#allocation2 + $0x39] sm:$0xff]
      %v470 = vld [vmem:[#allocation2 + $0x49] sm:$0xff]
      %v471 = vld [vmem:[#allocation2 + $0x51] sm:$0xff]
      %v472 = vld [vmem:[#allocation2 + $0x61] sm:$0xff]
      %v473 = vld [vmem:[#allocation2 + $0x69] sm:$0xff]
      %v474 = vld [vmem:[#allocation2 + $0x79] sm:$0xff]
      %v475 = vld [vmem:[#allocation2 + $0x81] sm:$0xff]
      %v476 = vld [vmem:[#allocation2 + $0x91] sm:$0xff]
      %v477 = vld [vmem:[#allocation2 + $0x99] sm:$0xff]
      %v478 = vld [vmem:[#allocation2 + $0xa9] sm:$0xff]
      %v479 = vld [vmem:[#allocation2 + $0xb1] sm:$0xff]
      %v480 = vld [vmem:[#allocation2 + $0xc1] sm:$0xff]
      %v481 = vld [vmem:[#allocation2 + $0xc9] sm:$0xff]
      %v482 = vld [vmem:[#allocation2 + $0xd9] sm:$0xff]
      %v483 = vld [vmem:[#allocation2 + $0xe1] sm:$0xff]
      %v484 = vld [vmem:[#allocation2 + $0xf1] sm:$0xff]
      %v485 = vld [vmem:[#allocation2 + $0xf9] sm:$0xff]
      %v486 = vld [vmem:[#allocation2 + $0x109] sm:$0xff]
      %v487 = vld [vmem:[#allocation2 + $0x111] sm:$0xff]
      %v488 = vld [vmem:[#allocation2 + $0x121] sm:$0xff]
      %v489 = vld [vmem:[#allocation2 + $0x129] sm:$0xff]
      %v490 = vld [vmem:[#allocation2 + $0x139] sm:$0xff]
      %v491 = vld [vmem:[#allocation2 + $0x141] sm:$0xff]
      %v492 = vld [vmem:[#allocation2 + $0x151] sm:$0xff]
      %v493 = vld [vmem:[#allocation2 + $0x159] sm:$0xff]
      %v494 = vld [vmem:[#allocation2 + $0x169] sm:$0xff]
      %v495 = vld [vmem:[#allocation2 + $0x171] sm:$0xff]
      %528 = vrot.lane.b32.xlu0 %v464, 4
      %v529 = vpop.permute.xlu0 %528
      %530 = vrot.lane.b32.xlu0 %v465, 4
      %v531 = vpop.permute.xlu0 %530
      %532 = vrot.lane.b32.xlu0 %v466, 4
      %v533 = vpop.permute.xlu0 %532
      %534 = vrot.lane.b32.xlu0 %v467, 4
      %v535 = vpop.permute.xlu0 %534
      %536 = vrot.lane.b32.xlu0 %v468, 4
      %v537 = vpop.permute.xlu0 %536
      %538 = vrot.lane.b32.xlu0 %v469, 4
      %v539 = vpop.permute.xlu0 %538
      %540 = vrot.lane.b32.xlu0 %v470, 4
      %v541 = vpop.permute.xlu0 %540
      %542 = vrot.lane.b32.xlu0 %v471, 4
      %v543 = vpop.permute.xlu0 %542
      %544 = vrot.lane.b32.xlu0 %v472, 4
      %v545 = vpop.permute.xlu0 %544
      %546 = vrot.lane.b32.xlu0 %v473, 4
      %v547 = vpop.permute.xlu0 %546
      %548 = vrot.lane.b32.xlu0 %v474, 4
      %v549 = vpop.permute.xlu0 %548
      %550 = vrot.lane.b32.xlu0 %v475, 4
      %v551 = vpop.permute.xlu0 %550
      %552 = vrot.lane.b32.xlu0 %v476, 4
      %v553 = vpop.permute.xlu0 %552
      %554 = vrot.lane.b32.xlu0 %v477, 4
      %v555 = vpop.permute.xlu0 %554
      %556 = vrot.lane.b32.xlu0 %v478, 4
      %v557 = vpop.permute.xlu0 %556
      %558 = vrot.lane.b32.xlu0 %v479, 4
      %v559 = vpop.permute.xlu0 %558
      %560 = vrot.lane.b32.xlu0 %v480, 4
      %v561 = vpop.permute.xlu0 %560
      %562 = vrot.lane.b32.xlu0 %v481, 4
      %v563 = vpop.permute.xlu0 %562
      %564 = vrot.lane.b32.xlu0 %v482, 4
      %v565 = vpop.permute.xlu0 %564
      %566 = vrot.lane.b32.xlu0 %v483, 4
      %v567 = vpop.permute.xlu0 %566
      %568 = vrot.lane.b32.xlu0 %v484, 4
      %v569 = vpop.permute.xlu0 %568
      %570 = vrot.lane.b32.xlu0 %v485, 4
      %v571 = vpop.permute.xlu0 %570
      %572 = vrot.lane.b32.xlu0 %v486, 4
      %v573 = vpop.permute.xlu0 %572
      %574 = vrot.lane.b32.xlu0 %v487, 4
      %v575 = vpop.permute.xlu0 %574
      %576 = vrot.lane.b32.xlu0 %v488, 4
      %v577 = vpop.permute.xlu0 %576
      %578 = vrot.lane.b32.xlu0 %v489, 4
      %v579 = vpop.permute.xlu0 %578
      %580 = vrot.lane.b32.xlu0 %v490, 4
      %v581 = vpop.permute.xlu0 %580
      %582 = vrot.lane.b32.xlu0 %v491, 4
      %v583 = vpop.permute.xlu0 %582
      %584 = vrot.lane.b32.xlu0 %v492, 4
      %v585 = vpop.permute.xlu0 %584
      %586 = vrot.lane.b32.xlu0 %v493, 4
      %v587 = vpop.permute.xlu0 %586
      %588 = vrot.lane.b32.xlu0 %v494, 4
      %v589 = vpop.permute.xlu0 %588
      %590 = vrot.lane.b32.xlu0 %v495, 4
      %v591 = vpop.permute.xlu0 %590
      %vm624 = vcmask 64544
      %625 = vst.msk [vmem:[#allocation4] sm:$0xff] %vm624, %v529
      %626 = vst.msk [vmem:[#allocation4 + $0x8] sm:$0xff] %vm624, %v531
      %627 = vst.msk [vmem:[#allocation4 + $0x10] sm:$0xff] %vm624, %v533
      %628 = vst.msk [vmem:[#allocation4 + $0x18] sm:$0xff] %vm624, %v535
      %629 = vst.msk [vmem:[#allocation4 + $0x20] sm:$0xff] %vm624, %v537
      %630 = vst.msk [vmem:[#allocation4 + $0x28] sm:$0xff] %vm624, %v539
      %631 = vst.msk [vmem:[#allocation4 + $0x30] sm:$0xff] %vm624, %v541
      %632 = vst.msk [vmem:[#allocation4 + $0x38] sm:$0xff] %vm624, %v543
      %633 = vst.msk [vmem:[#allocation4 + $0x40] sm:$0xff] %vm624, %v545
      %634 = vst.msk [vmem:[#allocation4 + $0x48] sm:$0xff] %vm624, %v547
      %635 = vst.msk [vmem:[#allocation4 + $0x50] sm:$0xff] %vm624, %v549
      %636 = vst.msk [vmem:[#allocation4 + $0x58] sm:$0xff] %vm624, %v551
      %637 = vst.msk [vmem:[#allocation4 + $0x60] sm:$0xff] %vm624, %v553
      %638 = vst.msk [vmem:[#allocation4 + $0x68] sm:$0xff] %vm624, %v555
      %639 = vst.msk [vmem:[#allocation4 + $0x70] sm:$0xff] %vm624, %v557
      %640 = vst.msk [vmem:[#allocation4 + $0x78] sm:$0xff] %vm624, %v559
      %641 = vst.msk [vmem:[#allocation4 + $0x80] sm:$0xff] %vm624, %v561
      %642 = vst.msk [vmem:[#allocation4 + $0x88] sm:$0xff] %vm624, %v563
      %643 = vst.msk [vmem:[#allocation4 + $0x90] sm:$0xff] %vm624, %v565
      %644 = vst.msk [vmem:[#allocation4 + $0x98] sm:$0xff] %vm624, %v567
      %645 = vst.msk [vmem:[#allocation4 + $0xa0] sm:$0xff] %vm624, %v569
      %646 = vst.msk [vmem:[#allocation4 + $0xa8] sm:$0xff] %vm624, %v571
      %647 = vst.msk [vmem:[#allocation4 + $0xb0] sm:$0xff] %vm624, %v573
      %648 = vst.msk [vmem:[#allocation4 + $0xb8] sm:$0xff] %vm624, %v575
      %649 = vst.msk [vmem:[#allocation4 + $0xc0] sm:$0xff] %vm624, %v577
      %650 = vst.msk [vmem:[#allocation4 + $0xc8] sm:$0xff] %vm624, %v579
      %651 = vst.msk [vmem:[#allocation4 + $0xd0] sm:$0xff] %vm624, %v581
      %652 = vst.msk [vmem:[#allocation4 + $0xd8] sm:$0xff] %vm624, %v583
      %653 = vst.msk [vmem:[#allocation4 + $0xe0] sm:$0xff] %vm624, %v585
      %654 = vst.msk [vmem:[#allocation4 + $0xe8] sm:$0xff] %vm624, %v587
      %655 = vst.msk [vmem:[#allocation4 + $0xf0] sm:$0xff] %vm624, %v589
      %656 = vst.msk [vmem:[#allocation4 + $0xf8] sm:$0xff] %vm624, %v591
      %v657 = vld [vmem:[#allocation2 + $0x2] sm:$0xff]
      %v658 = vld [vmem:[#allocation2 + $0xa] sm:$0xff]
      %v659 = vld [vmem:[#allocation2 + $0x1a] sm:$0xff]
      %v660 = vld [vmem:[#allocation2 + $0x22] sm:$0xff]
      %v661 = vld [vmem:[#allocation2 + $0x32] sm:$0xff]
      %v662 = vld [vmem:[#allocation2 + $0x3a] sm:$0xff]
      %v663 = vld [vmem:[#allocation2 + $0x4a] sm:$0xff]
      %v664 = vld [vmem:[#allocation2 + $0x52] sm:$0xff]
      %v665 = vld [vmem:[#allocation2 + $0x62] sm:$0xff]
      %v666 = vld [vmem:[#allocation2 + $0x6a] sm:$0xff]
      %v667 = vld [vmem:[#allocation2 + $0x7a] sm:$0xff]
      %v668 = vld [vmem:[#allocation2 + $0x82] sm:$0xff]
      %v669 = vld [vmem:[#allocation2 + $0x92] sm:$0xff]
      %v670 = vld [vmem:[#allocation2 + $0x9a] sm:$0xff]
      %v671 = vld [vmem:[#allocation2 + $0xaa] sm:$0xff]
      %v672 = vld [vmem:[#allocation2 + $0xb2] sm:$0xff]
      %v673 = vld [vmem:[#allocation2 + $0xc2] sm:$0xff]
      %v674 = vld [vmem:[#allocation2 + $0xca] sm:$0xff]
      %v675 = vld [vmem:[#allocation2 + $0xda] sm:$0xff]
      %v676 = vld [vmem:[#allocation2 + $0xe2] sm:$0xff]
      %v677 = vld [vmem:[#allocation2 + $0xf2] sm:$0xff]
      %v678 = vld [vmem:[#allocation2 + $0xfa] sm:$0xff]
      %v679 = vld [vmem:[#allocation2 + $0x10a] sm:$0xff]
      %v680 = vld [vmem:[#allocation2 + $0x112] sm:$0xff]
      %v681 = vld [vmem:[#allocation2 + $0x122] sm:$0xff]
      %v682 = vld [vmem:[#allocation2 + $0x12a] sm:$0xff]
      %v683 = vld [vmem:[#allocation2 + $0x13a] sm:$0xff]
      %v684 = vld [vmem:[#allocation2 + $0x142] sm:$0xff]
      %v685 = vld [vmem:[#allocation2 + $0x152] sm:$0xff]
      %v686 = vld [vmem:[#allocation2 + $0x15a] sm:$0xff]
      %v687 = vld [vmem:[#allocation2 + $0x16a] sm:$0xff]
      %v688 = vld [vmem:[#allocation2 + $0x172] sm:$0xff]
      %721 = vrot.lane.b32.xlu0 %v657, 8
      %v722 = vpop.permute.xlu0 %721
      %723 = vrot.lane.b32.xlu0 %v658, 8
      %v724 = vpop.permute.xlu0 %723
      %725 = vrot.lane.b32.xlu0 %v659, 8
      %v726 = vpop.permute.xlu0 %725
      %727 = vrot.lane.b32.xlu0 %v660, 8
      %v728 = vpop.permute.xlu0 %727
      %729 = vrot.lane.b32.xlu0 %v661, 8
      %v730 = vpop.permute.xlu0 %729
      %731 = vrot.lane.b32.xlu0 %v662, 8
      %v732 = vpop.permute.xlu0 %731
      %733 = vrot.lane.b32.xlu0 %v663, 8
      %v734 = vpop.permute.xlu0 %733
      %735 = vrot.lane.b32.xlu0 %v664, 8
      %v736 = vpop.permute.xlu0 %735
      %737 = vrot.lane.b32.xlu0 %v665, 8
      %v738 = vpop.permute.xlu0 %737
      %739 = vrot.lane.b32.xlu0 %v666, 8
      %v740 = vpop.permute.xlu0 %739
      %741 = vrot.lane.b32.xlu0 %v667, 8
      %v742 = vpop.permute.xlu0 %741
      %743 = vrot.lane.b32.xlu0 %v668, 8
      %v744 = vpop.permute.xlu0 %743
      %745 = vrot.lane.b32.xlu0 %v669, 8
      %v746 = vpop.permute.xlu0 %745
      %747 = vrot.lane.b32.xlu0 %v670, 8
      %v748 = vpop.permute.xlu0 %747
      %749 = vrot.lane.b32.xlu0 %v671, 8
      %v750 = vpop.permute.xlu0 %749
      %751 = vrot.lane.b32.xlu0 %v672, 8
      %v752 = vpop.permute.xlu0 %751
      %753 = vrot.lane.b32.xlu0 %v673, 8
      %v754 = vpop.permute.xlu0 %753
      %755 = vrot.lane.b32.xlu0 %v674, 8
      %v756 = vpop.permute.xlu0 %755
      %757 = vrot.lane.b32.xlu0 %v675, 8
      %v758 = vpop.permute.xlu0 %757
      %759 = vrot.lane.b32.xlu0 %v676, 8
      %v760 = vpop.permute.xlu0 %759
      %761 = vrot.lane.b32.xlu0 %v677, 8
      %v762 = vpop.permute.xlu0 %761
      %763 = vrot.lane.b32.xlu0 %v678, 8
      %v764 = vpop.permute.xlu0 %763
      %765 = vrot.lane.b32.xlu0 %v679, 8
      %v766 = vpop.permute.xlu0 %765
      %767 = vrot.lane.b32.xlu0 %v680, 8
      %v768 = vpop.permute.xlu0 %767
      %769 = vrot.lane.b32.xlu0 %v681, 8
      %v770 = vpop.permute.xlu0 %769
      %771 = vrot.lane.b32.xlu0 %v682, 8
      %v772 = vpop.permute.xlu0 %771
      %773 = vrot.lane.b32.xlu0 %v683, 8
      %v774 = vpop.permute.xlu0 %773
      %775 = vrot.lane.b32.xlu0 %v684, 8
      %v776 = vpop.permute.xlu0 %775
      %777 = vrot.lane.b32.xlu0 %v685, 8
      %v778 = vpop.permute.xlu0 %777
      %779 = vrot.lane.b32.xlu0 %v686, 8
      %v780 = vpop.permute.xlu0 %779
      %781 = vrot.lane.b32.xlu0 %v687, 8
      %v782 = vpop.permute.xlu0 %781
      %783 = vrot.lane.b32.xlu0 %v688, 8
      %v784 = vpop.permute.xlu0 %783
      %vm817 = vcmask 97344
      %818 = vst.msk [vmem:[#allocation4] sm:$0xff] %vm817, %v722
      %819 = vst.msk [vmem:[#allocation4 + $0x8] sm:$0xff] %vm817, %v724
      %820 = vst.msk [vmem:[#allocation4 + $0x10] sm:$0xff] %vm817, %v726
      %821 = vst.msk [vmem:[#allocation4 + $0x18] sm:$0xff] %vm817, %v728
      %822 = vst.msk [vmem:[#allocation4 + $0x20] sm:$0xff] %vm817, %v730
      %823 = vst.msk [vmem:[#allocation4 + $0x28] sm:$0xff] %vm817, %v732
      %824 = vst.msk [vmem:[#allocation4 + $0x30] sm:$0xff] %vm817, %v734
      %825 = vst.msk [vmem:[#allocation4 + $0x38] sm:$0xff] %vm817, %v736
      %826 = vst.msk [vmem:[#allocation4 + $0x40] sm:$0xff] %vm817, %v738
      %827 = vst.msk [vmem:[#allocation4 + $0x48] sm:$0xff] %vm817, %v740
      %828 = vst.msk [vmem:[#allocation4 + $0x50] sm:$0xff] %vm817, %v742
      %829 = vst.msk [vmem:[#allocation4 + $0x58] sm:$0xff] %vm817, %v744
      %830 = vst.msk [vmem:[#allocation4 + $0x60] sm:$0xff] %vm817, %v746
      %831 = vst.msk [vmem:[#allocation4 + $0x68] sm:$0xff] %vm817, %v748
      %832 = vst.msk [vmem:[#allocation4 + $0x70] sm:$0xff] %vm817, %v750
      %833 = vst.msk [vmem:[#allocation4 + $0x78] sm:$0xff] %vm817, %v752
      %834 = vst.msk [vmem:[#allocation4 + $0x80] sm:$0xff] %vm817, %v754
      %835 = vst.msk [vmem:[#allocation4 + $0x88] sm:$0xff] %vm817, %v756
      %836 = vst.msk [vmem:[#allocation4 + $0x90] sm:$0xff] %vm817, %v758
      %837 = vst.msk [vmem:[#allocation4 + $0x98] sm:$0xff] %vm817, %v760
      %838 = vst.msk [vmem:[#allocation4 + $0xa0] sm:$0xff] %vm817, %v762
      %839 = vst.msk [vmem:[#allocation4 + $0xa8] sm:$0xff] %vm817, %v764
      %840 = vst.msk [vmem:[#allocation4 + $0xb0] sm:$0xff] %vm817, %v766
      %841 = vst.msk [vmem:[#allocation4 + $0xb8] sm:$0xff] %vm817, %v768
      %842 = vst.msk [vmem:[#allocation4 + $0xc0] sm:$0xff] %vm817, %v770
      %843 = vst.msk [vmem:[#allocation4 + $0xc8] sm:$0xff] %vm817, %v772
      %844 = vst.msk [vmem:[#allocation4 + $0xd0] sm:$0xff] %vm817, %v774
      %845 = vst.msk [vmem:[#allocation4 + $0xd8] sm:$0xff] %vm817, %v776
      %846 = vst.msk [vmem:[#allocation4 + $0xe0] sm:$0xff] %vm817, %v778
      %847 = vst.msk [vmem:[#allocation4 + $0xe8] sm:$0xff] %vm817, %v780
      %848 = vst.msk [vmem:[#allocation4 + $0xf0] sm:$0xff] %vm817, %v782
      %849 = vst.msk [vmem:[#allocation4 + $0xf8] sm:$0xff] %vm817, %v784
      %v850 = vld [vmem:[%s367] sm:$0xff]
      %v851 = vld [vmem:[%s367 + $0x8] sm:$0xff]
      %v852 = vld [vmem:[%s367 + $0x18] sm:$0xff]
      %v853 = vld [vmem:[%s367 + $0x20] sm:$0xff]
      %v854 = vld [vmem:[%s367 + $0x30] sm:$0xff]
      %v855 = vld [vmem:[%s367 + $0x38] sm:$0xff]
      %v856 = vld [vmem:[%s367 + $0x48] sm:$0xff]
      %v857 = vld [vmem:[%s367 + $0x50] sm:$0xff]
      %v858 = vld [vmem:[%s367 + $0x60] sm:$0xff]
      %v859 = vld [vmem:[%s367 + $0x68] sm:$0xff]
      %v860 = vld [vmem:[%s367 + $0x78] sm:$0xff]
      %v861 = vld [vmem:[%s367 + $0x80] sm:$0xff]
      %v862 = vld [vmem:[%s367 + $0x90] sm:$0xff]
      %v863 = vld [vmem:[%s367 + $0x98] sm:$0xff]
      %v864 = vld [vmem:[%s367 + $0xa8] sm:$0xff]
      %v865 = vld [vmem:[%s367 + $0xb0] sm:$0xff]
      %v866 = vld [vmem:[%s367 + $0xc0] sm:$0xff]
      %v867 = vld [vmem:[%s367 + $0xc8] sm:$0xff]
      %v868 = vld [vmem:[%s367 + $0xd8] sm:$0xff]
      %v869 = vld [vmem:[%s367 + $0xe0] sm:$0xff]
      %v870 = vld [vmem:[%s367 + $0xf0] sm:$0xff]
      %v871 = vld [vmem:[%s367 + $0xf8] sm:$0xff]
      %v872 = vld [vmem:[%s367 + $0x108] sm:$0xff]
      %v873 = vld [vmem:[%s367 + $0x110] sm:$0xff]
      %v874 = vld [vmem:[%s367 + $0x120] sm:$0xff]
      %v875 = vld [vmem:[%s367 + $0x128] sm:$0xff]
      %v876 = vld [vmem:[%s367 + $0x138] sm:$0xff]
      %v877 = vld [vmem:[%s367 + $0x140] sm:$0xff]
      %v878 = vld [vmem:[%s367 + $0x150] sm:$0xff]
      %v879 = vld [vmem:[%s367 + $0x158] sm:$0xff]
      %v880 = vld [vmem:[%s367 + $0x168] sm:$0xff]
      %v881 = vld [vmem:[%s367 + $0x170] sm:$0xff]
      %914 = vrot.lane.b32.xlu0 %v850, 12
      %v915 = vpop.permute.xlu0 %914
      %916 = vrot.lane.b32.xlu0 %v851, 12
      %v917 = vpop.permute.xlu0 %916
      %918 = vrot.lane.b32.xlu0 %v852, 12
      %v919 = vpop.permute.xlu0 %918
      %920 = vrot.lane.b32.xlu0 %v853, 12
      %v921 = vpop.permute.xlu0 %920
      %922 = vrot.lane.b32.xlu0 %v854, 12
      %v923 = vpop.permute.xlu0 %922
      %924 = vrot.lane.b32.xlu0 %v855, 12
      %v925 = vpop.permute.xlu0 %924
      %926 = vrot.lane.b32.xlu0 %v856, 12
      %v927 = vpop.permute.xlu0 %926
      %928 = vrot.lane.b32.xlu0 %v857, 12
      %v929 = vpop.permute.xlu0 %928
      %930 = vrot.lane.b32.xlu0 %v858, 12
      %v931 = vpop.permute.xlu0 %930
      %932 = vrot.lane.b32.xlu0 %v859, 12
      %v933 = vpop.permute.xlu0 %932
      %934 = vrot.lane.b32.xlu0 %v860, 12
      %v935 = vpop.permute.xlu0 %934
      %936 = vrot.lane.b32.xlu0 %v861, 12
      %v937 = vpop.permute.xlu0 %936
      %938 = vrot.lane.b32.xlu0 %v862, 12
      %v939 = vpop.permute.xlu0 %938
      %940 = vrot.lane.b32.xlu0 %v863, 12
      %v941 = vpop.permute.xlu0 %940
      %942 = vrot.lane.b32.xlu0 %v864, 12
      %v943 = vpop.permute.xlu0 %942
      %944 = vrot.lane.b32.xlu0 %v865, 12
      %v945 = vpop.permute.xlu0 %944
      %946 = vrot.lane.b32.xlu0 %v866, 12
      %v947 = vpop.permute.xlu0 %946
      %948 = vrot.lane.b32.xlu0 %v867, 12
      %v949 = vpop.permute.xlu0 %948
      %950 = vrot.lane.b32.xlu0 %v868, 12
      %v951 = vpop.permute.xlu0 %950
      %952 = vrot.lane.b32.xlu0 %v869, 12
      %v953 = vpop.permute.xlu0 %952
      %954 = vrot.lane.b32.xlu0 %v870, 12
      %v955 = vpop.permute.xlu0 %954
      %956 = vrot.lane.b32.xlu0 %v871, 12
      %v957 = vpop.permute.xlu0 %956
      %958 = vrot.lane.b32.xlu0 %v872, 12
      %v959 = vpop.permute.xlu0 %958
      %960 = vrot.lane.b32.xlu0 %v873, 12
      %v961 = vpop.permute.xlu0 %960
      %962 = vrot.lane.b32.xlu0 %v874, 12
      %v963 = vpop.permute.xlu0 %962
      %964 = vrot.lane.b32.xlu0 %v875, 12
      %v965 = vpop.permute.xlu0 %964
      %966 = vrot.lane.b32.xlu0 %v876, 12
      %v967 = vpop.permute.xlu0 %966
      %968 = vrot.lane.b32.xlu0 %v877, 12
      %v969 = vpop.permute.xlu0 %968
      %970 = vrot.lane.b32.xlu0 %v878, 12
      %v971 = vpop.permute.xlu0 %970
      %972 = vrot.lane.b32.xlu0 %v879, 12
      %v973 = vpop.permute.xlu0 %972
      %974 = vrot.lane.b32.xlu0 %v880, 12
      %v975 = vpop.permute.xlu0 %974
      %976 = vrot.lane.b32.xlu0 %v881, 12
      %v977 = vpop.permute.xlu0 %976
      %vm1010 = vcmask 130144
      %1011 = vst.msk [vmem:[#allocation4] sm:$0xff] %vm1010, %v915
      %1012 = vst.msk [vmem:[#allocation4 + $0x8] sm:$0xff] %vm1010, %v917
      %1013 = vst.msk [vmem:[#allocation4 + $0x10] sm:$0xff] %vm1010, %v919
      %1014 = vst.msk [vmem:[#allocation4 + $0x18] sm:$0xff] %vm1010, %v921
      %1015 = vst.msk [vmem:[#allocation4 + $0x20] sm:$0xff] %vm1010, %v923
      %1016 = vst.msk [vmem:[#allocation4 + $0x28] sm:$0xff] %vm1010, %v925
      %1017 = vst.msk [vmem:[#allocation4 + $0x30] sm:$0xff] %vm1010, %v927
      %1018 = vst.msk [vmem:[#allocation4 + $0x38] sm:$0xff] %vm1010, %v929
      %1019 = vst.msk [vmem:[#allocation4 + $0x40] sm:$0xff] %vm1010, %v931
      %1020 = vst.msk [vmem:[#allocation4 + $0x48] sm:$0xff] %vm1010, %v933
      %1021 = vst.msk [vmem:[#allocation4 + $0x50] sm:$0xff] %vm1010, %v935
      %1022 = vst.msk [vmem:[#allocation4 + $0x58] sm:$0xff] %vm1010, %v937
      %1023 = vst.msk [vmem:[#allocation4 + $0x60] sm:$0xff] %vm1010, %v939
      %1024 = vst.msk [vmem:[#allocation4 + $0x68] sm:$0xff] %vm1010, %v941
      %1025 = vst.msk [vmem:[#allocation4 + $0x70] sm:$0xff] %vm1010, %v943
      %1026 = vst.msk [vmem:[#allocation4 + $0x78] sm:$0xff] %vm1010, %v945
      %1027 = vst.msk [vmem:[#allocation4 + $0x80] sm:$0xff] %vm1010, %v947
      %1028 = vst.msk [vmem:[#allocation4 + $0x88] sm:$0xff] %vm1010, %v949
      %1029 = vst.msk [vmem:[#allocation4 + $0x90] sm:$0xff] %vm1010, %v951
      %1030 = vst.msk [vmem:[#allocation4 + $0x98] sm:$0xff] %vm1010, %v953
      %1031 = vst.msk [vmem:[#allocation4 + $0xa0] sm:$0xff] %vm1010, %v955
      %1032 = vst.msk [vmem:[#allocation4 + $0xa8] sm:$0xff] %vm1010, %v957
      %1033 = vst.msk [vmem:[#allocation4 + $0xb0] sm:$0xff] %vm1010, %v959
      %1034 = vst.msk [vmem:[#allocation4 + $0xb8] sm:$0xff] %vm1010, %v961
      %1035 = vst.msk [vmem:[#allocation4 + $0xc0] sm:$0xff] %vm1010, %v963
      %1036 = vst.msk [vmem:[#allocation4 + $0xc8] sm:$0xff] %vm1010, %v965
      %1037 = vst.msk [vmem:[#allocation4 + $0xd0] sm:$0xff] %vm1010, %v967
      %1038 = vst.msk [vmem:[#allocation4 + $0xd8] sm:$0xff] %vm1010, %v969
      %1039 = vst.msk [vmem:[#allocation4 + $0xe0] sm:$0xff] %vm1010, %v971
      %1040 = vst.msk [vmem:[#allocation4 + $0xe8] sm:$0xff] %vm1010, %v973
      %1041 = vst.msk [vmem:[#allocation4 + $0xf0] sm:$0xff] %vm1010, %v975
      %1042 = vst.msk [vmem:[#allocation4 + $0xf8] sm:$0xff] %vm1010, %v977
      %v1043 = vld [vmem:[%s367 + $0x1] sm:$0xff]
      %v1044 = vld [vmem:[%s367 + $0x9] sm:$0xff]
      %v1045 = vld [vmem:[%s367 + $0x19] sm:$0xff]
      %v1046 = vld [vmem:[%s367 + $0x21] sm:$0xff]
      %v1047 = vld [vmem:[%s367 + $0x31] sm:$0xff]
      %v1048 = vld [vmem:[%s367 + $0x39] sm:$0xff]
      %v1049 = vld [vmem:[%s367 + $0x49] sm:$0xff]
      %v1050 = vld [vmem:[%s367 + $0x51] sm:$0xff]
      %v1051 = vld [vmem:[%s367 + $0x61] sm:$0xff]
      %v1052 = vld [vmem:[%s367 + $0x69] sm:$0xff]
      %v1053 = vld [vmem:[%s367 + $0x79] sm:$0xff]
      %v1054 = vld [vmem:[%s367 + $0x81] sm:$0xff]
      %v1055 = vld [vmem:[%s367 + $0x91] sm:$0xff]
      %v1056 = vld [vmem:[%s367 + $0x99] sm:$0xff]
      %v1057 = vld [vmem:[%s367 + $0xa9] sm:$0xff]
      %v1058 = vld [vmem:[%s367 + $0xb1] sm:$0xff]
      %v1059 = vld [vmem:[%s367 + $0xc1] sm:$0xff]
      %v1060 = vld [vmem:[%s367 + $0xc9] sm:$0xff]
      %v1061 = vld [vmem:[%s367 + $0xd9] sm:$0xff]
      %v1062 = vld [vmem:[%s367 + $0xe1] sm:$0xff]
      %v1063 = vld [vmem:[%s367 + $0xf1] sm:$0xff]
      %v1064 = vld [vmem:[%s367 + $0xf9] sm:$0xff]
      %v1065 = vld [vmem:[%s367 + $0x109] sm:$0xff]
      %v1066 = vld [vmem:[%s367 + $0x111] sm:$0xff]
      %v1067 = vld [vmem:[%s367 + $0x121] sm:$0xff]
      %v1068 = vld [vmem:[%s367 + $0x129] sm:$0xff]
      %v1069 = vld [vmem:[%s367 + $0x139] sm:$0xff]
      %v1070 = vld [vmem:[%s367 + $0x141] sm:$0xff]
      %v1071 = vld [vmem:[%s367 + $0x151] sm:$0xff]
      %v1072 = vld [vmem:[%s367 + $0x159] sm:$0xff]
      %v1073 = vld [vmem:[%s367 + $0x169] sm:$0xff]
      %v1074 = vld [vmem:[%s367 + $0x171] sm:$0xff]
      %1107 = vrot.lane.b32.xlu0 %v1043, 16
      %v1108 = vpop.permute.xlu0 %1107
      %1109 = vrot.lane.b32.xlu0 %v1044, 16
      %v1110 = vpop.permute.xlu0 %1109
      %1111 = vrot.lane.b32.xlu0 %v1045, 16
      %v1112 = vpop.permute.xlu0 %1111
      %1113 = vrot.lane.b32.xlu0 %v1046, 16
      %v1114 = vpop.permute.xlu0 %1113
      %1115 = vrot.lane.b32.xlu0 %v1047, 16
      %v1116 = vpop.permute.xlu0 %1115
      %1117 = vrot.lane.b32.xlu0 %v1048, 16
      %v1118 = vpop.permute.xlu0 %1117
      %1119 = vrot.lane.b32.xlu0 %v1049, 16
      %v1120 = vpop.permute.xlu0 %1119
      %1121 = vrot.lane.b32.xlu0 %v1050, 16
      %v1122 = vpop.permute.xlu0 %1121
      %1123 = vrot.lane.b32.xlu0 %v1051, 16
      %v1124 = vpop.permute.xlu0 %1123
      %1125 = vrot.lane.b32.xlu0 %v1052, 16
      %v1126 = vpop.permute.xlu0 %1125
      %1127 = vrot.lane.b32.xlu0 %v1053, 16
      %v1128 = vpop.permute.xlu0 %1127
      %1129 = vrot.lane.b32.xlu0 %v1054, 16
      %v1130 = vpop.permute.xlu0 %1129
      %1131 = vrot.lane.b32.xlu0 %v1055, 16
      %v1132 = vpop.permute.xlu0 %1131
      %1133 = vrot.lane.b32.xlu0 %v1056, 16
      %v1134 = vpop.permute.xlu0 %1133
      %1135 = vrot.lane.b32.xlu0 %v1057, 16
      %v1136 = vpop.permute.xlu0 %1135
      %1137 = vrot.lane.b32.xlu0 %v1058, 16
      %v1138 = vpop.permute.xlu0 %1137
      %1139 = vrot.lane.b32.xlu0 %v1059, 16
      %v1140 = vpop.permute.xlu0 %1139
      %1141 = vrot.lane.b32.xlu0 %v1060, 16
      %v1142 = vpop.permute.xlu0 %1141
      %1143 = vrot.lane.b32.xlu0 %v1061, 16
      %v1144 = vpop.permute.xlu0 %1143
      %1145 = vrot.lane.b32.xlu0 %v1062, 16
      %v1146 = vpop.permute.xlu0 %1145
      %1147 = vrot.lane.b32.xlu0 %v1063, 16
      %v1148 = vpop.permute.xlu0 %1147
      %1149 = vrot.lane.b32.xlu0 %v1064, 16
      %v1150 = vpop.permute.xlu0 %1149
      %1151 = vrot.lane.b32.xlu0 %v1065, 16
      %v1152 = vpop.permute.xlu0 %1151
      %1153 = vrot.lane.b32.xlu0 %v1066, 16
      %v1154 = vpop.permute.xlu0 %1153
      %1155 = vrot.lane.b32.xlu0 %v1067, 16
      %v1156 = vpop.permute.xlu0 %1155
      %1157 = vrot.lane.b32.xlu0 %v1068, 16
      %v1158 = vpop.permute.xlu0 %1157
      %1159 = vrot.lane.b32.xlu0 %v1069, 16
      %v1160 = vpop.permute.xlu0 %1159
      %1161 = vrot.lane.b32.xlu0 %v1070, 16
      %v1162 = vpop.permute.xlu0 %1161
      %1163 = vrot.lane.b32.xlu0 %v1071, 16
      %v1164 = vpop.permute.xlu0 %1163
      %1165 = vrot.lane.b32.xlu0 %v1072, 16
      %v1166 = vpop.permute.xlu0 %1165
      %1167 = vrot.lane.b32.xlu0 %v1073, 16
      %v1168 = vpop.permute.xlu0 %1167
      %1169 = vrot.lane.b32.xlu0 %v1074, 16
      %v1170 = vpop.permute.xlu0 %1169
      %vm1203 = vcmask 162944
      %1204 = vst.msk [vmem:[#allocation4] sm:$0xff] %vm1203, %v1108
      %1205 = vst.msk [vmem:[#allocation4 + $0x8] sm:$0xff] %vm1203, %v1110
      %1206 = vst.msk [vmem:[#allocation4 + $0x10] sm:$0xff] %vm1203, %v1112
      %1207 = vst.msk [vmem:[#allocation4 + $0x18] sm:$0xff] %vm1203, %v1114
      %1208 = vst.msk [vmem:[#allocation4 + $0x20] sm:$0xff] %vm1203, %v1116
      %1209 = vst.msk [vmem:[#allocation4 + $0x28] sm:$0xff] %vm1203, %v1118
      %1210 = vst.msk [vmem:[#allocation4 + $0x30] sm:$0xff] %vm1203, %v1120
      %1211 = vst.msk [vmem:[#allocation4 + $0x38] sm:$0xff] %vm1203, %v1122
      %1212 = vst.msk [vmem:[#allocation4 + $0x40] sm:$0xff] %vm1203, %v1124
      %1213 = vst.msk [vmem:[#allocation4 + $0x48] sm:$0xff] %vm1203, %v1126
      %1214 = vst.msk [vmem:[#allocation4 + $0x50] sm:$0xff] %vm1203, %v1128
      %1215 = vst.msk [vmem:[#allocation4 + $0x58] sm:$0xff] %vm1203, %v1130
      %1216 = vst.msk [vmem:[#allocation4 + $0x60] sm:$0xff] %vm1203, %v1132
      %1217 = vst.msk [vmem:[#allocation4 + $0x68] sm:$0xff] %vm1203, %v1134
      %1218 = vst.msk [vmem:[#allocation4 + $0x70] sm:$0xff] %vm1203, %v1136
      %1219 = vst.msk [vmem:[#allocation4 + $0x78] sm:$0xff] %vm1203, %v1138
      %1220 = vst.msk [vmem:[#allocation4 + $0x80] sm:$0xff] %vm1203, %v1140
      %1221 = vst.msk [vmem:[#allocation4 + $0x88] sm:$0xff] %vm1203, %v1142
      %1222 = vst.msk [vmem:[#allocation4 + $0x90] sm:$0xff] %vm1203, %v1144
      %1223 = vst.msk [vmem:[#allocation4 + $0x98] sm:$0xff] %vm1203, %v1146
      %1224 = vst.msk [vmem:[#allocation4 + $0xa0] sm:$0xff] %vm1203, %v1148
      %1225 = vst.msk [vmem:[#allocation4 + $0xa8] sm:$0xff] %vm1203, %v1150
      %1226 = vst.msk [vmem:[#allocation4 + $0xb0] sm:$0xff] %vm1203, %v1152
      %1227 = vst.msk [vmem:[#allocation4 + $0xb8] sm:$0xff] %vm1203, %v1154
      %1228 = vst.msk [vmem:[#allocation4 + $0xc0] sm:$0xff] %vm1203, %v1156
      %1229 = vst.msk [vmem:[#allocation4 + $0xc8] sm:$0xff] %vm1203, %v1158
      %1230 = vst.msk [vmem:[#allocation4 + $0xd0] sm:$0xff] %vm1203, %v1160
      %1231 = vst.msk [vmem:[#allocation4 + $0xd8] sm:$0xff] %vm1203, %v1162
      %1232 = vst.msk [vmem:[#allocation4 + $0xe0] sm:$0xff] %vm1203, %v1164
      %1233 = vst.msk [vmem:[#allocation4 + $0xe8] sm:$0xff] %vm1203, %v1166
      %1234 = vst.msk [vmem:[#allocation4 + $0xf0] sm:$0xff] %vm1203, %v1168
      %1235 = vst.msk [vmem:[#allocation4 + $0xf8] sm:$0xff] %vm1203, %v1170
      %v1236 = vld [vmem:[%s367 + $0x2] sm:$0xff]
      %v1237 = vld [vmem:[%s367 + $0xa] sm:$0xff]
      %v1238 = vld [vmem:[%s367 + $0x1a] sm:$0xff]
      %v1239 = vld [vmem:[%s367 + $0x22] sm:$0xff]
      %v1240 = vld [vmem:[%s367 + $0x32] sm:$0xff]
      %v1241 = vld [vmem:[%s367 + $0x3a] sm:$0xff]
      %v1242 = vld [vmem:[%s367 + $0x4a] sm:$0xff]
      %v1243 = vld [vmem:[%s367 + $0x52] sm:$0xff]
      %v1244 = vld [vmem:[%s367 + $0x62] sm:$0xff]
      %v1245 = vld [vmem:[%s367 + $0x6a] sm:$0xff]
      %v1246 = vld [vmem:[%s367 + $0x7a] sm:$0xff]
      %v1247 = vld [vmem:[%s367 + $0x82] sm:$0xff]
      %v1248 = vld [vmem:[%s367 + $0x92] sm:$0xff]
      %v1249 = vld [vmem:[%s367 + $0x9a] sm:$0xff]
      %v1250 = vld [vmem:[%s367 + $0xaa] sm:$0xff]
      %v1251 = vld [vmem:[%s367 + $0xb2] sm:$0xff]
      %v1252 = vld [vmem:[%s367 + $0xc2] sm:$0xff]
      %v1253 = vld [vmem:[%s367 + $0xca] sm:$0xff]
      %v1254 = vld [vmem:[%s367 + $0xda] sm:$0xff]
      %v1255 = vld [vmem:[%s367 + $0xe2] sm:$0xff]
      %v1256 = vld [vmem:[%s367 + $0xf2] sm:$0xff]
      %v1257 = vld [vmem:[%s367 + $0xfa] sm:$0xff]
      %v1258 = vld [vmem:[%s367 + $0x10a] sm:$0xff]
      %v1259 = vld [vmem:[%s367 + $0x112] sm:$0xff]
      %v1260 = vld [vmem:[%s367 + $0x122] sm:$0xff]
      %v1261 = vld [vmem:[%s367 + $0x12a] sm:$0xff]
      %v1262 = vld [vmem:[%s367 + $0x13a] sm:$0xff]
      %v1263 = vld [vmem:[%s367 + $0x142] sm:$0xff]
      %v1264 = vld [vmem:[%s367 + $0x152] sm:$0xff]
      %v1265 = vld [vmem:[%s367 + $0x15a] sm:$0xff]
      %v1266 = vld [vmem:[%s367 + $0x16a] sm:$0xff]
      %v1267 = vld [vmem:[%s367 + $0x172] sm:$0xff]
      %1300 = vrot.lane.b32.xlu0 %v1236, 20
      %v1301 = vpop.permute.xlu0 %1300
      %1302 = vrot.lane.b32.xlu0 %v1237, 20
      %v1303 = vpop.permute.xlu0 %1302
      %1304 = vrot.lane.b32.xlu0 %v1238, 20
      %v1305 = vpop.permute.xlu0 %1304
      %1306 = vrot.lane.b32.xlu0 %v1239, 20
      %v1307 = vpop.permute.xlu0 %1306
      %1308 = vrot.lane.b32.xlu0 %v1240, 20
      %v1309 = vpop.permute.xlu0 %1308
      %1310 = vrot.lane.b32.xlu0 %v1241, 20
      %v1311 = vpop.permute.xlu0 %1310
      %1312 = vrot.lane.b32.xlu0 %v1242, 20
      %v1313 = vpop.permute.xlu0 %1312
      %1314 = vrot.lane.b32.xlu0 %v1243, 20
      %v1315 = vpop.permute.xlu0 %1314
      %1316 = vrot.lane.b32.xlu0 %v1244, 20
      %v1317 = vpop.permute.xlu0 %1316
      %1318 = vrot.lane.b32.xlu0 %v1245, 20
      %v1319 = vpop.permute.xlu0 %1318
      %1320 = vrot.lane.b32.xlu0 %v1246, 20
      %v1321 = vpop.permute.xlu0 %1320
      %1322 = vrot.lane.b32.xlu0 %v1247, 20
      %v1323 = vpop.permute.xlu0 %1322
      %1324 = vrot.lane.b32.xlu0 %v1248, 20
      %v1325 = vpop.permute.xlu0 %1324
      %1326 = vrot.lane.b32.xlu0 %v1249, 20
      %v1327 = vpop.permute.xlu0 %1326
      %1328 = vrot.lane.b32.xlu0 %v1250, 20
      %v1329 = vpop.permute.xlu0 %1328
      %1330 = vrot.lane.b32.xlu0 %v1251, 20
      %v1331 = vpop.permute.xlu0 %1330
      %1332 = vrot.lane.b32.xlu0 %v1252, 20
      %v1333 = vpop.permute.xlu0 %1332
      %1334 = vrot.lane.b32.xlu0 %v1253, 20
      %v1335 = vpop.permute.xlu0 %1334
      %1336 = vrot.lane.b32.xlu0 %v1254, 20
      %v1337 = vpop.permute.xlu0 %1336
      %1338 = vrot.lane.b32.xlu0 %v1255, 20
      %v1339 = vpop.permute.xlu0 %1338
      %1340 = vrot.lane.b32.xlu0 %v1256, 20
      %v1341 = vpop.permute.xlu0 %1340
      %1342 = vrot.lane.b32.xlu0 %v1257, 20
      %v1343 = vpop.permute.xlu0 %1342
      %1344 = vrot.lane.b32.xlu0 %v1258, 20
      %v1345 = vpop.permute.xlu0 %1344
      %1346 = vrot.lane.b32.xlu0 %v1259, 20
      %v1347 = vpop.permute.xlu0 %1346
      %1348 = vrot.lane.b32.xlu0 %v1260, 20
      %v1349 = vpop.permute.xlu0 %1348
      %1350 = vrot.lane.b32.xlu0 %v1261, 20
      %v1351 = vpop.permute.xlu0 %1350
      %1352 = vrot.lane.b32.xlu0 %v1262, 20
      %v1353 = vpop.permute.xlu0 %1352
      %1354 = vrot.lane.b32.xlu0 %v1263, 20
      %v1355 = vpop.permute.xlu0 %1354
      %1356 = vrot.lane.b32.xlu0 %v1264, 20
      %v1357 = vpop.permute.xlu0 %1356
      %1358 = vrot.lane.b32.xlu0 %v1265, 20
      %v1359 = vpop.permute.xlu0 %1358
      %1360 = vrot.lane.b32.xlu0 %v1266, 20
      %v1361 = vpop.permute.xlu0 %1360
      %1362 = vrot.lane.b32.xlu0 %v1267, 20
      %v1363 = vpop.permute.xlu0 %1362
      %vm1396 = vcmask 195744
      %1397 = vst.msk [vmem:[#allocation4] sm:$0xff] %vm1396, %v1301
      %1398 = vst.msk [vmem:[#allocation4 + $0x8] sm:$0xff] %vm1396, %v1303
      %1399 = vst.msk [vmem:[#allocation4 + $0x10] sm:$0xff] %vm1396, %v1305
      %1400 = vst.msk [vmem:[#allocation4 + $0x18] sm:$0xff] %vm1396, %v1307
      %1401 = vst.msk [vmem:[#allocation4 + $0x20] sm:$0xff] %vm1396, %v1309
      %1402 = vst.msk [vmem:[#allocation4 + $0x28] sm:$0xff] %vm1396, %v1311
      %1403 = vst.msk [vmem:[#allocation4 + $0x30] sm:$0xff] %vm1396, %v1313
      %1404 = vst.msk [vmem:[#allocation4 + $0x38] sm:$0xff] %vm1396, %v1315
      %1405 = vst.msk [vmem:[#allocation4 + $0x40] sm:$0xff] %vm1396, %v1317
      %1406 = vst.msk [vmem:[#allocation4 + $0x48] sm:$0xff] %vm1396, %v1319
      %1407 = vst.msk [vmem:[#allocation4 + $0x50] sm:$0xff] %vm1396, %v1321
      %1408 = vst.msk [vmem:[#allocation4 + $0x58] sm:$0xff] %vm1396, %v1323
      %1409 = vst.msk [vmem:[#allocation4 + $0x60] sm:$0xff] %vm1396, %v1325
      %1410 = vst.msk [vmem:[#allocation4 + $0x68] sm:$0xff] %vm1396, %v1327
      %1411 = vst.msk [vmem:[#allocation4 + $0x70] sm:$0xff] %vm1396, %v1329
      %1412 = vst.msk [vmem:[#allocation4 + $0x78] sm:$0xff] %vm1396, %v1331
      %1413 = vst.msk [vmem:[#allocation4 + $0x80] sm:$0xff] %vm1396, %v1333
      %1414 = vst.msk [vmem:[#allocation4 + $0x88] sm:$0xff] %vm1396, %v1335
      %1415 = vst.msk [vmem:[#allocation4 + $0x90] sm:$0xff] %vm1396, %v1337
      %1416 = vst.msk [vmem:[#allocation4 + $0x98] sm:$0xff] %vm1396, %v1339
      %1417 = vst.msk [vmem:[#allocation4 + $0xa0] sm:$0xff] %vm1396, %v1341
      %1418 = vst.msk [vmem:[#allocation4 + $0xa8] sm:$0xff] %vm1396, %v1343
      %1419 = vst.msk [vmem:[#allocation4 + $0xb0] sm:$0xff] %vm1396, %v1345
      %1420 = vst.msk [vmem:[#allocation4 + $0xb8] sm:$0xff] %vm1396, %v1347
      %1421 = vst.msk [vmem:[#allocation4 + $0xc0] sm:$0xff] %vm1396, %v1349
      %1422 = vst.msk [vmem:[#allocation4 + $0xc8] sm:$0xff] %vm1396, %v1351
      %1423 = vst.msk [vmem:[#allocation4 + $0xd0] sm:$0xff] %vm1396, %v1353
      %1424 = vst.msk [vmem:[#allocation4 + $0xd8] sm:$0xff] %vm1396, %v1355
      %1425 = vst.msk [vmem:[#allocation4 + $0xe0] sm:$0xff] %vm1396, %v1357
      %1426 = vst.msk [vmem:[#allocation4 + $0xe8] sm:$0xff] %vm1396, %v1359
      %1427 = vst.msk [vmem:[#allocation4 + $0xf0] sm:$0xff] %vm1396, %v1361
      %1428 = vst.msk [vmem:[#allocation4 + $0xf8] sm:$0xff] %vm1396, %v1363
      %s1429 = scalar_lea.vmem [#allocation2], 48
      %v1430 = vld [vmem:[%s1429] sm:$0xff]
      %v1431 = vld [vmem:[%s1429 + $0x8] sm:$0xff]
      %v1432 = vld [vmem:[%s1429 + $0x18] sm:$0xff]
      %v1433 = vld [vmem:[%s1429 + $0x20] sm:$0xff]
      %v1434 = vld [vmem:[%s1429 + $0x30] sm:$0xff]
      %v1435 = vld [vmem:[%s1429 + $0x38] sm:$0xff]
      %v1436 = vld [vmem:[%s1429 + $0x48] sm:$0xff]
      %v1437 = vld [vmem:[%s1429 + $0x50] sm:$0xff]
      %v1438 = vld [vmem:[%s1429 + $0x60] sm:$0xff]
      %v1439 = vld [vmem:[%s1429 + $0x68] sm:$0xff]
      %v1440 = vld [vmem:[%s1429 + $0x78] sm:$0xff]
      %v1441 = vld [vmem:[%s1429 + $0x80] sm:$0xff]
      %v1442 = vld [vmem:[%s1429 + $0x90] sm:$0xff]
      %v1443 = vld [vmem:[%s1429 + $0x98] sm:$0xff]
      %v1444 = vld [vmem:[%s1429 + $0xa8] sm:$0xff]
      %v1445 = vld [vmem:[%s1429 + $0xb0] sm:$0xff]
      %v1446 = vld [vmem:[%s1429 + $0xc0] sm:$0xff]
      %v1447 = vld [vmem:[%s1429 + $0xc8] sm:$0xff]
      %v1448 = vld [vmem:[%s1429 + $0xd8] sm:$0xff]
      %v1449 = vld [vmem:[%s1429 + $0xe0] sm:$0xff]
      %v1450 = vld [vmem:[%s1429 + $0xf0] sm:$0xff]
      %v1451 = vld [vmem:[%s1429 + $0xf8] sm:$0xff]
      %v1452 = vld [vmem:[%s1429 + $0x108] sm:$0xff]
      %v1453 = vld [vmem:[%s1429 + $0x110] sm:$0xff]
      %v1454 = vld [vmem:[%s1429 + $0x120] sm:$0xff]
      %v1455 = vld [vmem:[%s1429 + $0x128] sm:$0xff]
      %v1456 = vld [vmem:[%s1429 + $0x138] sm:$0xff]
      %v1457 = vld [vmem:[%s1429 + $0x140] sm:$0xff]
      %v1458 = vld [vmem:[%s1429 + $0x150] sm:$0xff]
      %v1459 = vld [vmem:[%s1429 + $0x158] sm:$0xff]
      %v1460 = vld [vmem:[%s1429 + $0x168] sm:$0xff]
      %v1461 = vld [vmem:[%s1429 + $0x170] sm:$0xff]
      %1494 = vrot.lane.b32.xlu0 %v1430, 24
      %v1495 = vpop.permute.xlu0 %1494
      %1496 = vrot.lane.b32.xlu0 %v1431, 24
      %v1497 = vpop.permute.xlu0 %1496
      %1498 = vrot.lane.b32.xlu0 %v1432, 24
      %v1499 = vpop.permute.xlu0 %1498
      %1500 = vrot.lane.b32.xlu0 %v1433, 24
      %v1501 = vpop.permute.xlu0 %1500
      %1502 = vrot.lane.b32.xlu0 %v1434, 24
      %v1503 = vpop.permute.xlu0 %1502
      %1504 = vrot.lane.b32.xlu0 %v1435, 24
      %v1505 = vpop.permute.xlu0 %1504
      %1506 = vrot.lane.b32.xlu0 %v1436, 24
      %v1507 = vpop.permute.xlu0 %1506
      %1508 = vrot.lane.b32.xlu0 %v1437, 24
      %v1509 = vpop.permute.xlu0 %1508
      %1510 = vrot.lane.b32.xlu0 %v1438, 24
      %v1511 = vpop.permute.xlu0 %1510
      %1512 = vrot.lane.b32.xlu0 %v1439, 24
      %v1513 = vpop.permute.xlu0 %1512
      %1514 = vrot.lane.b32.xlu0 %v1440, 24
      %v1515 = vpop.permute.xlu0 %1514
      %1516 = vrot.lane.b32.xlu0 %v1441, 24
      %v1517 = vpop.permute.xlu0 %1516
      %1518 = vrot.lane.b32.xlu0 %v1442, 24
      %v1519 = vpop.permute.xlu0 %1518
      %1520 = vrot.lane.b32.xlu0 %v1443, 24
      %v1521 = vpop.permute.xlu0 %1520
      %1522 = vrot.lane.b32.xlu0 %v1444, 24
      %v1523 = vpop.permute.xlu0 %1522
      %1524 = vrot.lane.b32.xlu0 %v1445, 24
      %v1525 = vpop.permute.xlu0 %1524
      %1526 = vrot.lane.b32.xlu0 %v1446, 24
      %v1527 = vpop.permute.xlu0 %1526
      %1528 = vrot.lane.b32.xlu0 %v1447, 24
      %v1529 = vpop.permute.xlu0 %1528
      %1530 = vrot.lane.b32.xlu0 %v1448, 24
      %v1531 = vpop.permute.xlu0 %1530
      %1532 = vrot.lane.b32.xlu0 %v1449, 24
      %v1533 = vpop.permute.xlu0 %1532
      %1534 = vrot.lane.b32.xlu0 %v1450, 24
      %v1535 = vpop.permute.xlu0 %1534
      %1536 = vrot.lane.b32.xlu0 %v1451, 24
      %v1537 = vpop.permute.xlu0 %1536
      %1538 = vrot.lane.b32.xlu0 %v1452, 24
      %v1539 = vpop.permute.xlu0 %1538
      %1540 = vrot.lane.b32.xlu0 %v1453, 24
      %v1541 = vpop.permute.xlu0 %1540
      %1542 = vrot.lane.b32.xlu0 %v1454, 24
      %v1543 = vpop.permute.xlu0 %1542
      %1544 = vrot.lane.b32.xlu0 %v1455, 24
      %v1545 = vpop.permute.xlu0 %1544
      %1546 = vrot.lane.b32.xlu0 %v1456, 24
      %v1547 = vpop.permute.xlu0 %1546
      %1548 = vrot.lane.b32.xlu0 %v1457, 24
      %v1549 = vpop.permute.xlu0 %1548
      %1550 = vrot.lane.b32.xlu0 %v1458, 24
      %v1551 = vpop.permute.xlu0 %1550
      %1552 = vrot.lane.b32.xlu0 %v1459, 24
      %v1553 = vpop.permute.xlu0 %1552
      %1554 = vrot.lane.b32.xlu0 %v1460, 24
      %v1555 = vpop.permute.xlu0 %1554
      %1556 = vrot.lane.b32.xlu0 %v1461, 24
      %v1557 = vpop.permute.xlu0 %1556
      %vm1590 = vcmask 228544
      %1591 = vst.msk [vmem:[#allocation4] sm:$0xff] %vm1590, %v1495
      %1592 = vst.msk [vmem:[#allocation4 + $0x8] sm:$0xff] %vm1590, %v1497
      %1593 = vst.msk [vmem:[#allocation4 + $0x10] sm:$0xff] %vm1590, %v1499
      %1594 = vst.msk [vmem:[#allocation4 + $0x18] sm:$0xff] %vm1590, %v1501
      %1595 = vst.msk [vmem:[#allocation4 + $0x20] sm:$0xff] %vm1590, %v1503
      %1596 = vst.msk [vmem:[#allocation4 + $0x28] sm:$0xff] %vm1590, %v1505
      %1597 = vst.msk [vmem:[#allocation4 + $0x30] sm:$0xff] %vm1590, %v1507
      %1598 = vst.msk [vmem:[#allocation4 + $0x38] sm:$0xff] %vm1590, %v1509
      %1599 = vst.msk [vmem:[#allocation4 + $0x40] sm:$0xff] %vm1590, %v1511
      %1600 = vst.msk [vmem:[#allocation4 + $0x48] sm:$0xff] %vm1590, %v1513
      %1601 = vst.msk [vmem:[#allocation4 + $0x50] sm:$0xff] %vm1590, %v1515
      %1602 = vst.msk [vmem:[#allocation4 + $0x58] sm:$0xff] %vm1590, %v1517
      %1603 = vst.msk [vmem:[#allocation4 + $0x60] sm:$0xff] %vm1590, %v1519
      %1604 = vst.msk [vmem:[#allocation4 + $0x68] sm:$0xff] %vm1590, %v1521
      %1605 = vst.msk [vmem:[#allocation4 + $0x70] sm:$0xff] %vm1590, %v1523
      %1606 = vst.msk [vmem:[#allocation4 + $0x78] sm:$0xff] %vm1590, %v1525
      %1607 = vst.msk [vmem:[#allocation4 + $0x80] sm:$0xff] %vm1590, %v1527
      %1608 = vst.msk [vmem:[#allocation4 + $0x88] sm:$0xff] %vm1590, %v1529
      %1609 = vst.msk [vmem:[#allocation4 + $0x90] sm:$0xff] %vm1590, %v1531
      %1610 = vst.msk [vmem:[#allocation4 + $0x98] sm:$0xff] %vm1590, %v1533
      %1611 = vst.msk [vmem:[#allocation4 + $0xa0] sm:$0xff] %vm1590, %v1535
      %1612 = vst.msk [vmem:[#allocation4 + $0xa8] sm:$0xff] %vm1590, %v1537
      %1613 = vst.msk [vmem:[#allocation4 + $0xb0] sm:$0xff] %vm1590, %v1539
      %1614 = vst.msk [vmem:[#allocation4 + $0xb8] sm:$0xff] %vm1590, %v1541
      %1615 = vst.msk [vmem:[#allocation4 + $0xc0] sm:$0xff] %vm1590, %v1543
      %1616 = vst.msk [vmem:[#allocation4 + $0xc8] sm:$0xff] %vm1590, %v1545
      %1617 = vst.msk [vmem:[#allocation4 + $0xd0] sm:$0xff] %vm1590, %v1547
      %1618 = vst.msk [vmem:[#allocation4 + $0xd8] sm:$0xff] %vm1590, %v1549
      %1619 = vst.msk [vmem:[#allocation4 + $0xe0] sm:$0xff] %vm1590, %v1551
      %1620 = vst.msk [vmem:[#allocation4 + $0xe8] sm:$0xff] %vm1590, %v1553
      %1621 = vst.msk [vmem:[#allocation4 + $0xf0] sm:$0xff] %vm1590, %v1555
      %1622 = vst.msk [vmem:[#allocation4 + $0xf8] sm:$0xff] %vm1590, %v1557
      %v1623 = vld [vmem:[%s1429 + $0x1] sm:$0xff]
      %v1624 = vld [vmem:[%s1429 + $0x9] sm:$0xff]
      %v1625 = vld [vmem:[%s1429 + $0x19] sm:$0xff]
      %v1626 = vld [vmem:[%s1429 + $0x21] sm:$0xff]
      %v1627 = vld [vmem:[%s1429 + $0x31] sm:$0xff]
      %v1628 = vld [vmem:[%s1429 + $0x39] sm:$0xff]
      %v1629 = vld [vmem:[%s1429 + $0x49] sm:$0xff]
      %v1630 = vld [vmem:[%s1429 + $0x51] sm:$0xff]
      %v1631 = vld [vmem:[%s1429 + $0x61] sm:$0xff]
      %v1632 = vld [vmem:[%s1429 + $0x69] sm:$0xff]
      %v1633 = vld [vmem:[%s1429 + $0x79] sm:$0xff]
      %v1634 = vld [vmem:[%s1429 + $0x81] sm:$0xff]
      %v1635 = vld [vmem:[%s1429 + $0x91] sm:$0xff]
      %v1636 = vld [vmem:[%s1429 + $0x99] sm:$0xff]
      %v1637 = vld [vmem:[%s1429 + $0xa9] sm:$0xff]
      %v1638 = vld [vmem:[%s1429 + $0xb1] sm:$0xff]
      %v1639 = vld [vmem:[%s1429 + $0xc1] sm:$0xff]
      %v1640 = vld [vmem:[%s1429 + $0xc9] sm:$0xff]
      %v1641 = vld [vmem:[%s1429 + $0xd9] sm:$0xff]
      %v1642 = vld [vmem:[%s1429 + $0xe1] sm:$0xff]
      %v1643 = vld [vmem:[%s1429 + $0xf1] sm:$0xff]
      %v1644 = vld [vmem:[%s1429 + $0xf9] sm:$0xff]
      %v1645 = vld [vmem:[%s1429 + $0x109] sm:$0xff]
      %v1646 = vld [vmem:[%s1429 + $0x111] sm:$0xff]
      %v1647 = vld [vmem:[%s1429 + $0x121] sm:$0xff]
      %v1648 = vld [vmem:[%s1429 + $0x129] sm:$0xff]
      %v1649 = vld [vmem:[%s1429 + $0x139] sm:$0xff]
      %v1650 = vld [vmem:[%s1429 + $0x141] sm:$0xff]
      %v1651 = vld [vmem:[%s1429 + $0x151] sm:$0xff]
      %v1652 = vld [vmem:[%s1429 + $0x159] sm:$0xff]
      %v1653 = vld [vmem:[%s1429 + $0x169] sm:$0xff]
      %v1654 = vld [vmem:[%s1429 + $0x171] sm:$0xff]
      %1687 = vrot.lane.b32.xlu0 %v1623, 28
      %v1688 = vpop.permute.xlu0 %1687
      %1689 = vrot.lane.b32.xlu0 %v1624, 28
      %v1690 = vpop.permute.xlu0 %1689
      %1691 = vrot.lane.b32.xlu0 %v1625, 28
      %v1692 = vpop.permute.xlu0 %1691
      %1693 = vrot.lane.b32.xlu0 %v1626, 28
      %v1694 = vpop.permute.xlu0 %1693
      %1695 = vrot.lane.b32.xlu0 %v1627, 28
      %v1696 = vpop.permute.xlu0 %1695
      %1697 = vrot.lane.b32.xlu0 %v1628, 28
      %v1698 = vpop.permute.xlu0 %1697
      %1699 = vrot.lane.b32.xlu0 %v1629, 28
      %v1700 = vpop.permute.xlu0 %1699
      %1701 = vrot.lane.b32.xlu0 %v1630, 28
      %v1702 = vpop.permute.xlu0 %1701
      %1703 = vrot.lane.b32.xlu0 %v1631, 28
      %v1704 = vpop.permute.xlu0 %1703
      %1705 = vrot.lane.b32.xlu0 %v1632, 28
      %v1706 = vpop.permute.xlu0 %1705
      %1707 = vrot.lane.b32.xlu0 %v1633, 28
      %v1708 = vpop.permute.xlu0 %1707
      %1709 = vrot.lane.b32.xlu0 %v1634, 28
      %v1710 = vpop.permute.xlu0 %1709
      %1711 = vrot.lane.b32.xlu0 %v1635, 28
      %v1712 = vpop.permute.xlu0 %1711
      %1713 = vrot.lane.b32.xlu0 %v1636, 28
      %v1714 = vpop.permute.xlu0 %1713
      %1715 = vrot.lane.b32.xlu0 %v1637, 28
      %v1716 = vpop.permute.xlu0 %1715
      %1717 = vrot.lane.b32.xlu0 %v1638, 28
      %v1718 = vpop.permute.xlu0 %1717
      %1719 = vrot.lane.b32.xlu0 %v1639, 28
      %v1720 = vpop.permute.xlu0 %1719
      %1721 = vrot.lane.b32.xlu0 %v1640, 28
      %v1722 = vpop.permute.xlu0 %1721
      %1723 = vrot.lane.b32.xlu0 %v1641, 28
      %v1724 = vpop.permute.xlu0 %1723
      %1725 = vrot.lane.b32.xlu0 %v1642, 28
      %v1726 = vpop.permute.xlu0 %1725
      %1727 = vrot.lane.b32.xlu0 %v1643, 28
      %v1728 = vpop.permute.xlu0 %1727
      %1729 = vrot.lane.b32.xlu0 %v1644, 28
      %v1730 = vpop.permute.xlu0 %1729
      %1731 = vrot.lane.b32.xlu0 %v1645, 28
      %v1732 = vpop.permute.xlu0 %1731
      %1733 = vrot.lane.b32.xlu0 %v1646, 28
      %v1734 = vpop.permute.xlu0 %1733
      %1735 = vrot.lane.b32.xlu0 %v1647, 28
      %v1736 = vpop.permute.xlu0 %1735
      %1737 = vrot.lane.b32.xlu0 %v1648, 28
      %v1738 = vpop.permute.xlu0 %1737
      %1739 = vrot.lane.b32.xlu0 %v1649, 28
      %v1740 = vpop.permute.xlu0 %1739
      %1741 = vrot.lane.b32.xlu0 %v1650, 28
      %v1742 = vpop.permute.xlu0 %1741
      %1743 = vrot.lane.b32.xlu0 %v1651, 28
      %v1744 = vpop.permute.xlu0 %1743
      %1745 = vrot.lane.b32.xlu0 %v1652, 28
      %v1746 = vpop.permute.xlu0 %1745
      %1747 = vrot.lane.b32.xlu0 %v1653, 28
      %v1748 = vpop.permute.xlu0 %1747
      %1749 = vrot.lane.b32.xlu0 %v1654, 28
      %v1750 = vpop.permute.xlu0 %1749
      %vm1783 = vcmask 261344
      %1784 = vst.msk [vmem:[#allocation4] sm:$0xff] %vm1783, %v1688
      %1785 = vst.msk [vmem:[#allocation4 + $0x8] sm:$0xff] %vm1783, %v1690
      %1786 = vst.msk [vmem:[#allocation4 + $0x10] sm:$0xff] %vm1783, %v1692
      %1787 = vst.msk [vmem:[#allocation4 + $0x18] sm:$0xff] %vm1783, %v1694
      %1788 = vst.msk [vmem:[#allocation4 + $0x20] sm:$0xff] %vm1783, %v1696
      %1789 = vst.msk [vmem:[#allocation4 + $0x28] sm:$0xff] %vm1783, %v1698
      %1790 = vst.msk [vmem:[#allocation4 + $0x30] sm:$0xff] %vm1783, %v1700
      %1791 = vst.msk [vmem:[#allocation4 + $0x38] sm:$0xff] %vm1783, %v1702
      %1792 = vst.msk [vmem:[#allocation4 + $0x40] sm:$0xff] %vm1783, %v1704
      %1793 = vst.msk [vmem:[#allocation4 + $0x48] sm:$0xff] %vm1783, %v1706
      %1794 = vst.msk [vmem:[#allocation4 + $0x50] sm:$0xff] %vm1783, %v1708
      %1795 = vst.msk [vmem:[#allocation4 + $0x58] sm:$0xff] %vm1783, %v1710
      %1796 = vst.msk [vmem:[#allocation4 + $0x60] sm:$0xff] %vm1783, %v1712
      %1797 = vst.msk [vmem:[#allocation4 + $0x68] sm:$0xff] %vm1783, %v1714
      %1798 = vst.msk [vmem:[#allocation4 + $0x70] sm:$0xff] %vm1783, %v1716
      %1799 = vst.msk [vmem:[#allocation4 + $0x78] sm:$0xff] %vm1783, %v1718
      %1800 = vst.msk [vmem:[#allocation4 + $0x80] sm:$0xff] %vm1783, %v1720
      %1801 = vst.msk [vmem:[#allocation4 + $0x88] sm:$0xff] %vm1783, %v1722
      %1802 = vst.msk [vmem:[#allocation4 + $0x90] sm:$0xff] %vm1783, %v1724
      %1803 = vst.msk [vmem:[#allocation4 + $0x98] sm:$0xff] %vm1783, %v1726
      %1804 = vst.msk [vmem:[#allocation4 + $0xa0] sm:$0xff] %vm1783, %v1728
      %1805 = vst.msk [vmem:[#allocation4 + $0xa8] sm:$0xff] %vm1783, %v1730
      %1806 = vst.msk [vmem:[#allocation4 + $0xb0] sm:$0xff] %vm1783, %v1732
      %1807 = vst.msk [vmem:[#allocation4 + $0xb8] sm:$0xff] %vm1783, %v1734
      %1808 = vst.msk [vmem:[#allocation4 + $0xc0] sm:$0xff] %vm1783, %v1736
      %1809 = vst.msk [vmem:[#allocation4 + $0xc8] sm:$0xff] %vm1783, %v1738
      %1810 = vst.msk [vmem:[#allocation4 + $0xd0] sm:$0xff] %vm1783, %v1740
      %1811 = vst.msk [vmem:[#allocation4 + $0xd8] sm:$0xff] %vm1783, %v1742
      %1812 = vst.msk [vmem:[#allocation4 + $0xe0] sm:$0xff] %vm1783, %v1744
      %1813 = vst.msk [vmem:[#allocation4 + $0xe8] sm:$0xff] %vm1783, %v1746
      %1814 = vst.msk [vmem:[#allocation4 + $0xf0] sm:$0xff] %vm1783, %v1748
      %1815 = vst.msk [vmem:[#allocation4 + $0xf8] sm:$0xff] %vm1783, %v1750
      %v1816 = vld [vmem:[%s1429 + $0x2] sm:$0xff]
      %v1817 = vld [vmem:[%s1429 + $0xa] sm:$0xff]
      %v1818 = vld [vmem:[%s1429 + $0x1a] sm:$0xff]
      %v1819 = vld [vmem:[%s1429 + $0x22] sm:$0xff]
      %v1820 = vld [vmem:[%s1429 + $0x32] sm:$0xff]
      %v1821 = vld [vmem:[%s1429 + $0x3a] sm:$0xff]
      %v1822 = vld [vmem:[%s1429 + $0x4a] sm:$0xff]
      %v1823 = vld [vmem:[%s1429 + $0x52] sm:$0xff]
      %v1824 = vld [vmem:[%s1429 + $0x62] sm:$0xff]
      %v1825 = vld [vmem:[%s1429 + $0x6a] sm:$0xff]
      %v1826 = vld [vmem:[%s1429 + $0x7a] sm:$0xff]
      %v1827 = vld [vmem:[%s1429 + $0x82] sm:$0xff]
      %v1828 = vld [vmem:[%s1429 + $0x92] sm:$0xff]
      %v1829 = vld [vmem:[%s1429 + $0x9a] sm:$0xff]
      %v1830 = vld [vmem:[%s1429 + $0xaa] sm:$0xff]
      %v1831 = vld [vmem:[%s1429 + $0xb2] sm:$0xff]
      %v1832 = vld [vmem:[%s1429 + $0xc2] sm:$0xff]
      %v1833 = vld [vmem:[%s1429 + $0xca] sm:$0xff]
      %v1834 = vld [vmem:[%s1429 + $0xda] sm:$0xff]
      %v1835 = vld [vmem:[%s1429 + $0xe2] sm:$0xff]
      %v1836 = vld [vmem:[%s1429 + $0xf2] sm:$0xff]
      %v1837 = vld [vmem:[%s1429 + $0xfa] sm:$0xff]
      %v1838 = vld [vmem:[%s1429 + $0x10a] sm:$0xff]
      %v1839 = vld [vmem:[%s1429 + $0x112] sm:$0xff]
      %v1840 = vld [vmem:[%s1429 + $0x122] sm:$0xff]
      %v1841 = vld [vmem:[%s1429 + $0x12a] sm:$0xff]
      %v1842 = vld [vmem:[%s1429 + $0x13a] sm:$0xff]
      %v1843 = vld [vmem:[%s1429 + $0x142] sm:$0xff]
      %v1844 = vld [vmem:[%s1429 + $0x152] sm:$0xff]
      %v1845 = vld [vmem:[%s1429 + $0x15a] sm:$0xff]
      %v1846 = vld [vmem:[%s1429 + $0x16a] sm:$0xff]
      %v1847 = vld [vmem:[%s1429 + $0x172] sm:$0xff]
      %1880 = vrot.lane.b32.xlu0 %v1816, 32
      %v1881 = vpop.permute.xlu0 %1880
      %1882 = vrot.lane.b32.xlu0 %v1817, 32
      %v1883 = vpop.permute.xlu0 %1882
      %1884 = vrot.lane.b32.xlu0 %v1818, 32
      %v1885 = vpop.permute.xlu0 %1884
      %1886 = vrot.lane.b32.xlu0 %v1819, 32
      %v1887 = vpop.permute.xlu0 %1886
      %1888 = vrot.lane.b32.xlu0 %v1820, 32
      %v1889 = vpop.permute.xlu0 %1888
      %1890 = vrot.lane.b32.xlu0 %v1821, 32
      %v1891 = vpop.permute.xlu0 %1890
      %1892 = vrot.lane.b32.xlu0 %v1822, 32
      %v1893 = vpop.permute.xlu0 %1892
      %1894 = vrot.lane.b32.xlu0 %v1823, 32
      %v1895 = vpop.permute.xlu0 %1894
      %1896 = vrot.lane.b32.xlu0 %v1824, 32
      %v1897 = vpop.permute.xlu0 %1896
      %1898 = vrot.lane.b32.xlu0 %v1825, 32
      %v1899 = vpop.permute.xlu0 %1898
      %1900 = vrot.lane.b32.xlu0 %v1826, 32
      %v1901 = vpop.permute.xlu0 %1900
      %1902 = vrot.lane.b32.xlu0 %v1827, 32
      %v1903 = vpop.permute.xlu0 %1902
      %1904 = vrot.lane.b32.xlu0 %v1828, 32
      %v1905 = vpop.permute.xlu0 %1904
      %1906 = vrot.lane.b32.xlu0 %v1829, 32
      %v1907 = vpop.permute.xlu0 %1906
      %1908 = vrot.lane.b32.xlu0 %v1830, 32
      %v1909 = vpop.permute.xlu0 %1908
      %1910 = vrot.lane.b32.xlu0 %v1831, 32
      %v1911 = vpop.permute.xlu0 %1910
      %1912 = vrot.lane.b32.xlu0 %v1832, 32
      %v1913 = vpop.permute.xlu0 %1912
      %1914 = vrot.lane.b32.xlu0 %v1833, 32
      %v1915 = vpop.permute.xlu0 %1914
      %1916 = vrot.lane.b32.xlu0 %v1834, 32
      %v1917 = vpop.permute.xlu0 %1916
      %1918 = vrot.lane.b32.xlu0 %v1835, 32
      %v1919 = vpop.permute.xlu0 %1918
      %1920 = vrot.lane.b32.xlu0 %v1836, 32
      %v1921 = vpop.permute.xlu0 %1920
      %1922 = vrot.lane.b32.xlu0 %v1837, 32
      %v1923 = vpop.permute.xlu0 %1922
      %1924 = vrot.lane.b32.xlu0 %v1838, 32
      %v1925 = vpop.permute.xlu0 %1924
      %1926 = vrot.lane.b32.xlu0 %v1839, 32
      %v1927 = vpop.permute.xlu0 %1926
      %1928 = vrot.lane.b32.xlu0 %v1840, 32
      %v1929 = vpop.permute.xlu0 %1928
      %1930 = vrot.lane.b32.xlu0 %v1841, 32
      %v1931 = vpop.permute.xlu0 %1930
      %1932 = vrot.lane.b32.xlu0 %v1842, 32
      %v1933 = vpop.permute.xlu0 %1932
      %1934 = vrot.lane.b32.xlu0 %v1843, 32
      %v1935 = vpop.permute.xlu0 %1934
      %1936 = vrot.lane.b32.xlu0 %v1844, 32
      %v1937 = vpop.permute.xlu0 %1936
      %1938 = vrot.lane.b32.xlu0 %v1845, 32
      %v1939 = vpop.permute.xlu0 %1938
      %1940 = vrot.lane.b32.xlu0 %v1846, 32
      %v1941 = vpop.permute.xlu0 %1940
      %1942 = vrot.lane.b32.xlu0 %v1847, 32
      %v1943 = vpop.permute.xlu0 %1942
      %vm1976 = vcmask 294144
      %1977 = vst.msk [vmem:[#allocation4] sm:$0xff] %vm1976, %v1881
      %1978 = vst.msk [vmem:[#allocation4 + $0x8] sm:$0xff] %vm1976, %v1883
      %1979 = vst.msk [vmem:[#allocation4 + $0x10] sm:$0xff] %vm1976, %v1885
      %1980 = vst.msk [vmem:[#allocation4 + $0x18] sm:$0xff] %vm1976, %v1887
      %1981 = vst.msk [vmem:[#allocation4 + $0x20] sm:$0xff] %vm1976, %v1889
      %1982 = vst.msk [vmem:[#allocation4 + $0x28] sm:$0xff] %vm1976, %v1891
      %1983 = vst.msk [vmem:[#allocation4 + $0x30] sm:$0xff] %vm1976, %v1893
      %1984 = vst.msk [vmem:[#allocation4 + $0x38] sm:$0xff] %vm1976, %v1895
      %1985 = vst.msk [vmem:[#allocation4 + $0x40] sm:$0xff] %vm1976, %v1897
      %1986 = vst.msk [vmem:[#allocation4 + $0x48] sm:$0xff] %vm1976, %v1899
      %1987 = vst.msk [vmem:[#allocation4 + $0x50] sm:$0xff] %vm1976, %v1901
      %1988 = vst.msk [vmem:[#allocation4 + $0x58] sm:$0xff] %vm1976, %v1903
      %1989 = vst.msk [vmem:[#allocation4 + $0x60] sm:$0xff] %vm1976, %v1905
      %1990 = vst.msk [vmem:[#allocation4 + $0x68] sm:$0xff] %vm1976, %v1907
      %1991 = vst.msk [vmem:[#allocation4 + $0x70] sm:$0xff] %vm1976, %v1909
      %1992 = vst.msk [vmem:[#allocation4 + $0x78] sm:$0xff] %vm1976, %v1911
      %1993 = vst.msk [vmem:[#allocation4 + $0x80] sm:$0xff] %vm1976, %v1913
      %1994 = vst.msk [vmem:[#allocation4 + $0x88] sm:$0xff] %vm1976, %v1915
      %1995 = vst.msk [vmem:[#allocation4 + $0x90] sm:$0xff] %vm1976, %v1917
      %1996 = vst.msk [vmem:[#allocation4 + $0x98] sm:$0xff] %vm1976, %v1919
      %1997 = vst.msk [vmem:[#allocation4 + $0xa0] sm:$0xff] %vm1976, %v1921
      %1998 = vst.msk [vmem:[#allocation4 + $0xa8] sm:$0xff] %vm1976, %v1923
      %1999 = vst.msk [vmem:[#allocation4 + $0xb0] sm:$0xff] %vm1976, %v1925
      %2000 = vst.msk [vmem:[#allocation4 + $0xb8] sm:$0xff] %vm1976, %v1927
      %2001 = vst.msk [vmem:[#allocation4 + $0xc0] sm:$0xff] %vm1976, %v1929
      %2002 = vst.msk [vmem:[#allocation4 + $0xc8] sm:$0xff] %vm1976, %v1931
      %2003 = vst.msk [vmem:[#allocation4 + $0xd0] sm:$0xff] %vm1976, %v1933
      %2004 = vst.msk [vmem:[#allocation4 + $0xd8] sm:$0xff] %vm1976, %v1935
      %2005 = vst.msk [vmem:[#allocation4 + $0xe0] sm:$0xff] %vm1976, %v1937
      %2006 = vst.msk [vmem:[#allocation4 + $0xe8] sm:$0xff] %vm1976, %v1939
      %2007 = vst.msk [vmem:[#allocation4 + $0xf0] sm:$0xff] %vm1976, %v1941
      %2008 = vst.msk [vmem:[#allocation4 + $0xf8] sm:$0xff] %vm1976, %v1943
      %v2009 = vld [vmem:[#allocation4] sm:$0xff]
      %v2010 = vld [vmem:[#allocation4 + $0x8] sm:$0xff]
      %v2011 = vld [vmem:[#allocation4 + $0x10] sm:$0xff]
      %v2012 = vld [vmem:[#allocation4 + $0x18] sm:$0xff]
      %v2013 = vld [vmem:[#allocation4 + $0x20] sm:$0xff]
      %v2014 = vld [vmem:[#allocation4 + $0x28] sm:$0xff]
      %v2015 = vld [vmem:[#allocation4 + $0x30] sm:$0xff]
      %v2016 = vld [vmem:[#allocation4 + $0x38] sm:$0xff]
      %v2017 = vld [vmem:[#allocation4 + $0x40] sm:$0xff]
      %v2018 = vld [vmem:[#allocation4 + $0x48] sm:$0xff]
      %v2019 = vld [vmem:[#allocation4 + $0x50] sm:$0xff]
      %v2020 = vld [vmem:[#allocation4 + $0x58] sm:$0xff]
      %v2021 = vld [vmem:[#allocation4 + $0x60] sm:$0xff]
      %v2022 = vld [vmem:[#allocation4 + $0x68] sm:$0xff]
      %v2023 = vld [vmem:[#allocation4 + $0x70] sm:$0xff]
      %v2024 = vld [vmem:[#allocation4 + $0x78] sm:$0xff]
      %v2025 = vld [vmem:[#allocation4 + $0x80] sm:$0xff]
      %v2026 = vld [vmem:[#allocation4 + $0x88] sm:$0xff]
      %v2027 = vld [vmem:[#allocation4 + $0x90] sm:$0xff]
      %v2028 = vld [vmem:[#allocation4 + $0x98] sm:$0xff]
      %v2029 = vld [vmem:[#allocation4 + $0xa0] sm:$0xff]
      %v2030 = vld [vmem:[#allocation4 + $0xa8] sm:$0xff]
      %v2031 = vld [vmem:[#allocation4 + $0xb0] sm:$0xff]
      %v2032 = vld [vmem:[#allocation4 + $0xb8] sm:$0xff]
      %v2033 = vld [vmem:[#allocation4 + $0xc0] sm:$0xff]
      %v2034 = vld [vmem:[#allocation4 + $0xc8] sm:$0xff]
      %v2035 = vld [vmem:[#allocation4 + $0xd0] sm:$0xff]
      %v2036 = vld [vmem:[#allocation4 + $0xd8] sm:$0xff]
      %v2037 = vld [vmem:[#allocation4 + $0xe0] sm:$0xff]
      %v2038 = vld [vmem:[#allocation4 + $0xe8] sm:$0xff]
      %v2039 = vld [vmem:[#allocation4 + $0xf0] sm:$0xff]
      %v2040 = vld [vmem:[#allocation4 + $0xf8] sm:$0xff]
      %v2041 = vld [vmem:[%s1] sm:$0xff]
      %v2042 = vld [vmem:[%s1 + $0x8] sm:$0xff]
      %v2043 = vld [vmem:[%s1 + $0x10] sm:$0xff]
      %v2044 = vld [vmem:[%s1 + $0x18] sm:$0xff]
      %v2045 = vld [vmem:[%s1 + $0x20] sm:$0xf]
      %vm2046 = vcmask 293888
      %v2048 = vsel %vm2046, %v2009, 0
      %v2051 = vsel %vm2046, %v2010, 0
      %v2054 = vsel %vm2046, %v2011, 0
      %v2057 = vsel %vm2046, %v2012, 0
      %v2060 = vsel %vm2046, %v2013, 0
      %v2063 = vsel %vm2046, %v2014, 0
      %v2066 = vsel %vm2046, %v2015, 0
      %v2069 = vsel %vm2046, %v2016, 0
      %v2072 = vsel %vm2046, %v2017, 0
      %v2075 = vsel %vm2046, %v2018, 0
      %v2078 = vsel %vm2046, %v2019, 0
      %v2081 = vsel %vm2046, %v2020, 0
      %v2084 = vsel %vm2046, %v2021, 0
      %v2087 = vsel %vm2046, %v2022, 0
      %v2090 = vsel %vm2046, %v2023, 0
      %v2093 = vsel %vm2046, %v2024, 0
      %v2096 = vsel %vm2046, %v2025, 0
      %v2099 = vsel %vm2046, %v2026, 0
      %v2102 = vsel %vm2046, %v2027, 0
      %v2105 = vsel %vm2046, %v2028, 0
      %v2108 = vsel %vm2046, %v2029, 0
      %v2111 = vsel %vm2046, %v2030, 0
      %v2114 = vsel %vm2046, %v2031, 0
      %v2117 = vsel %vm2046, %v2032, 0
      %v2120 = vsel %vm2046, %v2033, 0
      %v2123 = vsel %vm2046, %v2034, 0
      %v2126 = vsel %vm2046, %v2035, 0
      %v2129 = vsel %vm2046, %v2036, 0
      %v2132 = vsel %vm2046, %v2037, 0
      %v2135 = vsel %vm2046, %v2038, 0
      %v2138 = vsel %vm2046, %v2039, 0
      %v2141 = vsel %vm2046, %v2040, 0
      %vm2143 = vcmask 1043456
      %v2145 = vsel %vm2143, %v2045, 0
      %2147 = vmatprep.subr.mxu0 0.0
      %2148 = vmatpush1.msra.mxu0 0.0
      %2149 = vmatprep.subr.mxu0 0.0
      %2150 = vmatpush1.msra.mxu0 0.0
      %2151 = vmatprep.subr.mxu0 0.0
      %2152 = vmatpush1.msra.mxu0 0.0
      %2153 = vmatprep.subr.mxu0 0.0
      %2154 = vmatpush1.msra.mxu0 0.0
      %2155 = vmatprep.subr.mxu0 0.0
      %2156 = vmatpush1.msra.mxu0 0.0
      %2157 = vmatprep.subr.mxu0 0.0
      %2158 = vmatpush1.msra.mxu0 0.0
      %2159 = vmatprep.subr.mxu0 0.0
      %2160 = vmatpush1.msra.mxu0 0.0
      %2161 = vmatprep.subr.mxu0 0.0
      %2162 = vmatpush1.msra.mxu0 0.0
      %2163 = vmatprep.subr.mxu0 0.0
      %2164 = vmatpush1.msra.mxu0 0.0
      %2165 = vmatprep.subr.mxu0 0.0
      %2166 = vmatpush1.msra.mxu0 0.0
      %2167 = vmatprep.subr.mxu0 0.0
      %2168 = vmatpush1.msra.mxu0 0.0
      %2169 = vmatprep.subr.mxu0 0.0
      %2170 = vmatpush1.msra.mxu0 %v2145
      %2171 = vmatprep.subr.mxu0 0.0
      %2172 = vmatpush1.msra.mxu0 %v2044
      %2173 = vmatprep.subr.mxu0 0.0
      %2174 = vmatpush1.msra.mxu0 %v2043
      %2175 = vmatprep.subr.mxu0 0.0
      %2176 = vmatpush1.msra.mxu0 %v2042
      %2177 = vmatprep.subr.mxu0 0.0
      %2178 = vmatpush1.msra.mxu0 %v2041
      %2179 = vmatprep.subr.mxu0 0.0
      %2180 = vmatpush2.msra.mxu0 0.0
      %2181 = vmatprep.subr.mxu0 0.0
      %2182 = vmatpush2.msra.mxu0 0.0
      %2183 = vmatprep.subr.mxu0 0.0
      %2184 = vmatpush2.msra.mxu0 0.0
      %2185 = vmatprep.subr.mxu0 0.0
      %2186 = vmatpush2.msra.mxu0 0.0
      %2187 = vmatprep.subr.mxu0 0.0
      %2188 = vmatpush2.msra.mxu0 0.0
      %2189 = vmatprep.subr.mxu0 0.0
      %2190 = vmatpush2.msra.mxu0 0.0
      %2191 = vmatprep.subr.mxu0 0.0
      %2192 = vmatpush2.msra.mxu0 0.0
      %2193 = vmatprep.subr.mxu0 0.0
      %2194 = vmatpush2.msra.mxu0 0.0
      %2195 = vmatprep.subr.mxu0 0.0
      %2196 = vmatpush2.msra.mxu0 0.0
      %2197 = vmatprep.subr.mxu0 0.0
      %2198 = vmatpush2.msra.mxu0 0.0
      %2199 = vmatprep.subr.mxu0 0.0
      %2200 = vmatpush2.msra.mxu0 0.0
      %2201 = vmatprep.subr.mxu0 0.0
      %2202 = vmatpush2.msra.mxu0 0.0
      %2203 = vmatprep.subr.mxu0 0.0
      %2204 = vmatpush2.msra.mxu0 0.0
      %2205 = vmatprep.subr.mxu0 0.0
      %2206 = vmatpush2.msra.mxu0 0.0
      %2207 = vmatprep.subr.mxu0 0.0
      %2208 = vmatpush2.msra.mxu0 0.0
      %2209 = vmatprep.subr.mxu0 0.0
      %2210 = vmatpush2.msra.mxu0 0.0
      %2211 = vmatprep.mubr.f32.mxu0 0.0
      %2212 = vmatmul.mubr.f32.gmra.mxu0 %v2048
      %v2213 = vpop.f32.mrf.mxu0
      %v2214 = vadd.f32 0.0, %v2213
      %v2215 = vpop.f32.mrf.mxu0
      %2216 = vmatprep.mubr.f32.mxu0 0.0
      %2217 = vmatmul.mubr.f32.gmra.mxu0 %v2051
      %v2218 = vpop.f32.mrf.mxu0
      %v2219 = vadd.f32 0.0, %v2218
      %v2220 = vpop.f32.mrf.mxu0
      %2221 = vmatprep.mubr.f32.mxu0 0.0
      %2222 = vmatmul.mubr.f32.gmra.mxu0 %v2054
      %v2223 = vpop.f32.mrf.mxu0
      %v2224 = vadd.f32 0.0, %v2223
      %v2225 = vpop.f32.mrf.mxu0
      %2226 = vmatprep.mubr.f32.mxu0 0.0
      %2227 = vmatmul.mubr.f32.gmra.mxu0 %v2057
      %v2228 = vpop.f32.mrf.mxu0
      %v2229 = vadd.f32 0.0, %v2228
      %v2230 = vpop.f32.mrf.mxu0
      %2231 = vmatprep.mubr.f32.mxu0 0.0
      %2232 = vmatmul.mubr.f32.gmra.mxu0 %v2060
      %v2233 = vpop.f32.mrf.mxu0
      %v2234 = vadd.f32 0.0, %v2233
      %v2235 = vpop.f32.mrf.mxu0
      %2236 = vmatprep.mubr.f32.mxu0 0.0
      %2237 = vmatmul.mubr.f32.gmra.mxu0 %v2063
      %v2238 = vpop.f32.mrf.mxu0
      %v2239 = vadd.f32 0.0, %v2238
      %v2240 = vpop.f32.mrf.mxu0
      %2241 = vmatprep.mubr.f32.mxu0 0.0
      %2242 = vmatmul.mubr.f32.gmra.mxu0 %v2066
      %v2243 = vpop.f32.mrf.mxu0
      %v2244 = vadd.f32 0.0, %v2243
      %v2245 = vpop.f32.mrf.mxu0
      %2246 = vmatprep.mubr.f32.mxu0 0.0
      %2247 = vmatmul.mubr.f32.gmra.mxu0 %v2069
      %v2248 = vpop.f32.mrf.mxu0
      %v2249 = vadd.f32 0.0, %v2248
      %v2250 = vpop.f32.mrf.mxu0
      %2251 = vmatprep.mubr.f32.mxu0 0.0
      %2252 = vmatmul.mubr.f32.gmra.mxu0 %v2072
      %v2253 = vpop.f32.mrf.mxu0
      %v2254 = vadd.f32 0.0, %v2253
      %v2255 = vpop.f32.mrf.mxu0
      %2256 = vmatprep.mubr.f32.mxu0 0.0
      %2257 = vmatmul.mubr.f32.gmra.mxu0 %v2075
      %v2258 = vpop.f32.mrf.mxu0
      %v2259 = vadd.f32 0.0, %v2258
      %v2260 = vpop.f32.mrf.mxu0
      %2261 = vmatprep.mubr.f32.mxu0 0.0
      %2262 = vmatmul.mubr.f32.gmra.mxu0 %v2078
      %v2263 = vpop.f32.mrf.mxu0
      %v2264 = vadd.f32 0.0, %v2263
      %v2265 = vpop.f32.mrf.mxu0
      %2266 = vmatprep.mubr.f32.mxu0 0.0
      %2267 = vmatmul.mubr.f32.gmra.mxu0 %v2081
      %v2268 = vpop.f32.mrf.mxu0
      %v2269 = vadd.f32 0.0, %v2268
      %v2270 = vpop.f32.mrf.mxu0
      %2271 = vmatprep.mubr.f32.mxu0 0.0
      %2272 = vmatmul.mubr.f32.gmra.mxu0 %v2084
      %v2273 = vpop.f32.mrf.mxu0
      %v2274 = vadd.f32 0.0, %v2273
      %v2275 = vpop.f32.mrf.mxu0
      %2276 = vmatprep.mubr.f32.mxu0 0.0
      %2277 = vmatmul.mubr.f32.gmra.mxu0 %v2087
      %v2278 = vpop.f32.mrf.mxu0
      %v2279 = vadd.f32 0.0, %v2278
      %v2280 = vpop.f32.mrf.mxu0
      %2281 = vmatprep.mubr.f32.mxu0 0.0
      %2282 = vmatmul.mubr.f32.gmra.mxu0 %v2090
      %v2283 = vpop.f32.mrf.mxu0
      %v2284 = vadd.f32 0.0, %v2283
      %v2285 = vpop.f32.mrf.mxu0
      %2286 = vmatprep.mubr.f32.mxu0 0.0
      %2287 = vmatmul.mubr.f32.gmra.mxu0 %v2093
      %v2288 = vpop.f32.mrf.mxu0
      %v2289 = vadd.f32 0.0, %v2288
      %v2290 = vpop.f32.mrf.mxu0
      %2291 = vmatprep.mubr.f32.mxu0 0.0
      %2292 = vmatmul.mubr.f32.gmra.mxu0 %v2096
      %v2293 = vpop.f32.mrf.mxu0
      %v2294 = vadd.f32 0.0, %v2293
      %v2295 = vpop.f32.mrf.mxu0
      %2296 = vmatprep.mubr.f32.mxu0 0.0
      %2297 = vmatmul.mubr.f32.gmra.mxu0 %v2099
      %v2298 = vpop.f32.mrf.mxu0
      %v2299 = vadd.f32 0.0, %v2298
      %v2300 = vpop.f32.mrf.mxu0
      %2301 = vmatprep.mubr.f32.mxu0 0.0
      %2302 = vmatmul.mubr.f32.gmra.mxu0 %v2102
      %v2303 = vpop.f32.mrf.mxu0
      %v2304 = vadd.f32 0.0, %v2303
      %v2305 = vpop.f32.mrf.mxu0
      %2306 = vmatprep.mubr.f32.mxu0 0.0
      %2307 = vmatmul.mubr.f32.gmra.mxu0 %v2105
      %v2308 = vpop.f32.mrf.mxu0
      %v2309 = vadd.f32 0.0, %v2308
      %v2310 = vpop.f32.mrf.mxu0
      %2311 = vmatprep.mubr.f32.mxu0 0.0
      %2312 = vmatmul.mubr.f32.gmra.mxu0 %v2108
      %v2313 = vpop.f32.mrf.mxu0
      %v2314 = vadd.f32 0.0, %v2313
      %v2315 = vpop.f32.mrf.mxu0
      %2316 = vmatprep.mubr.f32.mxu0 0.0
      %2317 = vmatmul.mubr.f32.gmra.mxu0 %v2111
      %v2318 = vpop.f32.mrf.mxu0
      %v2319 = vadd.f32 0.0, %v2318
      %v2320 = vpop.f32.mrf.mxu0
      %2321 = vmatprep.mubr.f32.mxu0 0.0
      %2322 = vmatmul.mubr.f32.gmra.mxu0 %v2114
      %v2323 = vpop.f32.mrf.mxu0
      %v2324 = vadd.f32 0.0, %v2323
      %v2325 = vpop.f32.mrf.mxu0
      %2326 = vmatprep.mubr.f32.mxu0 0.0
      %2327 = vmatmul.mubr.f32.gmra.mxu0 %v2117
      %v2328 = vpop.f32.mrf.mxu0
      %v2329 = vadd.f32 0.0, %v2328
      %v2330 = vpop.f32.mrf.mxu0
      %2331 = vmatprep.mubr.f32.mxu0 0.0
      %2332 = vmatmul.mubr.f32.gmra.mxu0 %v2120
      %v2333 = vpop.f32.mrf.mxu0
      %v2334 = vadd.f32 0.0, %v2333
      %v2335 = vpop.f32.mrf.mxu0
      %2336 = vmatprep.mubr.f32.mxu0 0.0
      %2337 = vmatmul.mubr.f32.gmra.mxu0 %v2123
      %v2338 = vpop.f32.mrf.mxu0
      %v2339 = vadd.f32 0.0, %v2338
      %v2340 = vpop.f32.mrf.mxu0
      %2341 = vmatprep.mubr.f32.mxu0 0.0
      %2342 = vmatmul.mubr.f32.gmra.mxu0 %v2126
      %v2343 = vpop.f32.mrf.mxu0
      %v2344 = vadd.f32 0.0, %v2343
      %v2345 = vpop.f32.mrf.mxu0
      %2346 = vmatprep.mubr.f32.mxu0 0.0
      %2347 = vmatmul.mubr.f32.gmra.mxu0 %v2129
      %v2348 = vpop.f32.mrf.mxu0
      %v2349 = vadd.f32 0.0, %v2348
      %v2350 = vpop.f32.mrf.mxu0
      %2351 = vmatprep.mubr.f32.mxu0 0.0
      %2352 = vmatmul.mubr.f32.gmra.mxu0 %v2132
      %v2353 = vpop.f32.mrf.mxu0
      %v2354 = vadd.f32 0.0, %v2353
      %v2355 = vpop.f32.mrf.mxu0
      %2356 = vmatprep.mubr.f32.mxu0 0.0
      %2357 = vmatmul.mubr.f32.gmra.mxu0 %v2135
      %v2358 = vpop.f32.mrf.mxu0
      %v2359 = vadd.f32 0.0, %v2358
      %v2360 = vpop.f32.mrf.mxu0
      %2361 = vmatprep.mubr.f32.mxu0 0.0
      %2362 = vmatmul.mubr.f32.gmra.mxu0 %v2138
      %v2363 = vpop.f32.mrf.mxu0
      %v2364 = vadd.f32 0.0, %v2363
      %v2365 = vpop.f32.mrf.mxu0
      %2366 = vmatprep.mubr.f32.mxu0 0.0
      %2367 = vmatmul.mubr.f32.gmra.mxu0 %v2141
      %v2368 = vpop.f32.mrf.mxu0
      %v2369 = vadd.f32 0.0, %v2368
      %v2370 = vpop.f32.mrf.mxu0
      %2371 = vdwg.mxu0
      %v2372 = vld [vmem:[%s2] sm:$0x1]
      %v2374 = vlaneseq
      %v2375 = vshrl.u32 %v2374, 7
      %v2376 = vsub.s32 0, %v2375
      %v2377 = vrot.slane %v2372, %v2376
      %v2379 = vmul.f32 %v2214, %v2377
      %v2380 = vmul.f32 %v2219, %v2377
      %v2381 = vmul.f32 %v2224, %v2377
      %v2382 = vmul.f32 %v2229, %v2377
      %v2383 = vmul.f32 %v2234, %v2377
      %v2384 = vmul.f32 %v2239, %v2377
      %v2385 = vmul.f32 %v2244, %v2377
      %v2386 = vmul.f32 %v2249, %v2377
      %v2387 = vmul.f32 %v2254, %v2377
      %v2388 = vmul.f32 %v2259, %v2377
      %v2389 = vmul.f32 %v2264, %v2377
      %v2390 = vmul.f32 %v2269, %v2377
      %v2391 = vmul.f32 %v2274, %v2377
      %v2392 = vmul.f32 %v2279, %v2377
      %v2393 = vmul.f32 %v2284, %v2377
      %v2394 = vmul.f32 %v2289, %v2377
      %v2395 = vmul.f32 %v2294, %v2377
      %v2396 = vmul.f32 %v2299, %v2377
      %v2397 = vmul.f32 %v2304, %v2377
      %v2398 = vmul.f32 %v2309, %v2377
      %v2399 = vmul.f32 %v2314, %v2377
      %v2400 = vmul.f32 %v2319, %v2377
      %v2401 = vmul.f32 %v2324, %v2377
      %v2402 = vmul.f32 %v2329, %v2377
      %v2403 = vmul.f32 %v2334, %v2377
      %v2404 = vmul.f32 %v2339, %v2377
      %v2405 = vmul.f32 %v2344, %v2377
      %v2406 = vmul.f32 %v2349, %v2377
      %v2407 = vmul.f32 %v2354, %v2377
      %v2408 = vmul.f32 %v2359, %v2377
      %v2409 = vmul.f32 %v2364, %v2377
      %v2410 = vmul.f32 %v2369, %v2377
      %v2411 = vld [vmem:[%s3] sm:$0x1]
      %v2413 = vlaneseq
      %v2414 = vshrl.u32 %v2413, 7
      %v2415 = vsub.s32 0, %v2414
      %v2416 = vrot.slane %v2411, %v2415
      %v2418 = vadd.f32 %v2379, %v2416
      %v2419 = vadd.f32 %v2380, %v2416
      %v2420 = vadd.f32 %v2381, %v2416
      %v2421 = vadd.f32 %v2382, %v2416
      %v2422 = vadd.f32 %v2383, %v2416
      %v2423 = vadd.f32 %v2384, %v2416
      %v2424 = vadd.f32 %v2385, %v2416
      %v2425 = vadd.f32 %v2386, %v2416
      %v2426 = vadd.f32 %v2387, %v2416
      %v2427 = vadd.f32 %v2388, %v2416
      %v2428 = vadd.f32 %v2389, %v2416
      %v2429 = vadd.f32 %v2390, %v2416
      %v2430 = vadd.f32 %v2391, %v2416
      %v2431 = vadd.f32 %v2392, %v2416
      %v2432 = vadd.f32 %v2393, %v2416
      %v2433 = vadd.f32 %v2394, %v2416
      %v2434 = vadd.f32 %v2395, %v2416
      %v2435 = vadd.f32 %v2396, %v2416
      %v2436 = vadd.f32 %v2397, %v2416
      %v2437 = vadd.f32 %v2398, %v2416
      %v2438 = vadd.f32 %v2399, %v2416
      %v2439 = vadd.f32 %v2400, %v2416
      %v2440 = vadd.f32 %v2401, %v2416
      %v2441 = vadd.f32 %v2402, %v2416
      %v2442 = vadd.f32 %v2403, %v2416
      %v2443 = vadd.f32 %v2404, %v2416
      %v2444 = vadd.f32 %v2405, %v2416
      %v2445 = vadd.f32 %v2406, %v2416
      %v2446 = vadd.f32 %v2407, %v2416
      %v2447 = vadd.f32 %v2408, %v2416
      %v2448 = vadd.f32 %v2409, %v2416
      %v2449 = vadd.f32 %v2410, %v2416
      %v2450 = vmax.f32 %v2418, 0.0
      %v2451 = vmax.f32 %v2419, 0.0
      %v2452 = vmax.f32 %v2420, 0.0
      %v2453 = vmax.f32 %v2421, 0.0
      %v2454 = vmax.f32 %v2422, 0.0
      %v2455 = vmax.f32 %v2423, 0.0
      %v2456 = vmax.f32 %v2424, 0.0
      %v2457 = vmax.f32 %v2425, 0.0
      %v2458 = vmax.f32 %v2426, 0.0
      %v2459 = vmax.f32 %v2427, 0.0
      %v2460 = vmax.f32 %v2428, 0.0
      %v2461 = vmax.f32 %v2429, 0.0
      %v2462 = vmax.f32 %v2430, 0.0
      %v2463 = vmax.f32 %v2431, 0.0
      %v2464 = vmax.f32 %v2432, 0.0
      %v2465 = vmax.f32 %v2433, 0.0
      %v2466 = vmax.f32 %v2434, 0.0
      %v2467 = vmax.f32 %v2435, 0.0
      %v2468 = vmax.f32 %v2436, 0.0
      %v2469 = vmax.f32 %v2437, 0.0
      %v2470 = vmax.f32 %v2438, 0.0
      %v2471 = vmax.f32 %v2439, 0.0
      %v2472 = vmax.f32 %v2440, 0.0
      %v2473 = vmax.f32 %v2441, 0.0
      %v2474 = vmax.f32 %v2442, 0.0
      %v2475 = vmax.f32 %v2443, 0.0
      %v2476 = vmax.f32 %v2444, 0.0
      %v2477 = vmax.f32 %v2445, 0.0
      %v2478 = vmax.f32 %v2446, 0.0
      %v2479 = vmax.f32 %v2447, 0.0
      %v2480 = vmax.f32 %v2448, 0.0
      %v2481 = vmax.f32 %v2449, 0.0
      %vm2482 = vcmask 64512
      %2483 = vst.msk [vmem:[#allocation3] sm:$0xff] %vm2482, 0.0
      %2484 = vst.msk [vmem:[#allocation3 + $0x8] sm:$0xff] %vm2482, 0.0
      %vm2485 = vcmask 58368
      %2486 = vst.msk [vmem:[#allocation3 + $0x10] sm:$0x3] %vm2485, 0.0
      %2487 = vst.msk [vmem:[#allocation3 + $0x18] sm:$0xff] %vm2482, 0.0
      %2488 = vst.msk [vmem:[#allocation3 + $0x20] sm:$0xff] %vm2482, 0.0
      %2489 = vst.msk [vmem:[#allocation3 + $0x28] sm:$0x3] %vm2485, 0.0
      %2490 = vst.msk [vmem:[#allocation3 + $0x30] sm:$0xff] %vm2482, 0.0
      %2491 = vst.msk [vmem:[#allocation3 + $0x38] sm:$0xff] %vm2482, 0.0
      %2492 = vst.msk [vmem:[#allocation3 + $0x40] sm:$0x3] %vm2485, 0.0
      %2493 = vst.msk [vmem:[#allocation3 + $0x48] sm:$0xff] %vm2482, 0.0
      %2494 = vst.msk [vmem:[#allocation3 + $0x50] sm:$0xff] %vm2482, 0.0
      %2495 = vst.msk [vmem:[#allocation3 + $0x58] sm:$0x3] %vm2485, 0.0
      %2496 = vst.msk [vmem:[#allocation3 + $0x60] sm:$0xff] %vm2482, 0.0
      %2497 = vst.msk [vmem:[#allocation3 + $0x68] sm:$0xff] %vm2482, 0.0
      %2498 = vst.msk [vmem:[#allocation3 + $0x70] sm:$0x3] %vm2485, 0.0
      %2499 = vst.msk [vmem:[#allocation3 + $0x78] sm:$0xff] %vm2482, 0.0
      %2500 = vst.msk [vmem:[#allocation3 + $0x80] sm:$0xff] %vm2482, 0.0
      %2501 = vst.msk [vmem:[#allocation3 + $0x88] sm:$0x3] %vm2485, 0.0
      %2502 = vst.msk [vmem:[#allocation3 + $0x90] sm:$0xff] %vm2482, 0.0
      %2503 = vst.msk [vmem:[#allocation3 + $0x98] sm:$0xff] %vm2482, 0.0
      %2504 = vst.msk [vmem:[#allocation3 + $0xa0] sm:$0x3] %vm2485, 0.0
      %2505 = vst.msk [vmem:[#allocation3 + $0xa8] sm:$0xff] %vm2482, 0.0
      %2506 = vst.msk [vmem:[#allocation3 + $0xb0] sm:$0xff] %vm2482, 0.0
      %2507 = vst.msk [vmem:[#allocation3 + $0xb8] sm:$0x3] %vm2485, 0.0
      %2508 = vst.msk [vmem:[#allocation3 + $0xc0] sm:$0xff] %vm2482, 0.0
      %2509 = vst.msk [vmem:[#allocation3 + $0xc8] sm:$0xff] %vm2482, 0.0
      %2510 = vst.msk [vmem:[#allocation3 + $0xd0] sm:$0x3] %vm2485, 0.0
      %2511 = vst.msk [vmem:[#allocation3 + $0xd8] sm:$0xff] %vm2482, 0.0
      %2512 = vst.msk [vmem:[#allocation3 + $0xe0] sm:$0xff] %vm2482, 0.0
      %2513 = vst.msk [vmem:[#allocation3 + $0xe8] sm:$0x3] %vm2485, 0.0
      %2514 = vst.msk [vmem:[#allocation3 + $0xf0] sm:$0xff] %vm2482, 0.0
      %2515 = vst.msk [vmem:[#allocation3 + $0xf8] sm:$0xff] %vm2482, 0.0
      %2516 = vst.msk [vmem:[#allocation3 + $0x100] sm:$0x3] %vm2485, 0.0
      %2517 = vst.msk [vmem:[#allocation3 + $0x108] sm:$0xff] %vm2482, 0.0
      %2518 = vst.msk [vmem:[#allocation3 + $0x110] sm:$0xff] %vm2482, 0.0
      %2519 = vst.msk [vmem:[#allocation3 + $0x118] sm:$0x3] %vm2485, 0.0
      %2520 = vst.msk [vmem:[#allocation3 + $0x120] sm:$0xff] %vm2482, 0.0
      %2521 = vst.msk [vmem:[#allocation3 + $0x128] sm:$0xff] %vm2482, 0.0
      %2522 = vst.msk [vmem:[#allocation3 + $0x130] sm:$0x3] %vm2485, 0.0
      %2523 = vst.msk [vmem:[#allocation3 + $0x138] sm:$0xff] %vm2482, 0.0
      %2524 = vst.msk [vmem:[#allocation3 + $0x140] sm:$0xff] %vm2482, 0.0
      %2525 = vst.msk [vmem:[#allocation3 + $0x148] sm:$0x3] %vm2485, 0.0
      %2526 = vst.msk [vmem:[#allocation3 + $0x150] sm:$0xff] %vm2482, 0.0
      %2527 = vst.msk [vmem:[#allocation3 + $0x158] sm:$0xff] %vm2482, 0.0
      %2528 = vst.msk [vmem:[#allocation3 + $0x160] sm:$0x3] %vm2485, 0.0
      %2529 = vst.msk [vmem:[#allocation3 + $0x168] sm:$0xff] %vm2482, 0.0
      %2530 = vst.msk [vmem:[#allocation3 + $0x170] sm:$0xff] %vm2482, 0.0
      %2531 = vst.msk [vmem:[#allocation3 + $0x178] sm:$0x3] %vm2485, 0.0
      %2532 = vst.msk [vmem:[#allocation3 + $0x180] sm:$0xff] %vm2482, 0.0
      %2533 = vst.msk [vmem:[#allocation3 + $0x188] sm:$0xff] %vm2482, 0.0
      %2534 = vst.msk [vmem:[#allocation3 + $0x190] sm:$0x3] %vm2485, 0.0
      %2535 = vst.msk [vmem:[#allocation3 + $0x198] sm:$0xff] %vm2482, 0.0
      %2536 = vst.msk [vmem:[#allocation3 + $0x1a0] sm:$0xff] %vm2482, 0.0
      %2537 = vst.msk [vmem:[#allocation3 + $0x1a8] sm:$0x3] %vm2485, 0.0
      %s2538 = scalar_lea.vmem [#allocation3], 24
      %2539 = vst.msk [vmem:[%s2538 + $0x1] sm:$0xff] %vm2482, %v2450
      %2540 = vst.msk [vmem:[%s2538 + $0x9] sm:$0xff] %vm2482, %v2451
      %2541 = vst.msk [vmem:[%s2538 + $0x19] sm:$0xff] %vm2482, %v2452
      %2542 = vst.msk [vmem:[%s2538 + $0x21] sm:$0xff] %vm2482, %v2453
      %2543 = vst.msk [vmem:[%s2538 + $0x31] sm:$0xff] %vm2482, %v2454
      %2544 = vst.msk [vmem:[%s2538 + $0x39] sm:$0xff] %vm2482, %v2455
      %2545 = vst.msk [vmem:[%s2538 + $0x49] sm:$0xff] %vm2482, %v2456
      %2546 = vst.msk [vmem:[%s2538 + $0x51] sm:$0xff] %vm2482, %v2457
      %2547 = vst.msk [vmem:[%s2538 + $0x61] sm:$0xff] %vm2482, %v2458
      %2548 = vst.msk [vmem:[%s2538 + $0x69] sm:$0xff] %vm2482, %v2459
      %2549 = vst.msk [vmem:[%s2538 + $0x79] sm:$0xff] %vm2482, %v2460
      %2550 = vst.msk [vmem:[%s2538 + $0x81] sm:$0xff] %vm2482, %v2461
      %2551 = vst.msk [vmem:[%s2538 + $0x91] sm:$0xff] %vm2482, %v2462
      %2552 = vst.msk [vmem:[%s2538 + $0x99] sm:$0xff] %vm2482, %v2463
      %2553 = vst.msk [vmem:[%s2538 + $0xa9] sm:$0xff] %vm2482, %v2464
      %2554 = vst.msk [vmem:[%s2538 + $0xb1] sm:$0xff] %vm2482, %v2465
      %2555 = vst.msk [vmem:[%s2538 + $0xc1] sm:$0xff] %vm2482, %v2466
      %2556 = vst.msk [vmem:[%s2538 + $0xc9] sm:$0xff] %vm2482, %v2467
      %2557 = vst.msk [vmem:[%s2538 + $0xd9] sm:$0xff] %vm2482, %v2468
      %2558 = vst.msk [vmem:[%s2538 + $0xe1] sm:$0xff] %vm2482, %v2469
      %2559 = vst.msk [vmem:[%s2538 + $0xf1] sm:$0xff] %vm2482, %v2470
      %2560 = vst.msk [vmem:[%s2538 + $0xf9] sm:$0xff] %vm2482, %v2471
      %2561 = vst.msk [vmem:[%s2538 + $0x109] sm:$0xff] %vm2482, %v2472
      %2562 = vst.msk [vmem:[%s2538 + $0x111] sm:$0xff] %vm2482, %v2473
      %2563 = vst.msk [vmem:[%s2538 + $0x121] sm:$0xff] %vm2482, %v2474
      %2564 = vst.msk [vmem:[%s2538 + $0x129] sm:$0xff] %vm2482, %v2475
      %2565 = vst.msk [vmem:[%s2538 + $0x139] sm:$0xff] %vm2482, %v2476
      %2566 = vst.msk [vmem:[%s2538 + $0x141] sm:$0xff] %vm2482, %v2477
      %2567 = vst.msk [vmem:[%s2538 + $0x151] sm:$0xff] %vm2482, %v2478
      %2568 = vst.msk [vmem:[%s2538 + $0x159] sm:$0xff] %vm2482, %v2479
      %2569 = vst.msk [vmem:[%s2538 + $0x169] sm:$0xff] %vm2482, %v2480
      %2570 = vst.msk [vmem:[%s2538 + $0x171] sm:$0xff] %vm2482, %v2481
      %v2571 = vld [vmem:[#allocation3] sm:$0xff]
      %v2572 = vld [vmem:[#allocation3 + $0x8] sm:$0xff]
      %v2573 = vld [vmem:[#allocation3 + $0x18] sm:$0xff]
      %v2574 = vld [vmem:[#allocation3 + $0x20] sm:$0xff]
      %v2575 = vld [vmem:[#allocation3 + $0x30] sm:$0xff]
      %v2576 = vld [vmem:[#allocation3 + $0x38] sm:$0xff]
      %v2577 = vld [vmem:[#allocation3 + $0x48] sm:$0xff]
      %v2578 = vld [vmem:[#allocation3 + $0x50] sm:$0xff]
      %v2579 = vld [vmem:[#allocation3 + $0x60] sm:$0xff]
      %v2580 = vld [vmem:[#allocation3 + $0x68] sm:$0xff]
      %v2581 = vld [vmem:[#allocation3 + $0x78] sm:$0xff]
      %v2582 = vld [vmem:[#allocation3 + $0x80] sm:$0xff]
      %v2583 = vld [vmem:[#allocation3 + $0x90] sm:$0xff]
      %v2584 = vld [vmem:[#allocation3 + $0x98] sm:$0xff]
      %v2585 = vld [vmem:[#allocation3 + $0xa8] sm:$0xff]
      %v2586 = vld [vmem:[#allocation3 + $0xb0] sm:$0xff]
      %v2587 = vld [vmem:[#allocation3 + $0xc0] sm:$0xff]
      %v2588 = vld [vmem:[#allocation3 + $0xc8] sm:$0xff]
      %v2589 = vld [vmem:[#allocation3 + $0xd8] sm:$0xff]
      %v2590 = vld [vmem:[#allocation3 + $0xe0] sm:$0xff]
      %v2591 = vld [vmem:[#allocation3 + $0xf0] sm:$0xff]
      %v2592 = vld [vmem:[#allocation3 + $0xf8] sm:$0xff]
      %v2593 = vld [vmem:[#allocation3 + $0x108] sm:$0xff]
      %v2594 = vld [vmem:[#allocation3 + $0x110] sm:$0xff]
      %v2595 = vld [vmem:[#allocation3 + $0x120] sm:$0xff]
      %v2596 = vld [vmem:[#allocation3 + $0x128] sm:$0xff]
      %v2597 = vld [vmem:[#allocation3 + $0x138] sm:$0xff]
      %v2598 = vld [vmem:[#allocation3 + $0x140] sm:$0xff]
      %v2599 = vld [vmem:[#allocation3 + $0x150] sm:$0xff]
      %v2600 = vld [vmem:[#allocation3 + $0x158] sm:$0xff]
      %v2601 = vld [vmem:[#allocation3 + $0x168] sm:$0xff]
      %v2602 = vld [vmem:[#allocation3 + $0x170] sm:$0xff]
      %2603 = vst.msk [vmem:[#allocation5] sm:$0xff] %vm2482, %v2571
      %2604 = vst.msk [vmem:[#allocation5 + $0x8] sm:$0xff] %vm2482, %v2572
      %2605 = vst.msk [vmem:[#allocation5 + $0x10] sm:$0xff] %vm2482, %v2573
      %2606 = vst.msk [vmem:[#allocation5 + $0x18] sm:$0xff] %vm2482, %v2574
      %2607 = vst.msk [vmem:[#allocation5 + $0x20] sm:$0xff] %vm2482, %v2575
      %2608 = vst.msk [vmem:[#allocation5 + $0x28] sm:$0xff] %vm2482, %v2576
      %2609 = vst.msk [vmem:[#allocation5 + $0x30] sm:$0xff] %vm2482, %v2577
      %2610 = vst.msk [vmem:[#allocation5 + $0x38] sm:$0xff] %vm2482, %v2578
      %2611 = vst.msk [vmem:[#allocation5 + $0x40] sm:$0xff] %vm2482, %v2579
      %2612 = vst.msk [vmem:[#allocation5 + $0x48] sm:$0xff] %vm2482, %v2580
      %2613 = vst.msk [vmem:[#allocation5 + $0x50] sm:$0xff] %vm2482, %v2581
      %2614 = vst.msk [vmem:[#allocation5 + $0x58] sm:$0xff] %vm2482, %v2582
      %2615 = vst.msk [vmem:[#allocation5 + $0x60] sm:$0xff] %vm2482, %v2583
      %2616 = vst.msk [vmem:[#allocation5 + $0x68] sm:$0xff] %vm2482, %v2584
      %2617 = vst.msk [vmem:[#allocation5 + $0x70] sm:$0xff] %vm2482, %v2585
      %2618 = vst.msk [vmem:[#allocation5 + $0x78] sm:$0xff] %vm2482, %v2586
      %2619 = vst.msk [vmem:[#allocation5 + $0x80] sm:$0xff] %vm2482, %v2587
      %2620 = vst.msk [vmem:[#allocation5 + $0x88] sm:$0xff] %vm2482, %v2588
      %2621 = vst.msk [vmem:[#allocation5 + $0x90] sm:$0xff] %vm2482, %v2589
      %2622 = vst.msk [vmem:[#allocation5 + $0x98] sm:$0xff] %vm2482, %v2590
      %2623 = vst.msk [vmem:[#allocation5 + $0xa0] sm:$0xff] %vm2482, %v2591
      %2624 = vst.msk [vmem:[#allocation5 + $0xa8] sm:$0xff] %vm2482, %v2592
      %2625 = vst.msk [vmem:[#allocation5 + $0xb0] sm:$0xff] %vm2482, %v2593
      %2626 = vst.msk [vmem:[#allocation5 + $0xb8] sm:$0xff] %vm2482, %v2594
      %2627 = vst.msk [vmem:[#allocation5 + $0xc0] sm:$0xff] %vm2482, %v2595
      %2628 = vst.msk [vmem:[#allocation5 + $0xc8] sm:$0xff] %vm2482, %v2596
      %2629 = vst.msk [vmem:[#allocation5 + $0xd0] sm:$0xff] %vm2482, %v2597
      %2630 = vst.msk [vmem:[#allocation5 + $0xd8] sm:$0xff] %vm2482, %v2598
      %2631 = vst.msk [vmem:[#allocation5 + $0xe0] sm:$0xff] %vm2482, %v2599
      %2632 = vst.msk [vmem:[#allocation5 + $0xe8] sm:$0xff] %vm2482, %v2600
      %2633 = vst.msk [vmem:[#allocation5 + $0xf0] sm:$0xff] %vm2482, %v2601
      %2634 = vst.msk [vmem:[#allocation5 + $0xf8] sm:$0xff] %vm2482, %v2602
      %v2635 = vld [vmem:[#allocation3 + $0x1] sm:$0xff]
      %v2636 = vld [vmem:[#allocation3 + $0x9] sm:$0xff]
      %v2637 = vld [vmem:[#allocation3 + $0x19] sm:$0xff]
      %v2638 = vld [vmem:[#allocation3 + $0x21] sm:$0xff]
      %v2639 = vld [vmem:[#allocation3 + $0x31] sm:$0xff]
      %v2640 = vld [vmem:[#allocation3 + $0x39] sm:$0xff]
      %v2641 = vld [vmem:[#allocation3 + $0x49] sm:$0xff]
      %v2642 = vld [vmem:[#allocation3 + $0x51] sm:$0xff]
      %v2643 = vld [vmem:[#allocation3 + $0x61] sm:$0xff]
      %v2644 = vld [vmem:[#allocation3 + $0x69] sm:$0xff]
      %v2645 = vld [vmem:[#allocation3 + $0x79] sm:$0xff]
      %v2646 = vld [vmem:[#allocation3 + $0x81] sm:$0xff]
      %v2647 = vld [vmem:[#allocation3 + $0x91] sm:$0xff]
      %v2648 = vld [vmem:[#allocation3 + $0x99] sm:$0xff]
      %v2649 = vld [vmem:[#allocation3 + $0xa9] sm:$0xff]
      %v2650 = vld [vmem:[#allocation3 + $0xb1] sm:$0xff]
      %v2651 = vld [vmem:[#allocation3 + $0xc1] sm:$0xff]
      %v2652 = vld [vmem:[#allocation3 + $0xc9] sm:$0xff]
      %v2653 = vld [vmem:[#allocation3 + $0xd9] sm:$0xff]
      %v2654 = vld [vmem:[#allocation3 + $0xe1] sm:$0xff]
      %v2655 = vld [vmem:[#allocation3 + $0xf1] sm:$0xff]
      %v2656 = vld [vmem:[#allocation3 + $0xf9] sm:$0xff]
      %v2657 = vld [vmem:[#allocation3 + $0x109] sm:$0xff]
      %v2658 = vld [vmem:[#allocation3 + $0x111] sm:$0xff]
      %v2659 = vld [vmem:[#allocation3 + $0x121] sm:$0xff]
      %v2660 = vld [vmem:[#allocation3 + $0x129] sm:$0xff]
      %v2661 = vld [vmem:[#allocation3 + $0x139] sm:$0xff]
      %v2662 = vld [vmem:[#allocation3 + $0x141] sm:$0xff]
      %v2663 = vld [vmem:[#allocation3 + $0x151] sm:$0xff]
      %v2664 = vld [vmem:[#allocation3 + $0x159] sm:$0xff]
      %v2665 = vld [vmem:[#allocation3 + $0x169] sm:$0xff]
      %v2666 = vld [vmem:[#allocation3 + $0x171] sm:$0xff]
      %2699 = vrot.lane.b32.xlu0 %v2635, 8
      %v2700 = vpop.permute.xlu0 %2699
      %2701 = vrot.lane.b32.xlu0 %v2636, 8
      %v2702 = vpop.permute.xlu0 %2701
      %2703 = vrot.lane.b32.xlu0 %v2637, 8
      %v2704 = vpop.permute.xlu0 %2703
      %2705 = vrot.lane.b32.xlu0 %v2638, 8
      %v2706 = vpop.permute.xlu0 %2705
      %2707 = vrot.lane.b32.xlu0 %v2639, 8
      %v2708 = vpop.permute.xlu0 %2707
      %2709 = vrot.lane.b32.xlu0 %v2640, 8
      %v2710 = vpop.permute.xlu0 %2709
      %2711 = vrot.lane.b32.xlu0 %v2641, 8
      %v2712 = vpop.permute.xlu0 %2711
      %2713 = vrot.lane.b32.xlu0 %v2642, 8
      %v2714 = vpop.permute.xlu0 %2713
      %2715 = vrot.lane.b32.xlu0 %v2643, 8
      %v2716 = vpop.permute.xlu0 %2715
      %2717 = vrot.lane.b32.xlu0 %v2644, 8
      %v2718 = vpop.permute.xlu0 %2717
      %2719 = vrot.lane.b32.xlu0 %v2645, 8
      %v2720 = vpop.permute.xlu0 %2719
      %2721 = vrot.lane.b32.xlu0 %v2646, 8
      %v2722 = vpop.permute.xlu0 %2721
      %2723 = vrot.lane.b32.xlu0 %v2647, 8
      %v2724 = vpop.permute.xlu0 %2723
      %2725 = vrot.lane.b32.xlu0 %v2648, 8
      %v2726 = vpop.permute.xlu0 %2725
      %2727 = vrot.lane.b32.xlu0 %v2649, 8
      %v2728 = vpop.permute.xlu0 %2727
      %2729 = vrot.lane.b32.xlu0 %v2650, 8
      %v2730 = vpop.permute.xlu0 %2729
      %2731 = vrot.lane.b32.xlu0 %v2651, 8
      %v2732 = vpop.permute.xlu0 %2731
      %2733 = vrot.lane.b32.xlu0 %v2652, 8
      %v2734 = vpop.permute.xlu0 %2733
      %2735 = vrot.lane.b32.xlu0 %v2653, 8
      %v2736 = vpop.permute.xlu0 %2735
      %2737 = vrot.lane.b32.xlu0 %v2654, 8
      %v2738 = vpop.permute.xlu0 %2737
      %2739 = vrot.lane.b32.xlu0 %v2655, 8
      %v2740 = vpop.permute.xlu0 %2739
      %2741 = vrot.lane.b32.xlu0 %v2656, 8
      %v2742 = vpop.permute.xlu0 %2741
      %2743 = vrot.lane.b32.xlu0 %v2657, 8
      %v2744 = vpop.permute.xlu0 %2743
      %2745 = vrot.lane.b32.xlu0 %v2658, 8
      %v2746 = vpop.permute.xlu0 %2745
      %2747 = vrot.lane.b32.xlu0 %v2659, 8
      %v2748 = vpop.permute.xlu0 %2747
      %2749 = vrot.lane.b32.xlu0 %v2660, 8
      %v2750 = vpop.permute.xlu0 %2749
      %2751 = vrot.lane.b32.xlu0 %v2661, 8
      %v2752 = vpop.permute.xlu0 %2751
      %2753 = vrot.lane.b32.xlu0 %v2662, 8
      %v2754 = vpop.permute.xlu0 %2753
      %2755 = vrot.lane.b32.xlu0 %v2663, 8
      %v2756 = vpop.permute.xlu0 %2755
      %2757 = vrot.lane.b32.xlu0 %v2664, 8
      %v2758 = vpop.permute.xlu0 %2757
      %2759 = vrot.lane.b32.xlu0 %v2665, 8
      %v2760 = vpop.permute.xlu0 %2759
      %2761 = vrot.lane.b32.xlu0 %v2666, 8
      %v2762 = vpop.permute.xlu0 %2761
      %vm2795 = vcmask 130112
      %2796 = vst.msk [vmem:[#allocation5] sm:$0xff] %vm2795, %v2700
      %2797 = vst.msk [vmem:[#allocation5 + $0x8] sm:$0xff] %vm2795, %v2702
      %2798 = vst.msk [vmem:[#allocation5 + $0x10] sm:$0xff] %vm2795, %v2704
      %2799 = vst.msk [vmem:[#allocation5 + $0x18] sm:$0xff] %vm2795, %v2706
      %2800 = vst.msk [vmem:[#allocation5 + $0x20] sm:$0xff] %vm2795, %v2708
      %2801 = vst.msk [vmem:[#allocation5 + $0x28] sm:$0xff] %vm2795, %v2710
      %2802 = vst.msk [vmem:[#allocation5 + $0x30] sm:$0xff] %vm2795, %v2712
      %2803 = vst.msk [vmem:[#allocation5 + $0x38] sm:$0xff] %vm2795, %v2714
      %2804 = vst.msk [vmem:[#allocation5 + $0x40] sm:$0xff] %vm2795, %v2716
      %2805 = vst.msk [vmem:[#allocation5 + $0x48] sm:$0xff] %vm2795, %v2718
      %2806 = vst.msk [vmem:[#allocation5 + $0x50] sm:$0xff] %vm2795, %v2720
      %2807 = vst.msk [vmem:[#allocation5 + $0x58] sm:$0xff] %vm2795, %v2722
      %2808 = vst.msk [vmem:[#allocation5 + $0x60] sm:$0xff] %vm2795, %v2724
      %2809 = vst.msk [vmem:[#allocation5 + $0x68] sm:$0xff] %vm2795, %v2726
      %2810 = vst.msk [vmem:[#allocation5 + $0x70] sm:$0xff] %vm2795, %v2728
      %2811 = vst.msk [vmem:[#allocation5 + $0x78] sm:$0xff] %vm2795, %v2730
      %2812 = vst.msk [vmem:[#allocation5 + $0x80] sm:$0xff] %vm2795, %v2732
      %2813 = vst.msk [vmem:[#allocation5 + $0x88] sm:$0xff] %vm2795, %v2734
      %2814 = vst.msk [vmem:[#allocation5 + $0x90] sm:$0xff] %vm2795, %v2736
      %2815 = vst.msk [vmem:[#allocation5 + $0x98] sm:$0xff] %vm2795, %v2738
      %2816 = vst.msk [vmem:[#allocation5 + $0xa0] sm:$0xff] %vm2795, %v2740
      %2817 = vst.msk [vmem:[#allocation5 + $0xa8] sm:$0xff] %vm2795, %v2742
      %2818 = vst.msk [vmem:[#allocation5 + $0xb0] sm:$0xff] %vm2795, %v2744
      %2819 = vst.msk [vmem:[#allocation5 + $0xb8] sm:$0xff] %vm2795, %v2746
      %2820 = vst.msk [vmem:[#allocation5 + $0xc0] sm:$0xff] %vm2795, %v2748
      %2821 = vst.msk [vmem:[#allocation5 + $0xc8] sm:$0xff] %vm2795, %v2750
      %2822 = vst.msk [vmem:[#allocation5 + $0xd0] sm:$0xff] %vm2795, %v2752
      %2823 = vst.msk [vmem:[#allocation5 + $0xd8] sm:$0xff] %vm2795, %v2754
      %2824 = vst.msk [vmem:[#allocation5 + $0xe0] sm:$0xff] %vm2795, %v2756
      %2825 = vst.msk [vmem:[#allocation5 + $0xe8] sm:$0xff] %vm2795, %v2758
      %2826 = vst.msk [vmem:[#allocation5 + $0xf0] sm:$0xff] %vm2795, %v2760
      %2827 = vst.msk [vmem:[#allocation5 + $0xf8] sm:$0xff] %vm2795, %v2762
      %v2828 = vld [vmem:[#allocation3 + $0x2] sm:$0xff]
      %v2829 = vld [vmem:[#allocation3 + $0xa] sm:$0xff]
      %v2830 = vld [vmem:[#allocation3 + $0x1a] sm:$0xff]
      %v2831 = vld [vmem:[#allocation3 + $0x22] sm:$0xff]
      %v2832 = vld [vmem:[#allocation3 + $0x32] sm:$0xff]
      %v2833 = vld [vmem:[#allocation3 + $0x3a] sm:$0xff]
      %v2834 = vld [vmem:[#allocation3 + $0x4a] sm:$0xff]
      %v2835 = vld [vmem:[#allocation3 + $0x52] sm:$0xff]
      %v2836 = vld [vmem:[#allocation3 + $0x62] sm:$0xff]
      %v2837 = vld [vmem:[#allocation3 + $0x6a] sm:$0xff]
      %v2838 = vld [vmem:[#allocation3 + $0x7a] sm:$0xff]
      %v2839 = vld [vmem:[#allocation3 + $0x82] sm:$0xff]
      %v2840 = vld [vmem:[#allocation3 + $0x92] sm:$0xff]
      %v2841 = vld [vmem:[#allocation3 + $0x9a] sm:$0xff]
      %v2842 = vld [vmem:[#allocation3 + $0xaa] sm:$0xff]
      %v2843 = vld [vmem:[#allocation3 + $0xb2] sm:$0xff]
      %v2844 = vld [vmem:[#allocation3 + $0xc2] sm:$0xff]
      %v2845 = vld [vmem:[#allocation3 + $0xca] sm:$0xff]
      %v2846 = vld [vmem:[#allocation3 + $0xda] sm:$0xff]
      %v2847 = vld [vmem:[#allocation3 + $0xe2] sm:$0xff]
      %v2848 = vld [vmem:[#allocation3 + $0xf2] sm:$0xff]
      %v2849 = vld [vmem:[#allocation3 + $0xfa] sm:$0xff]
      %v2850 = vld [vmem:[#allocation3 + $0x10a] sm:$0xff]
      %v2851 = vld [vmem:[#allocation3 + $0x112] sm:$0xff]
      %v2852 = vld [vmem:[#allocation3 + $0x122] sm:$0xff]
      %v2853 = vld [vmem:[#allocation3 + $0x12a] sm:$0xff]
      %v2854 = vld [vmem:[#allocation3 + $0x13a] sm:$0xff]
      %v2855 = vld [vmem:[#allocation3 + $0x142] sm:$0xff]
      %v2856 = vld [vmem:[#allocation3 + $0x152] sm:$0xff]
      %v2857 = vld [vmem:[#allocation3 + $0x15a] sm:$0xff]
      %v2858 = vld [vmem:[#allocation3 + $0x16a] sm:$0xff]
      %v2859 = vld [vmem:[#allocation3 + $0x172] sm:$0xff]
      %2892 = vrot.lane.b32.xlu0 %v2828, 16
      %v2893 = vpop.permute.xlu0 %2892
      %2894 = vrot.lane.b32.xlu0 %v2829, 16
      %v2895 = vpop.permute.xlu0 %2894
      %2896 = vrot.lane.b32.xlu0 %v2830, 16
      %v2897 = vpop.permute.xlu0 %2896
      %2898 = vrot.lane.b32.xlu0 %v2831, 16
      %v2899 = vpop.permute.xlu0 %2898
      %2900 = vrot.lane.b32.xlu0 %v2832, 16
      %v2901 = vpop.permute.xlu0 %2900
      %2902 = vrot.lane.b32.xlu0 %v2833, 16
      %v2903 = vpop.permute.xlu0 %2902
      %2904 = vrot.lane.b32.xlu0 %v2834, 16
      %v2905 = vpop.permute.xlu0 %2904
      %2906 = vrot.lane.b32.xlu0 %v2835, 16
      %v2907 = vpop.permute.xlu0 %2906
      %2908 = vrot.lane.b32.xlu0 %v2836, 16
      %v2909 = vpop.permute.xlu0 %2908
      %2910 = vrot.lane.b32.xlu0 %v2837, 16
      %v2911 = vpop.permute.xlu0 %2910
      %2912 = vrot.lane.b32.xlu0 %v2838, 16
      %v2913 = vpop.permute.xlu0 %2912
      %2914 = vrot.lane.b32.xlu0 %v2839, 16
      %v2915 = vpop.permute.xlu0 %2914
      %2916 = vrot.lane.b32.xlu0 %v2840, 16
      %v2917 = vpop.permute.xlu0 %2916
      %2918 = vrot.lane.b32.xlu0 %v2841, 16
      %v2919 = vpop.permute.xlu0 %2918
      %2920 = vrot.lane.b32.xlu0 %v2842, 16
      %v2921 = vpop.permute.xlu0 %2920
      %2922 = vrot.lane.b32.xlu0 %v2843, 16
      %v2923 = vpop.permute.xlu0 %2922
      %2924 = vrot.lane.b32.xlu0 %v2844, 16
      %v2925 = vpop.permute.xlu0 %2924
      %2926 = vrot.lane.b32.xlu0 %v2845, 16
      %v2927 = vpop.permute.xlu0 %2926
      %2928 = vrot.lane.b32.xlu0 %v2846, 16
      %v2929 = vpop.permute.xlu0 %2928
      %2930 = vrot.lane.b32.xlu0 %v2847, 16
      %v2931 = vpop.permute.xlu0 %2930
      %2932 = vrot.lane.b32.xlu0 %v2848, 16
      %v2933 = vpop.permute.xlu0 %2932
      %2934 = vrot.lane.b32.xlu0 %v2849, 16
      %v2935 = vpop.permute.xlu0 %2934
      %2936 = vrot.lane.b32.xlu0 %v2850, 16
      %v2937 = vpop.permute.xlu0 %2936
      %2938 = vrot.lane.b32.xlu0 %v2851, 16
      %v2939 = vpop.permute.xlu0 %2938
      %2940 = vrot.lane.b32.xlu0 %v2852, 16
      %v2941 = vpop.permute.xlu0 %2940
      %2942 = vrot.lane.b32.xlu0 %v2853, 16
      %v2943 = vpop.permute.xlu0 %2942
      %2944 = vrot.lane.b32.xlu0 %v2854, 16
      %v2945 = vpop.permute.xlu0 %2944
      %2946 = vrot.lane.b32.xlu0 %v2855, 16
      %v2947 = vpop.permute.xlu0 %2946
      %2948 = vrot.lane.b32.xlu0 %v2856, 16
      %v2949 = vpop.permute.xlu0 %2948
      %2950 = vrot.lane.b32.xlu0 %v2857, 16
      %v2951 = vpop.permute.xlu0 %2950
      %2952 = vrot.lane.b32.xlu0 %v2858, 16
      %v2953 = vpop.permute.xlu0 %2952
      %2954 = vrot.lane.b32.xlu0 %v2859, 16
      %v2955 = vpop.permute.xlu0 %2954
      %vm2988 = vcmask 195712
      %2989 = vst.msk [vmem:[#allocation5] sm:$0xff] %vm2988, %v2893
      %2990 = vst.msk [vmem:[#allocation5 + $0x8] sm:$0xff] %vm2988, %v2895
      %2991 = vst.msk [vmem:[#allocation5 + $0x10] sm:$0xff] %vm2988, %v2897
      %2992 = vst.msk [vmem:[#allocation5 + $0x18] sm:$0xff] %vm2988, %v2899
      %2993 = vst.msk [vmem:[#allocation5 + $0x20] sm:$0xff] %vm2988, %v2901
      %2994 = vst.msk [vmem:[#allocation5 + $0x28] sm:$0xff] %vm2988, %v2903
      %2995 = vst.msk [vmem:[#allocation5 + $0x30] sm:$0xff] %vm2988, %v2905
      %2996 = vst.msk [vmem:[#allocation5 + $0x38] sm:$0xff] %vm2988, %v2907
      %2997 = vst.msk [vmem:[#allocation5 + $0x40] sm:$0xff] %vm2988, %v2909
      %2998 = vst.msk [vmem:[#allocation5 + $0x48] sm:$0xff] %vm2988, %v2911
      %2999 = vst.msk [vmem:[#allocation5 + $0x50] sm:$0xff] %vm2988, %v2913
      %3000 = vst.msk [vmem:[#allocation5 + $0x58] sm:$0xff] %vm2988, %v2915
      %3001 = vst.msk [vmem:[#allocation5 + $0x60] sm:$0xff] %vm2988, %v2917
      %3002 = vst.msk [vmem:[#allocation5 + $0x68] sm:$0xff] %vm2988, %v2919
      %3003 = vst.msk [vmem:[#allocation5 + $0x70] sm:$0xff] %vm2988, %v2921
      %3004 = vst.msk [vmem:[#allocation5 + $0x78] sm:$0xff] %vm2988, %v2923
      %3005 = vst.msk [vmem:[#allocation5 + $0x80] sm:$0xff] %vm2988, %v2925
      %3006 = vst.msk [vmem:[#allocation5 + $0x88] sm:$0xff] %vm2988, %v2927
      %3007 = vst.msk [vmem:[#allocation5 + $0x90] sm:$0xff] %vm2988, %v2929
      %3008 = vst.msk [vmem:[#allocation5 + $0x98] sm:$0xff] %vm2988, %v2931
      %3009 = vst.msk [vmem:[#allocation5 + $0xa0] sm:$0xff] %vm2988, %v2933
      %3010 = vst.msk [vmem:[#allocation5 + $0xa8] sm:$0xff] %vm2988, %v2935
      %3011 = vst.msk [vmem:[#allocation5 + $0xb0] sm:$0xff] %vm2988, %v2937
      %3012 = vst.msk [vmem:[#allocation5 + $0xb8] sm:$0xff] %vm2988, %v2939
      %3013 = vst.msk [vmem:[#allocation5 + $0xc0] sm:$0xff] %vm2988, %v2941
      %3014 = vst.msk [vmem:[#allocation5 + $0xc8] sm:$0xff] %vm2988, %v2943
      %3015 = vst.msk [vmem:[#allocation5 + $0xd0] sm:$0xff] %vm2988, %v2945
      %3016 = vst.msk [vmem:[#allocation5 + $0xd8] sm:$0xff] %vm2988, %v2947
      %3017 = vst.msk [vmem:[#allocation5 + $0xe0] sm:$0xff] %vm2988, %v2949
      %3018 = vst.msk [vmem:[#allocation5 + $0xe8] sm:$0xff] %vm2988, %v2951
      %3019 = vst.msk [vmem:[#allocation5 + $0xf0] sm:$0xff] %vm2988, %v2953
      %3020 = vst.msk [vmem:[#allocation5 + $0xf8] sm:$0xff] %vm2988, %v2955
      %v3021 = vld [vmem:[%s2538] sm:$0xff]
      %v3022 = vld [vmem:[%s2538 + $0x8] sm:$0xff]
      %v3023 = vld [vmem:[%s2538 + $0x18] sm:$0xff]
      %v3024 = vld [vmem:[%s2538 + $0x20] sm:$0xff]
      %v3025 = vld [vmem:[%s2538 + $0x30] sm:$0xff]
      %v3026 = vld [vmem:[%s2538 + $0x38] sm:$0xff]
      %v3027 = vld [vmem:[%s2538 + $0x48] sm:$0xff]
      %v3028 = vld [vmem:[%s2538 + $0x50] sm:$0xff]
      %v3029 = vld [vmem:[%s2538 + $0x60] sm:$0xff]
      %v3030 = vld [vmem:[%s2538 + $0x68] sm:$0xff]
      %v3031 = vld [vmem:[%s2538 + $0x78] sm:$0xff]
      %v3032 = vld [vmem:[%s2538 + $0x80] sm:$0xff]
      %v3033 = vld [vmem:[%s2538 + $0x90] sm:$0xff]
      %v3034 = vld [vmem:[%s2538 + $0x98] sm:$0xff]
      %v3035 = vld [vmem:[%s2538 + $0xa8] sm:$0xff]
      %v3036 = vld [vmem:[%s2538 + $0xb0] sm:$0xff]
      %v3037 = vld [vmem:[%s2538 + $0xc0] sm:$0xff]
      %v3038 = vld [vmem:[%s2538 + $0xc8] sm:$0xff]
      %v3039 = vld [vmem:[%s2538 + $0xd8] sm:$0xff]
      %v3040 = vld [vmem:[%s2538 + $0xe0] sm:$0xff]
      %v3041 = vld [vmem:[%s2538 + $0xf0] sm:$0xff]
      %v3042 = vld [vmem:[%s2538 + $0xf8] sm:$0xff]
      %v3043 = vld [vmem:[%s2538 + $0x108] sm:$0xff]
      %v3044 = vld [vmem:[%s2538 + $0x110] sm:$0xff]
      %v3045 = vld [vmem:[%s2538 + $0x120] sm:$0xff]
      %v3046 = vld [vmem:[%s2538 + $0x128] sm:$0xff]
      %v3047 = vld [vmem:[%s2538 + $0x138] sm:$0xff]
      %v3048 = vld [vmem:[%s2538 + $0x140] sm:$0xff]
      %v3049 = vld [vmem:[%s2538 + $0x150] sm:$0xff]
      %v3050 = vld [vmem:[%s2538 + $0x158] sm:$0xff]
      %v3051 = vld [vmem:[%s2538 + $0x168] sm:$0xff]
      %v3052 = vld [vmem:[%s2538 + $0x170] sm:$0xff]
      %3085 = vrot.lane.b32.xlu0 %v3021, 24
      %v3086 = vpop.permute.xlu0 %3085
      %3087 = vrot.lane.b32.xlu0 %v3022, 24
      %v3088 = vpop.permute.xlu0 %3087
      %3089 = vrot.lane.b32.xlu0 %v3023, 24
      %v3090 = vpop.permute.xlu0 %3089
      %3091 = vrot.lane.b32.xlu0 %v3024, 24
      %v3092 = vpop.permute.xlu0 %3091
      %3093 = vrot.lane.b32.xlu0 %v3025, 24
      %v3094 = vpop.permute.xlu0 %3093
      %3095 = vrot.lane.b32.xlu0 %v3026, 24
      %v3096 = vpop.permute.xlu0 %3095
      %3097 = vrot.lane.b32.xlu0 %v3027, 24
      %v3098 = vpop.permute.xlu0 %3097
      %3099 = vrot.lane.b32.xlu0 %v3028, 24
      %v3100 = vpop.permute.xlu0 %3099
      %3101 = vrot.lane.b32.xlu0 %v3029, 24
      %v3102 = vpop.permute.xlu0 %3101
      %3103 = vrot.lane.b32.xlu0 %v3030, 24
      %v3104 = vpop.permute.xlu0 %3103
      %3105 = vrot.lane.b32.xlu0 %v3031, 24
      %v3106 = vpop.permute.xlu0 %3105
      %3107 = vrot.lane.b32.xlu0 %v3032, 24
      %v3108 = vpop.permute.xlu0 %3107
      %3109 = vrot.lane.b32.xlu0 %v3033, 24
      %v3110 = vpop.permute.xlu0 %3109
      %3111 = vrot.lane.b32.xlu0 %v3034, 24
      %v3112 = vpop.permute.xlu0 %3111
      %3113 = vrot.lane.b32.xlu0 %v3035, 24
      %v3114 = vpop.permute.xlu0 %3113
      %3115 = vrot.lane.b32.xlu0 %v3036, 24
      %v3116 = vpop.permute.xlu0 %3115
      %3117 = vrot.lane.b32.xlu0 %v3037, 24
      %v3118 = vpop.permute.xlu0 %3117
      %3119 = vrot.lane.b32.xlu0 %v3038, 24
      %v3120 = vpop.permute.xlu0 %3119
      %3121 = vrot.lane.b32.xlu0 %v3039, 24
      %v3122 = vpop.permute.xlu0 %3121
      %3123 = vrot.lane.b32.xlu0 %v3040, 24
      %v3124 = vpop.permute.xlu0 %3123
      %3125 = vrot.lane.b32.xlu0 %v3041, 24
      %v3126 = vpop.permute.xlu0 %3125
      %3127 = vrot.lane.b32.xlu0 %v3042, 24
      %v3128 = vpop.permute.xlu0 %3127
      %3129 = vrot.lane.b32.xlu0 %v3043, 24
      %v3130 = vpop.permute.xlu0 %3129
      %3131 = vrot.lane.b32.xlu0 %v3044, 24
      %v3132 = vpop.permute.xlu0 %3131
      %3133 = vrot.lane.b32.xlu0 %v3045, 24
      %v3134 = vpop.permute.xlu0 %3133
      %3135 = vrot.lane.b32.xlu0 %v3046, 24
      %v3136 = vpop.permute.xlu0 %3135
      %3137 = vrot.lane.b32.xlu0 %v3047, 24
      %v3138 = vpop.permute.xlu0 %3137
      %3139 = vrot.lane.b32.xlu0 %v3048, 24
      %v3140 = vpop.permute.xlu0 %3139
      %3141 = vrot.lane.b32.xlu0 %v3049, 24
      %v3142 = vpop.permute.xlu0 %3141
      %3143 = vrot.lane.b32.xlu0 %v3050, 24
      %v3144 = vpop.permute.xlu0 %3143
      %3145 = vrot.lane.b32.xlu0 %v3051, 24
      %v3146 = vpop.permute.xlu0 %3145
      %3147 = vrot.lane.b32.xlu0 %v3052, 24
      %v3148 = vpop.permute.xlu0 %3147
      %vm3181 = vcmask 261312
      %3182 = vst.msk [vmem:[#allocation5] sm:$0xff] %vm3181, %v3086
      %3183 = vst.msk [vmem:[#allocation5 + $0x8] sm:$0xff] %vm3181, %v3088
      %3184 = vst.msk [vmem:[#allocation5 + $0x10] sm:$0xff] %vm3181, %v3090
      %3185 = vst.msk [vmem:[#allocation5 + $0x18] sm:$0xff] %vm3181, %v3092
      %3186 = vst.msk [vmem:[#allocation5 + $0x20] sm:$0xff] %vm3181, %v3094
      %3187 = vst.msk [vmem:[#allocation5 + $0x28] sm:$0xff] %vm3181, %v3096
      %3188 = vst.msk [vmem:[#allocation5 + $0x30] sm:$0xff] %vm3181, %v3098
      %3189 = vst.msk [vmem:[#allocation5 + $0x38] sm:$0xff] %vm3181, %v3100
      %3190 = vst.msk [vmem:[#allocation5 + $0x40] sm:$0xff] %vm3181, %v3102
      %3191 = vst.msk [vmem:[#allocation5 + $0x48] sm:$0xff] %vm3181, %v3104
      %3192 = vst.msk [vmem:[#allocation5 + $0x50] sm:$0xff] %vm3181, %v3106
      %3193 = vst.msk [vmem:[#allocation5 + $0x58] sm:$0xff] %vm3181, %v3108
      %3194 = vst.msk [vmem:[#allocation5 + $0x60] sm:$0xff] %vm3181, %v3110
      %3195 = vst.msk [vmem:[#allocation5 + $0x68] sm:$0xff] %vm3181, %v3112
      %3196 = vst.msk [vmem:[#allocation5 + $0x70] sm:$0xff] %vm3181, %v3114
      %3197 = vst.msk [vmem:[#allocation5 + $0x78] sm:$0xff] %vm3181, %v3116
      %3198 = vst.msk [vmem:[#allocation5 + $0x80] sm:$0xff] %vm3181, %v3118
      %3199 = vst.msk [vmem:[#allocation5 + $0x88] sm:$0xff] %vm3181, %v3120
      %3200 = vst.msk [vmem:[#allocation5 + $0x90] sm:$0xff] %vm3181, %v3122
      %3201 = vst.msk [vmem:[#allocation5 + $0x98] sm:$0xff] %vm3181, %v3124
      %3202 = vst.msk [vmem:[#allocation5 + $0xa0] sm:$0xff] %vm3181, %v3126
      %3203 = vst.msk [vmem:[#allocation5 + $0xa8] sm:$0xff] %vm3181, %v3128
      %3204 = vst.msk [vmem:[#allocation5 + $0xb0] sm:$0xff] %vm3181, %v3130
      %3205 = vst.msk [vmem:[#allocation5 + $0xb8] sm:$0xff] %vm3181, %v3132
      %3206 = vst.msk [vmem:[#allocation5 + $0xc0] sm:$0xff] %vm3181, %v3134
      %3207 = vst.msk [vmem:[#allocation5 + $0xc8] sm:$0xff] %vm3181, %v3136
      %3208 = vst.msk [vmem:[#allocation5 + $0xd0] sm:$0xff] %vm3181, %v3138
      %3209 = vst.msk [vmem:[#allocation5 + $0xd8] sm:$0xff] %vm3181, %v3140
      %3210 = vst.msk [vmem:[#allocation5 + $0xe0] sm:$0xff] %vm3181, %v3142
      %3211 = vst.msk [vmem:[#allocation5 + $0xe8] sm:$0xff] %vm3181, %v3144
      %3212 = vst.msk [vmem:[#allocation5 + $0xf0] sm:$0xff] %vm3181, %v3146
      %3213 = vst.msk [vmem:[#allocation5 + $0xf8] sm:$0xff] %vm3181, %v3148
      %v3214 = vld [vmem:[%s2538 + $0x1] sm:$0xff]
      %v3215 = vld [vmem:[%s2538 + $0x9] sm:$0xff]
      %v3216 = vld [vmem:[%s2538 + $0x19] sm:$0xff]
      %v3217 = vld [vmem:[%s2538 + $0x21] sm:$0xff]
      %v3218 = vld [vmem:[%s2538 + $0x31] sm:$0xff]
      %v3219 = vld [vmem:[%s2538 + $0x39] sm:$0xff]
      %v3220 = vld [vmem:[%s2538 + $0x49] sm:$0xff]
      %v3221 = vld [vmem:[%s2538 + $0x51] sm:$0xff]
      %v3222 = vld [vmem:[%s2538 + $0x61] sm:$0xff]
      %v3223 = vld [vmem:[%s2538 + $0x69] sm:$0xff]
      %v3224 = vld [vmem:[%s2538 + $0x79] sm:$0xff]
      %v3225 = vld [vmem:[%s2538 + $0x81] sm:$0xff]
      %v3226 = vld [vmem:[%s2538 + $0x91] sm:$0xff]
      %v3227 = vld [vmem:[%s2538 + $0x99] sm:$0xff]
      %v3228 = vld [vmem:[%s2538 + $0xa9] sm:$0xff]
      %v3229 = vld [vmem:[%s2538 + $0xb1] sm:$0xff]
      %v3230 = vld [vmem:[%s2538 + $0xc1] sm:$0xff]
      %v3231 = vld [vmem:[%s2538 + $0xc9] sm:$0xff]
      %v3232 = vld [vmem:[%s2538 + $0xd9] sm:$0xff]
      %v3233 = vld [vmem:[%s2538 + $0xe1] sm:$0xff]
      %v3234 = vld [vmem:[%s2538 + $0xf1] sm:$0xff]
      %v3235 = vld [vmem:[%s2538 + $0xf9] sm:$0xff]
      %v3236 = vld [vmem:[%s2538 + $0x109] sm:$0xff]
      %v3237 = vld [vmem:[%s2538 + $0x111] sm:$0xff]
      %v3238 = vld [vmem:[%s2538 + $0x121] sm:$0xff]
      %v3239 = vld [vmem:[%s2538 + $0x129] sm:$0xff]
      %v3240 = vld [vmem:[%s2538 + $0x139] sm:$0xff]
      %v3241 = vld [vmem:[%s2538 + $0x141] sm:$0xff]
      %v3242 = vld [vmem:[%s2538 + $0x151] sm:$0xff]
      %v3243 = vld [vmem:[%s2538 + $0x159] sm:$0xff]
      %v3244 = vld [vmem:[%s2538 + $0x169] sm:$0xff]
      %v3245 = vld [vmem:[%s2538 + $0x171] sm:$0xff]
      %3278 = vrot.lane.b32.xlu0 %v3214, 32
      %v3279 = vpop.permute.xlu0 %3278
      %3280 = vrot.lane.b32.xlu0 %v3215, 32
      %v3281 = vpop.permute.xlu0 %3280
      %3282 = vrot.lane.b32.xlu0 %v3216, 32
      %v3283 = vpop.permute.xlu0 %3282
      %3284 = vrot.lane.b32.xlu0 %v3217, 32
      %v3285 = vpop.permute.xlu0 %3284
      %3286 = vrot.lane.b32.xlu0 %v3218, 32
      %v3287 = vpop.permute.xlu0 %3286
      %3288 = vrot.lane.b32.xlu0 %v3219, 32
      %v3289 = vpop.permute.xlu0 %3288
      %3290 = vrot.lane.b32.xlu0 %v3220, 32
      %v3291 = vpop.permute.xlu0 %3290
      %3292 = vrot.lane.b32.xlu0 %v3221, 32
      %v3293 = vpop.permute.xlu0 %3292
      %3294 = vrot.lane.b32.xlu0 %v3222, 32
      %v3295 = vpop.permute.xlu0 %3294
      %3296 = vrot.lane.b32.xlu0 %v3223, 32
      %v3297 = vpop.permute.xlu0 %3296
      %3298 = vrot.lane.b32.xlu0 %v3224, 32
      %v3299 = vpop.permute.xlu0 %3298
      %3300 = vrot.lane.b32.xlu0 %v3225, 32
      %v3301 = vpop.permute.xlu0 %3300
      %3302 = vrot.lane.b32.xlu0 %v3226, 32
      %v3303 = vpop.permute.xlu0 %3302
      %3304 = vrot.lane.b32.xlu0 %v3227, 32
      %v3305 = vpop.permute.xlu0 %3304
      %3306 = vrot.lane.b32.xlu0 %v3228, 32
      %v3307 = vpop.permute.xlu0 %3306
      %3308 = vrot.lane.b32.xlu0 %v3229, 32
      %v3309 = vpop.permute.xlu0 %3308
      %3310 = vrot.lane.b32.xlu0 %v3230, 32
      %v3311 = vpop.permute.xlu0 %3310
      %3312 = vrot.lane.b32.xlu0 %v3231, 32
      %v3313 = vpop.permute.xlu0 %3312
      %3314 = vrot.lane.b32.xlu0 %v3232, 32
      %v3315 = vpop.permute.xlu0 %3314
      %3316 = vrot.lane.b32.xlu0 %v3233, 32
      %v3317 = vpop.permute.xlu0 %3316
      %3318 = vrot.lane.b32.xlu0 %v3234, 32
      %v3319 = vpop.permute.xlu0 %3318
      %3320 = vrot.lane.b32.xlu0 %v3235, 32
      %v3321 = vpop.permute.xlu0 %3320
      %3322 = vrot.lane.b32.xlu0 %v3236, 32
      %v3323 = vpop.permute.xlu0 %3322
      %3324 = vrot.lane.b32.xlu0 %v3237, 32
      %v3325 = vpop.permute.xlu0 %3324
      %3326 = vrot.lane.b32.xlu0 %v3238, 32
      %v3327 = vpop.permute.xlu0 %3326
      %3328 = vrot.lane.b32.xlu0 %v3239, 32
      %v3329 = vpop.permute.xlu0 %3328
      %3330 = vrot.lane.b32.xlu0 %v3240, 32
      %v3331 = vpop.permute.xlu0 %3330
      %3332 = vrot.lane.b32.xlu0 %v3241, 32
      %v3333 = vpop.permute.xlu0 %3332
      %3334 = vrot.lane.b32.xlu0 %v3242, 32
      %v3335 = vpop.permute.xlu0 %3334
      %3336 = vrot.lane.b32.xlu0 %v3243, 32
      %v3337 = vpop.permute.xlu0 %3336
      %3338 = vrot.lane.b32.xlu0 %v3244, 32
      %v3339 = vpop.permute.xlu0 %3338
      %3340 = vrot.lane.b32.xlu0 %v3245, 32
      %v3341 = vpop.permute.xlu0 %3340
      %vm3374 = vcmask 326912
      %3375 = vst.msk [vmem:[#allocation5] sm:$0xff] %vm3374, %v3279
      %3376 = vst.msk [vmem:[#allocation5 + $0x8] sm:$0xff] %vm3374, %v3281
      %3377 = vst.msk [vmem:[#allocation5 + $0x10] sm:$0xff] %vm3374, %v3283
      %3378 = vst.msk [vmem:[#allocation5 + $0x18] sm:$0xff] %vm3374, %v3285
      %3379 = vst.msk [vmem:[#allocation5 + $0x20] sm:$0xff] %vm3374, %v3287
      %3380 = vst.msk [vmem:[#allocation5 + $0x28] sm:$0xff] %vm3374, %v3289
      %3381 = vst.msk [vmem:[#allocation5 + $0x30] sm:$0xff] %vm3374, %v3291
      %3382 = vst.msk [vmem:[#allocation5 + $0x38] sm:$0xff] %vm3374, %v3293
      %3383 = vst.msk [vmem:[#allocation5 + $0x40] sm:$0xff] %vm3374, %v3295
      %3384 = vst.msk [vmem:[#allocation5 + $0x48] sm:$0xff] %vm3374, %v3297
      %3385 = vst.msk [vmem:[#allocation5 + $0x50] sm:$0xff] %vm3374, %v3299
      %3386 = vst.msk [vmem:[#allocation5 + $0x58] sm:$0xff] %vm3374, %v3301
      %3387 = vst.msk [vmem:[#allocation5 + $0x60] sm:$0xff] %vm3374, %v3303
      %3388 = vst.msk [vmem:[#allocation5 + $0x68] sm:$0xff] %vm3374, %v3305
      %3389 = vst.msk [vmem:[#allocation5 + $0x70] sm:$0xff] %vm3374, %v3307
      %3390 = vst.msk [vmem:[#allocation5 + $0x78] sm:$0xff] %vm3374, %v3309
      %3391 = vst.msk [vmem:[#allocation5 + $0x80] sm:$0xff] %vm3374, %v3311
      %3392 = vst.msk [vmem:[#allocation5 + $0x88] sm:$0xff] %vm3374, %v3313
      %3393 = vst.msk [vmem:[#allocation5 + $0x90] sm:$0xff] %vm3374, %v3315
      %3394 = vst.msk [vmem:[#allocation5 + $0x98] sm:$0xff] %vm3374, %v3317
      %3395 = vst.msk [vmem:[#allocation5 + $0xa0] sm:$0xff] %vm3374, %v3319
      %3396 = vst.msk [vmem:[#allocation5 + $0xa8] sm:$0xff] %vm3374, %v3321
      %3397 = vst.msk [vmem:[#allocation5 + $0xb0] sm:$0xff] %vm3374, %v3323
      %3398 = vst.msk [vmem:[#allocation5 + $0xb8] sm:$0xff] %vm3374, %v3325
      %3399 = vst.msk [vmem:[#allocation5 + $0xc0] sm:$0xff] %vm3374, %v3327
      %3400 = vst.msk [vmem:[#allocation5 + $0xc8] sm:$0xff] %vm3374, %v3329
      %3401 = vst.msk [vmem:[#allocation5 + $0xd0] sm:$0xff] %vm3374, %v3331
      %3402 = vst.msk [vmem:[#allocation5 + $0xd8] sm:$0xff] %vm3374, %v3333
      %3403 = vst.msk [vmem:[#allocation5 + $0xe0] sm:$0xff] %vm3374, %v3335
      %3404 = vst.msk [vmem:[#allocation5 + $0xe8] sm:$0xff] %vm3374, %v3337
      %3405 = vst.msk [vmem:[#allocation5 + $0xf0] sm:$0xff] %vm3374, %v3339
      %3406 = vst.msk [vmem:[#allocation5 + $0xf8] sm:$0xff] %vm3374, %v3341
      %v3407 = vld [vmem:[%s2538 + $0x2] sm:$0xff]
      %v3408 = vld [vmem:[%s2538 + $0xa] sm:$0xff]
      %v3409 = vld [vmem:[%s2538 + $0x1a] sm:$0xff]
      %v3410 = vld [vmem:[%s2538 + $0x22] sm:$0xff]
      %v3411 = vld [vmem:[%s2538 + $0x32] sm:$0xff]
      %v3412 = vld [vmem:[%s2538 + $0x3a] sm:$0xff]
      %v3413 = vld [vmem:[%s2538 + $0x4a] sm:$0xff]
      %v3414 = vld [vmem:[%s2538 + $0x52] sm:$0xff]
      %v3415 = vld [vmem:[%s2538 + $0x62] sm:$0xff]
      %v3416 = vld [vmem:[%s2538 + $0x6a] sm:$0xff]
      %v3417 = vld [vmem:[%s2538 + $0x7a] sm:$0xff]
      %v3418 = vld [vmem:[%s2538 + $0x82] sm:$0xff]
      %v3419 = vld [vmem:[%s2538 + $0x92] sm:$0xff]
      %v3420 = vld [vmem:[%s2538 + $0x9a] sm:$0xff]
      %v3421 = vld [vmem:[%s2538 + $0xaa] sm:$0xff]
      %v3422 = vld [vmem:[%s2538 + $0xb2] sm:$0xff]
      %v3423 = vld [vmem:[%s2538 + $0xc2] sm:$0xff]
      %v3424 = vld [vmem:[%s2538 + $0xca] sm:$0xff]
      %v3425 = vld [vmem:[%s2538 + $0xda] sm:$0xff]
      %v3426 = vld [vmem:[%s2538 + $0xe2] sm:$0xff]
      %v3427 = vld [vmem:[%s2538 + $0xf2] sm:$0xff]
      %v3428 = vld [vmem:[%s2538 + $0xfa] sm:$0xff]
      %v3429 = vld [vmem:[%s2538 + $0x10a] sm:$0xff]
      %v3430 = vld [vmem:[%s2538 + $0x112] sm:$0xff]
      %v3431 = vld [vmem:[%s2538 + $0x122] sm:$0xff]
      %v3432 = vld [vmem:[%s2538 + $0x12a] sm:$0xff]
      %v3433 = vld [vmem:[%s2538 + $0x13a] sm:$0xff]
      %v3434 = vld [vmem:[%s2538 + $0x142] sm:$0xff]
      %v3435 = vld [vmem:[%s2538 + $0x152] sm:$0xff]
      %v3436 = vld [vmem:[%s2538 + $0x15a] sm:$0xff]
      %v3437 = vld [vmem:[%s2538 + $0x16a] sm:$0xff]
      %v3438 = vld [vmem:[%s2538 + $0x172] sm:$0xff]
      %3471 = vrot.lane.b32.xlu0 %v3407, 40
      %v3472 = vpop.permute.xlu0 %3471
      %3473 = vrot.lane.b32.xlu0 %v3408, 40
      %v3474 = vpop.permute.xlu0 %3473
      %3475 = vrot.lane.b32.xlu0 %v3409, 40
      %v3476 = vpop.permute.xlu0 %3475
      %3477 = vrot.lane.b32.xlu0 %v3410, 40
      %v3478 = vpop.permute.xlu0 %3477
      %3479 = vrot.lane.b32.xlu0 %v3411, 40
      %v3480 = vpop.permute.xlu0 %3479
      %3481 = vrot.lane.b32.xlu0 %v3412, 40
      %v3482 = vpop.permute.xlu0 %3481
      %3483 = vrot.lane.b32.xlu0 %v3413, 40
      %v3484 = vpop.permute.xlu0 %3483
      %3485 = vrot.lane.b32.xlu0 %v3414, 40
      %v3486 = vpop.permute.xlu0 %3485
      %3487 = vrot.lane.b32.xlu0 %v3415, 40
      %v3488 = vpop.permute.xlu0 %3487
      %3489 = vrot.lane.b32.xlu0 %v3416, 40
      %v3490 = vpop.permute.xlu0 %3489
      %3491 = vrot.lane.b32.xlu0 %v3417, 40
      %v3492 = vpop.permute.xlu0 %3491
      %3493 = vrot.lane.b32.xlu0 %v3418, 40
      %v3494 = vpop.permute.xlu0 %3493
      %3495 = vrot.lane.b32.xlu0 %v3419, 40
      %v3496 = vpop.permute.xlu0 %3495
      %3497 = vrot.lane.b32.xlu0 %v3420, 40
      %v3498 = vpop.permute.xlu0 %3497
      %3499 = vrot.lane.b32.xlu0 %v3421, 40
      %v3500 = vpop.permute.xlu0 %3499
      %3501 = vrot.lane.b32.xlu0 %v3422, 40
      %v3502 = vpop.permute.xlu0 %3501
      %3503 = vrot.lane.b32.xlu0 %v3423, 40
      %v3504 = vpop.permute.xlu0 %3503
      %3505 = vrot.lane.b32.xlu0 %v3424, 40
      %v3506 = vpop.permute.xlu0 %3505
      %3507 = vrot.lane.b32.xlu0 %v3425, 40
      %v3508 = vpop.permute.xlu0 %3507
      %3509 = vrot.lane.b32.xlu0 %v3426, 40
      %v3510 = vpop.permute.xlu0 %3509
      %3511 = vrot.lane.b32.xlu0 %v3427, 40
      %v3512 = vpop.permute.xlu0 %3511
      %3513 = vrot.lane.b32.xlu0 %v3428, 40
      %v3514 = vpop.permute.xlu0 %3513
      %3515 = vrot.lane.b32.xlu0 %v3429, 40
      %v3516 = vpop.permute.xlu0 %3515
      %3517 = vrot.lane.b32.xlu0 %v3430, 40
      %v3518 = vpop.permute.xlu0 %3517
      %3519 = vrot.lane.b32.xlu0 %v3431, 40
      %v3520 = vpop.permute.xlu0 %3519
      %3521 = vrot.lane.b32.xlu0 %v3432, 40
      %v3522 = vpop.permute.xlu0 %3521
      %3523 = vrot.lane.b32.xlu0 %v3433, 40
      %v3524 = vpop.permute.xlu0 %3523
      %3525 = vrot.lane.b32.xlu0 %v3434, 40
      %v3526 = vpop.permute.xlu0 %3525
      %3527 = vrot.lane.b32.xlu0 %v3435, 40
      %v3528 = vpop.permute.xlu0 %3527
      %3529 = vrot.lane.b32.xlu0 %v3436, 40
      %v3530 = vpop.permute.xlu0 %3529
      %3531 = vrot.lane.b32.xlu0 %v3437, 40
      %v3532 = vpop.permute.xlu0 %3531
      %3533 = vrot.lane.b32.xlu0 %v3438, 40
      %v3534 = vpop.permute.xlu0 %3533
      %vm3567 = vcmask 392512
      %3568 = vst.msk [vmem:[#allocation5] sm:$0xff] %vm3567, %v3472
      %3569 = vst.msk [vmem:[#allocation5 + $0x8] sm:$0xff] %vm3567, %v3474
      %3570 = vst.msk [vmem:[#allocation5 + $0x10] sm:$0xff] %vm3567, %v3476
      %3571 = vst.msk [vmem:[#allocation5 + $0x18] sm:$0xff] %vm3567, %v3478
      %3572 = vst.msk [vmem:[#allocation5 + $0x20] sm:$0xff] %vm3567, %v3480
      %3573 = vst.msk [vmem:[#allocation5 + $0x28] sm:$0xff] %vm3567, %v3482
      %3574 = vst.msk [vmem:[#allocation5 + $0x30] sm:$0xff] %vm3567, %v3484
      %3575 = vst.msk [vmem:[#allocation5 + $0x38] sm:$0xff] %vm3567, %v3486
      %3576 = vst.msk [vmem:[#allocation5 + $0x40] sm:$0xff] %vm3567, %v3488
      %3577 = vst.msk [vmem:[#allocation5 + $0x48] sm:$0xff] %vm3567, %v3490
      %3578 = vst.msk [vmem:[#allocation5 + $0x50] sm:$0xff] %vm3567, %v3492
      %3579 = vst.msk [vmem:[#allocation5 + $0x58] sm:$0xff] %vm3567, %v3494
      %3580 = vst.msk [vmem:[#allocation5 + $0x60] sm:$0xff] %vm3567, %v3496
      %3581 = vst.msk [vmem:[#allocation5 + $0x68] sm:$0xff] %vm3567, %v3498
      %3582 = vst.msk [vmem:[#allocation5 + $0x70] sm:$0xff] %vm3567, %v3500
      %3583 = vst.msk [vmem:[#allocation5 + $0x78] sm:$0xff] %vm3567, %v3502
      %3584 = vst.msk [vmem:[#allocation5 + $0x80] sm:$0xff] %vm3567, %v3504
      %3585 = vst.msk [vmem:[#allocation5 + $0x88] sm:$0xff] %vm3567, %v3506
      %3586 = vst.msk [vmem:[#allocation5 + $0x90] sm:$0xff] %vm3567, %v3508
      %3587 = vst.msk [vmem:[#allocation5 + $0x98] sm:$0xff] %vm3567, %v3510
      %3588 = vst.msk [vmem:[#allocation5 + $0xa0] sm:$0xff] %vm3567, %v3512
      %3589 = vst.msk [vmem:[#allocation5 + $0xa8] sm:$0xff] %vm3567, %v3514
      %3590 = vst.msk [vmem:[#allocation5 + $0xb0] sm:$0xff] %vm3567, %v3516
      %3591 = vst.msk [vmem:[#allocation5 + $0xb8] sm:$0xff] %vm3567, %v3518
      %3592 = vst.msk [vmem:[#allocation5 + $0xc0] sm:$0xff] %vm3567, %v3520
      %3593 = vst.msk [vmem:[#allocation5 + $0xc8] sm:$0xff] %vm3567, %v3522
      %3594 = vst.msk [vmem:[#allocation5 + $0xd0] sm:$0xff] %vm3567, %v3524
      %3595 = vst.msk [vmem:[#allocation5 + $0xd8] sm:$0xff] %vm3567, %v3526
      %3596 = vst.msk [vmem:[#allocation5 + $0xe0] sm:$0xff] %vm3567, %v3528
      %3597 = vst.msk [vmem:[#allocation5 + $0xe8] sm:$0xff] %vm3567, %v3530
      %3598 = vst.msk [vmem:[#allocation5 + $0xf0] sm:$0xff] %vm3567, %v3532
      %3599 = vst.msk [vmem:[#allocation5 + $0xf8] sm:$0xff] %vm3567, %v3534
      %s3600 = scalar_lea.vmem [#allocation3], 48
      %v3601 = vld [vmem:[%s3600] sm:$0xff]
      %v3602 = vld [vmem:[%s3600 + $0x8] sm:$0xff]
      %v3603 = vld [vmem:[%s3600 + $0x18] sm:$0xff]
      %v3604 = vld [vmem:[%s3600 + $0x20] sm:$0xff]
      %v3605 = vld [vmem:[%s3600 + $0x30] sm:$0xff]
      %v3606 = vld [vmem:[%s3600 + $0x38] sm:$0xff]
      %v3607 = vld [vmem:[%s3600 + $0x48] sm:$0xff]
      %v3608 = vld [vmem:[%s3600 + $0x50] sm:$0xff]
      %v3609 = vld [vmem:[%s3600 + $0x60] sm:$0xff]
      %v3610 = vld [vmem:[%s3600 + $0x68] sm:$0xff]
      %v3611 = vld [vmem:[%s3600 + $0x78] sm:$0xff]
      %v3612 = vld [vmem:[%s3600 + $0x80] sm:$0xff]
      %v3613 = vld [vmem:[%s3600 + $0x90] sm:$0xff]
      %v3614 = vld [vmem:[%s3600 + $0x98] sm:$0xff]
      %v3615 = vld [vmem:[%s3600 + $0xa8] sm:$0xff]
      %v3616 = vld [vmem:[%s3600 + $0xb0] sm:$0xff]
      %v3617 = vld [vmem:[%s3600 + $0xc0] sm:$0xff]
      %v3618 = vld [vmem:[%s3600 + $0xc8] sm:$0xff]
      %v3619 = vld [vmem:[%s3600 + $0xd8] sm:$0xff]
      %v3620 = vld [vmem:[%s3600 + $0xe0] sm:$0xff]
      %v3621 = vld [vmem:[%s3600 + $0xf0] sm:$0xff]
      %v3622 = vld [vmem:[%s3600 + $0xf8] sm:$0xff]
      %v3623 = vld [vmem:[%s3600 + $0x108] sm:$0xff]
      %v3624 = vld [vmem:[%s3600 + $0x110] sm:$0xff]
      %v3625 = vld [vmem:[%s3600 + $0x120] sm:$0xff]
      %v3626 = vld [vmem:[%s3600 + $0x128] sm:$0xff]
      %v3627 = vld [vmem:[%s3600 + $0x138] sm:$0xff]
      %v3628 = vld [vmem:[%s3600 + $0x140] sm:$0xff]
      %v3629 = vld [vmem:[%s3600 + $0x150] sm:$0xff]
      %v3630 = vld [vmem:[%s3600 + $0x158] sm:$0xff]
      %v3631 = vld [vmem:[%s3600 + $0x168] sm:$0xff]
      %v3632 = vld [vmem:[%s3600 + $0x170] sm:$0xff]
      %3665 = vrot.lane.b32.xlu0 %v3601, 48
      %v3666 = vpop.permute.xlu0 %3665
      %3667 = vrot.lane.b32.xlu0 %v3602, 48
      %v3668 = vpop.permute.xlu0 %3667
      %3669 = vrot.lane.b32.xlu0 %v3603, 48
      %v3670 = vpop.permute.xlu0 %3669
      %3671 = vrot.lane.b32.xlu0 %v3604, 48
      %v3672 = vpop.permute.xlu0 %3671
      %3673 = vrot.lane.b32.xlu0 %v3605, 48
      %v3674 = vpop.permute.xlu0 %3673
      %3675 = vrot.lane.b32.xlu0 %v3606, 48
      %v3676 = vpop.permute.xlu0 %3675
      %3677 = vrot.lane.b32.xlu0 %v3607, 48
      %v3678 = vpop.permute.xlu0 %3677
      %3679 = vrot.lane.b32.xlu0 %v3608, 48
      %v3680 = vpop.permute.xlu0 %3679
      %3681 = vrot.lane.b32.xlu0 %v3609, 48
      %v3682 = vpop.permute.xlu0 %3681
      %3683 = vrot.lane.b32.xlu0 %v3610, 48
      %v3684 = vpop.permute.xlu0 %3683
      %3685 = vrot.lane.b32.xlu0 %v3611, 48
      %v3686 = vpop.permute.xlu0 %3685
      %3687 = vrot.lane.b32.xlu0 %v3612, 48
      %v3688 = vpop.permute.xlu0 %3687
      %3689 = vrot.lane.b32.xlu0 %v3613, 48
      %v3690 = vpop.permute.xlu0 %3689
      %3691 = vrot.lane.b32.xlu0 %v3614, 48
      %v3692 = vpop.permute.xlu0 %3691
      %3693 = vrot.lane.b32.xlu0 %v3615, 48
      %v3694 = vpop.permute.xlu0 %3693
      %3695 = vrot.lane.b32.xlu0 %v3616, 48
      %v3696 = vpop.permute.xlu0 %3695
      %3697 = vrot.lane.b32.xlu0 %v3617, 48
      %v3698 = vpop.permute.xlu0 %3697
      %3699 = vrot.lane.b32.xlu0 %v3618, 48
      %v3700 = vpop.permute.xlu0 %3699
      %3701 = vrot.lane.b32.xlu0 %v3619, 48
      %v3702 = vpop.permute.xlu0 %3701
      %3703 = vrot.lane.b32.xlu0 %v3620, 48
      %v3704 = vpop.permute.xlu0 %3703
      %3705 = vrot.lane.b32.xlu0 %v3621, 48
      %v3706 = vpop.permute.xlu0 %3705
      %3707 = vrot.lane.b32.xlu0 %v3622, 48
      %v3708 = vpop.permute.xlu0 %3707
      %3709 = vrot.lane.b32.xlu0 %v3623, 48
      %v3710 = vpop.permute.xlu0 %3709
      %3711 = vrot.lane.b32.xlu0 %v3624, 48
      %v3712 = vpop.permute.xlu0 %3711
      %3713 = vrot.lane.b32.xlu0 %v3625, 48
      %v3714 = vpop.permute.xlu0 %3713
      %3715 = vrot.lane.b32.xlu0 %v3626, 48
      %v3716 = vpop.permute.xlu0 %3715
      %3717 = vrot.lane.b32.xlu0 %v3627, 48
      %v3718 = vpop.permute.xlu0 %3717
      %3719 = vrot.lane.b32.xlu0 %v3628, 48
      %v3720 = vpop.permute.xlu0 %3719
      %3721 = vrot.lane.b32.xlu0 %v3629, 48
      %v3722 = vpop.permute.xlu0 %3721
      %3723 = vrot.lane.b32.xlu0 %v3630, 48
      %v3724 = vpop.permute.xlu0 %3723
      %3725 = vrot.lane.b32.xlu0 %v3631, 48
      %v3726 = vpop.permute.xlu0 %3725
      %3727 = vrot.lane.b32.xlu0 %v3632, 48
      %v3728 = vpop.permute.xlu0 %3727
      %vm3761 = vcmask 458112
      %3762 = vst.msk [vmem:[#allocation5] sm:$0xff] %vm3761, %v3666
      %3763 = vst.msk [vmem:[#allocation5 + $0x8] sm:$0xff] %vm3761, %v3668
      %3764 = vst.msk [vmem:[#allocation5 + $0x10] sm:$0xff] %vm3761, %v3670
      %3765 = vst.msk [vmem:[#allocation5 + $0x18] sm:$0xff] %vm3761, %v3672
      %3766 = vst.msk [vmem:[#allocation5 + $0x20] sm:$0xff] %vm3761, %v3674
      %3767 = vst.msk [vmem:[#allocation5 + $0x28] sm:$0xff] %vm3761, %v3676
      %3768 = vst.msk [vmem:[#allocation5 + $0x30] sm:$0xff] %vm3761, %v3678
      %3769 = vst.msk [vmem:[#allocation5 + $0x38] sm:$0xff] %vm3761, %v3680
      %3770 = vst.msk [vmem:[#allocation5 + $0x40] sm:$0xff] %vm3761, %v3682
      %3771 = vst.msk [vmem:[#allocation5 + $0x48] sm:$0xff] %vm3761, %v3684
      %3772 = vst.msk [vmem:[#allocation5 + $0x50] sm:$0xff] %vm3761, %v3686
      %3773 = vst.msk [vmem:[#allocation5 + $0x58] sm:$0xff] %vm3761, %v3688
      %3774 = vst.msk [vmem:[#allocation5 + $0x60] sm:$0xff] %vm3761, %v3690
      %3775 = vst.msk [vmem:[#allocation5 + $0x68] sm:$0xff] %vm3761, %v3692
      %3776 = vst.msk [vmem:[#allocation5 + $0x70] sm:$0xff] %vm3761, %v3694
      %3777 = vst.msk [vmem:[#allocation5 + $0x78] sm:$0xff] %vm3761, %v3696
      %3778 = vst.msk [vmem:[#allocation5 + $0x80] sm:$0xff] %vm3761, %v3698
      %3779 = vst.msk [vmem:[#allocation5 + $0x88] sm:$0xff] %vm3761, %v3700
      %3780 = vst.msk [vmem:[#allocation5 + $0x90] sm:$0xff] %vm3761, %v3702
      %3781 = vst.msk [vmem:[#allocation5 + $0x98] sm:$0xff] %vm3761, %v3704
      %3782 = vst.msk [vmem:[#allocation5 + $0xa0] sm:$0xff] %vm3761, %v3706
      %3783 = vst.msk [vmem:[#allocation5 + $0xa8] sm:$0xff] %vm3761, %v3708
      %3784 = vst.msk [vmem:[#allocation5 + $0xb0] sm:$0xff] %vm3761, %v3710
      %3785 = vst.msk [vmem:[#allocation5 + $0xb8] sm:$0xff] %vm3761, %v3712
      %3786 = vst.msk [vmem:[#allocation5 + $0xc0] sm:$0xff] %vm3761, %v3714
      %3787 = vst.msk [vmem:[#allocation5 + $0xc8] sm:$0xff] %vm3761, %v3716
      %3788 = vst.msk [vmem:[#allocation5 + $0xd0] sm:$0xff] %vm3761, %v3718
      %3789 = vst.msk [vmem:[#allocation5 + $0xd8] sm:$0xff] %vm3761, %v3720
      %3790 = vst.msk [vmem:[#allocation5 + $0xe0] sm:$0xff] %vm3761, %v3722
      %3791 = vst.msk [vmem:[#allocation5 + $0xe8] sm:$0xff] %vm3761, %v3724
      %3792 = vst.msk [vmem:[#allocation5 + $0xf0] sm:$0xff] %vm3761, %v3726
      %3793 = vst.msk [vmem:[#allocation5 + $0xf8] sm:$0xff] %vm3761, %v3728
      %v3794 = vld [vmem:[%s3600 + $0x1] sm:$0xff]
      %v3795 = vld [vmem:[%s3600 + $0x9] sm:$0xff]
      %v3796 = vld [vmem:[%s3600 + $0x19] sm:$0xff]
      %v3797 = vld [vmem:[%s3600 + $0x21] sm:$0xff]
      %v3798 = vld [vmem:[%s3600 + $0x31] sm:$0xff]
      %v3799 = vld [vmem:[%s3600 + $0x39] sm:$0xff]
      %v3800 = vld [vmem:[%s3600 + $0x49] sm:$0xff]
      %v3801 = vld [vmem:[%s3600 + $0x51] sm:$0xff]
      %v3802 = vld [vmem:[%s3600 + $0x61] sm:$0xff]
      %v3803 = vld [vmem:[%s3600 + $0x69] sm:$0xff]
      %v3804 = vld [vmem:[%s3600 + $0x79] sm:$0xff]
      %v3805 = vld [vmem:[%s3600 + $0x81] sm:$0xff]
      %v3806 = vld [vmem:[%s3600 + $0x91] sm:$0xff]
      %v3807 = vld [vmem:[%s3600 + $0x99] sm:$0xff]
      %v3808 = vld [vmem:[%s3600 + $0xa9] sm:$0xff]
      %v3809 = vld [vmem:[%s3600 + $0xb1] sm:$0xff]
      %v3810 = vld [vmem:[%s3600 + $0xc1] sm:$0xff]
      %v3811 = vld [vmem:[%s3600 + $0xc9] sm:$0xff]
      %v3812 = vld [vmem:[%s3600 + $0xd9] sm:$0xff]
      %v3813 = vld [vmem:[%s3600 + $0xe1] sm:$0xff]
      %v3814 = vld [vmem:[%s3600 + $0xf1] sm:$0xff]
      %v3815 = vld [vmem:[%s3600 + $0xf9] sm:$0xff]
      %v3816 = vld [vmem:[%s3600 + $0x109] sm:$0xff]
      %v3817 = vld [vmem:[%s3600 + $0x111] sm:$0xff]
      %v3818 = vld [vmem:[%s3600 + $0x121] sm:$0xff]
      %v3819 = vld [vmem:[%s3600 + $0x129] sm:$0xff]
      %v3820 = vld [vmem:[%s3600 + $0x139] sm:$0xff]
      %v3821 = vld [vmem:[%s3600 + $0x141] sm:$0xff]
      %v3822 = vld [vmem:[%s3600 + $0x151] sm:$0xff]
      %v3823 = vld [vmem:[%s3600 + $0x159] sm:$0xff]
      %v3824 = vld [vmem:[%s3600 + $0x169] sm:$0xff]
      %v3825 = vld [vmem:[%s3600 + $0x171] sm:$0xff]
      %3858 = vrot.lane.b32.xlu0 %v3794, 56
      %v3859 = vpop.permute.xlu0 %3858
      %3860 = vrot.lane.b32.xlu0 %v3795, 56
      %v3861 = vpop.permute.xlu0 %3860
      %3862 = vrot.lane.b32.xlu0 %v3796, 56
      %v3863 = vpop.permute.xlu0 %3862
      %3864 = vrot.lane.b32.xlu0 %v3797, 56
      %v3865 = vpop.permute.xlu0 %3864
      %3866 = vrot.lane.b32.xlu0 %v3798, 56
      %v3867 = vpop.permute.xlu0 %3866
      %3868 = vrot.lane.b32.xlu0 %v3799, 56
      %v3869 = vpop.permute.xlu0 %3868
      %3870 = vrot.lane.b32.xlu0 %v3800, 56
      %v3871 = vpop.permute.xlu0 %3870
      %3872 = vrot.lane.b32.xlu0 %v3801, 56
      %v3873 = vpop.permute.xlu0 %3872
      %3874 = vrot.lane.b32.xlu0 %v3802, 56
      %v3875 = vpop.permute.xlu0 %3874
      %3876 = vrot.lane.b32.xlu0 %v3803, 56
      %v3877 = vpop.permute.xlu0 %3876
      %3878 = vrot.lane.b32.xlu0 %v3804, 56
      %v3879 = vpop.permute.xlu0 %3878
      %3880 = vrot.lane.b32.xlu0 %v3805, 56
      %v3881 = vpop.permute.xlu0 %3880
      %3882 = vrot.lane.b32.xlu0 %v3806, 56
      %v3883 = vpop.permute.xlu0 %3882
      %3884 = vrot.lane.b32.xlu0 %v3807, 56
      %v3885 = vpop.permute.xlu0 %3884
      %3886 = vrot.lane.b32.xlu0 %v3808, 56
      %v3887 = vpop.permute.xlu0 %3886
      %3888 = vrot.lane.b32.xlu0 %v3809, 56
      %v3889 = vpop.permute.xlu0 %3888
      %3890 = vrot.lane.b32.xlu0 %v3810, 56
      %v3891 = vpop.permute.xlu0 %3890
      %3892 = vrot.lane.b32.xlu0 %v3811, 56
      %v3893 = vpop.permute.xlu0 %3892
      %3894 = vrot.lane.b32.xlu0 %v3812, 56
      %v3895 = vpop.permute.xlu0 %3894
      %3896 = vrot.lane.b32.xlu0 %v3813, 56
      %v3897 = vpop.permute.xlu0 %3896
      %3898 = vrot.lane.b32.xlu0 %v3814, 56
      %v3899 = vpop.permute.xlu0 %3898
      %3900 = vrot.lane.b32.xlu0 %v3815, 56
      %v3901 = vpop.permute.xlu0 %3900
      %3902 = vrot.lane.b32.xlu0 %v3816, 56
      %v3903 = vpop.permute.xlu0 %3902
      %3904 = vrot.lane.b32.xlu0 %v3817, 56
      %v3905 = vpop.permute.xlu0 %3904
      %3906 = vrot.lane.b32.xlu0 %v3818, 56
      %v3907 = vpop.permute.xlu0 %3906
      %3908 = vrot.lane.b32.xlu0 %v3819, 56
      %v3909 = vpop.permute.xlu0 %3908
      %3910 = vrot.lane.b32.xlu0 %v3820, 56
      %v3911 = vpop.permute.xlu0 %3910
      %3912 = vrot.lane.b32.xlu0 %v3821, 56
      %v3913 = vpop.permute.xlu0 %3912
      %3914 = vrot.lane.b32.xlu0 %v3822, 56
      %v3915 = vpop.permute.xlu0 %3914
      %3916 = vrot.lane.b32.xlu0 %v3823, 56
      %v3917 = vpop.permute.xlu0 %3916
      %3918 = vrot.lane.b32.xlu0 %v3824, 56
      %v3919 = vpop.permute.xlu0 %3918
      %3920 = vrot.lane.b32.xlu0 %v3825, 56
      %v3921 = vpop.permute.xlu0 %3920
      %vm3954 = vcmask 523712
      %3955 = vst.msk [vmem:[#allocation5] sm:$0xff] %vm3954, %v3859
      %3956 = vst.msk [vmem:[#allocation5 + $0x8] sm:$0xff] %vm3954, %v3861
      %3957 = vst.msk [vmem:[#allocation5 + $0x10] sm:$0xff] %vm3954, %v3863
      %3958 = vst.msk [vmem:[#allocation5 + $0x18] sm:$0xff] %vm3954, %v3865
      %3959 = vst.msk [vmem:[#allocation5 + $0x20] sm:$0xff] %vm3954, %v3867
      %3960 = vst.msk [vmem:[#allocation5 + $0x28] sm:$0xff] %vm3954, %v3869
      %3961 = vst.msk [vmem:[#allocation5 + $0x30] sm:$0xff] %vm3954, %v3871
      %3962 = vst.msk [vmem:[#allocation5 + $0x38] sm:$0xff] %vm3954, %v3873
      %3963 = vst.msk [vmem:[#allocation5 + $0x40] sm:$0xff] %vm3954, %v3875
      %3964 = vst.msk [vmem:[#allocation5 + $0x48] sm:$0xff] %vm3954, %v3877
      %3965 = vst.msk [vmem:[#allocation5 + $0x50] sm:$0xff] %vm3954, %v3879
      %3966 = vst.msk [vmem:[#allocation5 + $0x58] sm:$0xff] %vm3954, %v3881
      %3967 = vst.msk [vmem:[#allocation5 + $0x60] sm:$0xff] %vm3954, %v3883
      %3968 = vst.msk [vmem:[#allocation5 + $0x68] sm:$0xff] %vm3954, %v3885
      %3969 = vst.msk [vmem:[#allocation5 + $0x70] sm:$0xff] %vm3954, %v3887
      %3970 = vst.msk [vmem:[#allocation5 + $0x78] sm:$0xff] %vm3954, %v3889
      %3971 = vst.msk [vmem:[#allocation5 + $0x80] sm:$0xff] %vm3954, %v3891
      %3972 = vst.msk [vmem:[#allocation5 + $0x88] sm:$0xff] %vm3954, %v3893
      %3973 = vst.msk [vmem:[#allocation5 + $0x90] sm:$0xff] %vm3954, %v3895
      %3974 = vst.msk [vmem:[#allocation5 + $0x98] sm:$0xff] %vm3954, %v3897
      %3975 = vst.msk [vmem:[#allocation5 + $0xa0] sm:$0xff] %vm3954, %v3899
      %3976 = vst.msk [vmem:[#allocation5 + $0xa8] sm:$0xff] %vm3954, %v3901
      %3977 = vst.msk [vmem:[#allocation5 + $0xb0] sm:$0xff] %vm3954, %v3903
      %3978 = vst.msk [vmem:[#allocation5 + $0xb8] sm:$0xff] %vm3954, %v3905
      %3979 = vst.msk [vmem:[#allocation5 + $0xc0] sm:$0xff] %vm3954, %v3907
      %3980 = vst.msk [vmem:[#allocation5 + $0xc8] sm:$0xff] %vm3954, %v3909
      %3981 = vst.msk [vmem:[#allocation5 + $0xd0] sm:$0xff] %vm3954, %v3911
      %3982 = vst.msk [vmem:[#allocation5 + $0xd8] sm:$0xff] %vm3954, %v3913
      %3983 = vst.msk [vmem:[#allocation5 + $0xe0] sm:$0xff] %vm3954, %v3915
      %3984 = vst.msk [vmem:[#allocation5 + $0xe8] sm:$0xff] %vm3954, %v3917
      %3985 = vst.msk [vmem:[#allocation5 + $0xf0] sm:$0xff] %vm3954, %v3919
      %3986 = vst.msk [vmem:[#allocation5 + $0xf8] sm:$0xff] %vm3954, %v3921
      %v3987 = vld [vmem:[%s3600 + $0x2] sm:$0xff]
      %v3988 = vld [vmem:[%s3600 + $0xa] sm:$0xff]
      %v3989 = vld [vmem:[%s3600 + $0x1a] sm:$0xff]
      %v3990 = vld [vmem:[%s3600 + $0x22] sm:$0xff]
      %v3991 = vld [vmem:[%s3600 + $0x32] sm:$0xff]
      %v3992 = vld [vmem:[%s3600 + $0x3a] sm:$0xff]
      %v3993 = vld [vmem:[%s3600 + $0x4a] sm:$0xff]
      %v3994 = vld [vmem:[%s3600 + $0x52] sm:$0xff]
      %v3995 = vld [vmem:[%s3600 + $0x62] sm:$0xff]
      %v3996 = vld [vmem:[%s3600 + $0x6a] sm:$0xff]
      %v3997 = vld [vmem:[%s3600 + $0x7a] sm:$0xff]
      %v3998 = vld [vmem:[%s3600 + $0x82] sm:$0xff]
      %v3999 = vld [vmem:[%s3600 + $0x92] sm:$0xff]
      %v4000 = vld [vmem:[%s3600 + $0x9a] sm:$0xff]
      %v4001 = vld [vmem:[%s3600 + $0xaa] sm:$0xff]
      %v4002 = vld [vmem:[%s3600 + $0xb2] sm:$0xff]
      %v4003 = vld [vmem:[%s3600 + $0xc2] sm:$0xff]
      %v4004 = vld [vmem:[%s3600 + $0xca] sm:$0xff]
      %v4005 = vld [vmem:[%s3600 + $0xda] sm:$0xff]
      %v4006 = vld [vmem:[%s3600 + $0xe2] sm:$0xff]
      %v4007 = vld [vmem:[%s3600 + $0xf2] sm:$0xff]
      %v4008 = vld [vmem:[%s3600 + $0xfa] sm:$0xff]
      %v4009 = vld [vmem:[%s3600 + $0x10a] sm:$0xff]
      %v4010 = vld [vmem:[%s3600 + $0x112] sm:$0xff]
      %v4011 = vld [vmem:[%s3600 + $0x122] sm:$0xff]
      %v4012 = vld [vmem:[%s3600 + $0x12a] sm:$0xff]
      %v4013 = vld [vmem:[%s3600 + $0x13a] sm:$0xff]
      %v4014 = vld [vmem:[%s3600 + $0x142] sm:$0xff]
      %v4015 = vld [vmem:[%s3600 + $0x152] sm:$0xff]
      %v4016 = vld [vmem:[%s3600 + $0x15a] sm:$0xff]
      %v4017 = vld [vmem:[%s3600 + $0x16a] sm:$0xff]
      %v4018 = vld [vmem:[%s3600 + $0x172] sm:$0xff]
      %4051 = vrot.lane.b32.xlu0 %v3987, 64
      %v4052 = vpop.permute.xlu0 %4051
      %4053 = vrot.lane.b32.xlu0 %v3988, 64
      %v4054 = vpop.permute.xlu0 %4053
      %4055 = vrot.lane.b32.xlu0 %v3989, 64
      %v4056 = vpop.permute.xlu0 %4055
      %4057 = vrot.lane.b32.xlu0 %v3990, 64
      %v4058 = vpop.permute.xlu0 %4057
      %4059 = vrot.lane.b32.xlu0 %v3991, 64
      %v4060 = vpop.permute.xlu0 %4059
      %4061 = vrot.lane.b32.xlu0 %v3992, 64
      %v4062 = vpop.permute.xlu0 %4061
      %4063 = vrot.lane.b32.xlu0 %v3993, 64
      %v4064 = vpop.permute.xlu0 %4063
      %4065 = vrot.lane.b32.xlu0 %v3994, 64
      %v4066 = vpop.permute.xlu0 %4065
      %4067 = vrot.lane.b32.xlu0 %v3995, 64
      %v4068 = vpop.permute.xlu0 %4067
      %4069 = vrot.lane.b32.xlu0 %v3996, 64
      %v4070 = vpop.permute.xlu0 %4069
      %4071 = vrot.lane.b32.xlu0 %v3997, 64
      %v4072 = vpop.permute.xlu0 %4071
      %4073 = vrot.lane.b32.xlu0 %v3998, 64
      %v4074 = vpop.permute.xlu0 %4073
      %4075 = vrot.lane.b32.xlu0 %v3999, 64
      %v4076 = vpop.permute.xlu0 %4075
      %4077 = vrot.lane.b32.xlu0 %v4000, 64
      %v4078 = vpop.permute.xlu0 %4077
      %4079 = vrot.lane.b32.xlu0 %v4001, 64
      %v4080 = vpop.permute.xlu0 %4079
      %4081 = vrot.lane.b32.xlu0 %v4002, 64
      %v4082 = vpop.permute.xlu0 %4081
      %4083 = vrot.lane.b32.xlu0 %v4003, 64
      %v4084 = vpop.permute.xlu0 %4083
      %4085 = vrot.lane.b32.xlu0 %v4004, 64
      %v4086 = vpop.permute.xlu0 %4085
      %4087 = vrot.lane.b32.xlu0 %v4005, 64
      %v4088 = vpop.permute.xlu0 %4087
      %4089 = vrot.lane.b32.xlu0 %v4006, 64
      %v4090 = vpop.permute.xlu0 %4089
      %4091 = vrot.lane.b32.xlu0 %v4007, 64
      %v4092 = vpop.permute.xlu0 %4091
      %4093 = vrot.lane.b32.xlu0 %v4008, 64
      %v4094 = vpop.permute.xlu0 %4093
      %4095 = vrot.lane.b32.xlu0 %v4009, 64
      %v4096 = vpop.permute.xlu0 %4095
      %4097 = vrot.lane.b32.xlu0 %v4010, 64
      %v4098 = vpop.permute.xlu0 %4097
      %4099 = vrot.lane.b32.xlu0 %v4011, 64
      %v4100 = vpop.permute.xlu0 %4099
      %4101 = vrot.lane.b32.xlu0 %v4012, 64
      %v4102 = vpop.permute.xlu0 %4101
      %4103 = vrot.lane.b32.xlu0 %v4013, 64
      %v4104 = vpop.permute.xlu0 %4103
      %4105 = vrot.lane.b32.xlu0 %v4014, 64
      %v4106 = vpop.permute.xlu0 %4105
      %4107 = vrot.lane.b32.xlu0 %v4015, 64
      %v4108 = vpop.permute.xlu0 %4107
      %4109 = vrot.lane.b32.xlu0 %v4016, 64
      %v4110 = vpop.permute.xlu0 %4109
      %4111 = vrot.lane.b32.xlu0 %v4017, 64
      %v4112 = vpop.permute.xlu0 %4111
      %4113 = vrot.lane.b32.xlu0 %v4018, 64
      %v4114 = vpop.permute.xlu0 %4113
      %vm4147 = vcmask 589312
      %4148 = vst.msk [vmem:[#allocation5] sm:$0xff] %vm4147, %v4052
      %4149 = vst.msk [vmem:[#allocation5 + $0x8] sm:$0xff] %vm4147, %v4054
      %4150 = vst.msk [vmem:[#allocation5 + $0x10] sm:$0xff] %vm4147, %v4056
      %4151 = vst.msk [vmem:[#allocation5 + $0x18] sm:$0xff] %vm4147, %v4058
      %4152 = vst.msk [vmem:[#allocation5 + $0x20] sm:$0xff] %vm4147, %v4060
      %4153 = vst.msk [vmem:[#allocation5 + $0x28] sm:$0xff] %vm4147, %v4062
      %4154 = vst.msk [vmem:[#allocation5 + $0x30] sm:$0xff] %vm4147, %v4064
      %4155 = vst.msk [vmem:[#allocation5 + $0x38] sm:$0xff] %vm4147, %v4066
      %4156 = vst.msk [vmem:[#allocation5 + $0x40] sm:$0xff] %vm4147, %v4068
      %4157 = vst.msk [vmem:[#allocation5 + $0x48] sm:$0xff] %vm4147, %v4070
      %4158 = vst.msk [vmem:[#allocation5 + $0x50] sm:$0xff] %vm4147, %v4072
      %4159 = vst.msk [vmem:[#allocation5 + $0x58] sm:$0xff] %vm4147, %v4074
      %4160 = vst.msk [vmem:[#allocation5 + $0x60] sm:$0xff] %vm4147, %v4076
      %4161 = vst.msk [vmem:[#allocation5 + $0x68] sm:$0xff] %vm4147, %v4078
      %4162 = vst.msk [vmem:[#allocation5 + $0x70] sm:$0xff] %vm4147, %v4080
      %4163 = vst.msk [vmem:[#allocation5 + $0x78] sm:$0xff] %vm4147, %v4082
      %4164 = vst.msk [vmem:[#allocation5 + $0x80] sm:$0xff] %vm4147, %v4084
      %4165 = vst.msk [vmem:[#allocation5 + $0x88] sm:$0xff] %vm4147, %v4086
      %4166 = vst.msk [vmem:[#allocation5 + $0x90] sm:$0xff] %vm4147, %v4088
      %4167 = vst.msk [vmem:[#allocation5 + $0x98] sm:$0xff] %vm4147, %v4090
      %4168 = vst.msk [vmem:[#allocation5 + $0xa0] sm:$0xff] %vm4147, %v4092
      %4169 = vst.msk [vmem:[#allocation5 + $0xa8] sm:$0xff] %vm4147, %v4094
      %4170 = vst.msk [vmem:[#allocation5 + $0xb0] sm:$0xff] %vm4147, %v4096
      %4171 = vst.msk [vmem:[#allocation5 + $0xb8] sm:$0xff] %vm4147, %v4098
      %4172 = vst.msk [vmem:[#allocation5 + $0xc0] sm:$0xff] %vm4147, %v4100
      %4173 = vst.msk [vmem:[#allocation5 + $0xc8] sm:$0xff] %vm4147, %v4102
      %4174 = vst.msk [vmem:[#allocation5 + $0xd0] sm:$0xff] %vm4147, %v4104
      %4175 = vst.msk [vmem:[#allocation5 + $0xd8] sm:$0xff] %vm4147, %v4106
      %4176 = vst.msk [vmem:[#allocation5 + $0xe0] sm:$0xff] %vm4147, %v4108
      %4177 = vst.msk [vmem:[#allocation5 + $0xe8] sm:$0xff] %vm4147, %v4110
      %4178 = vst.msk [vmem:[#allocation5 + $0xf0] sm:$0xff] %vm4147, %v4112
      %4179 = vst.msk [vmem:[#allocation5 + $0xf8] sm:$0xff] %vm4147, %v4114
      %v4180 = vld [vmem:[#allocation5] sm:$0xff]
      %v4181 = vld [vmem:[#allocation5 + $0x8] sm:$0xff]
      %v4182 = vld [vmem:[#allocation5 + $0x10] sm:$0xff]
      %v4183 = vld [vmem:[#allocation5 + $0x18] sm:$0xff]
      %v4184 = vld [vmem:[#allocation5 + $0x20] sm:$0xff]
      %v4185 = vld [vmem:[#allocation5 + $0x28] sm:$0xff]
      %v4186 = vld [vmem:[#allocation5 + $0x30] sm:$0xff]
      %v4187 = vld [vmem:[#allocation5 + $0x38] sm:$0xff]
      %v4188 = vld [vmem:[#allocation5 + $0x40] sm:$0xff]
      %v4189 = vld [vmem:[#allocation5 + $0x48] sm:$0xff]
      %v4190 = vld [vmem:[#allocation5 + $0x50] sm:$0xff]
      %v4191 = vld [vmem:[#allocation5 + $0x58] sm:$0xff]
      %v4192 = vld [vmem:[#allocation5 + $0x60] sm:$0xff]
      %v4193 = vld [vmem:[#allocation5 + $0x68] sm:$0xff]
      %v4194 = vld [vmem:[#allocation5 + $0x70] sm:$0xff]
      %v4195 = vld [vmem:[#allocation5 + $0x78] sm:$0xff]
      %v4196 = vld [vmem:[#allocation5 + $0x80] sm:$0xff]
      %v4197 = vld [vmem:[#allocation5 + $0x88] sm:$0xff]
      %v4198 = vld [vmem:[#allocation5 + $0x90] sm:$0xff]
      %v4199 = vld [vmem:[#allocation5 + $0x98] sm:$0xff]
      %v4200 = vld [vmem:[#allocation5 + $0xa0] sm:$0xff]
      %v4201 = vld [vmem:[#allocation5 + $0xa8] sm:$0xff]
      %v4202 = vld [vmem:[#allocation5 + $0xb0] sm:$0xff]
      %v4203 = vld [vmem:[#allocation5 + $0xb8] sm:$0xff]
      %v4204 = vld [vmem:[#allocation5 + $0xc0] sm:$0xff]
      %v4205 = vld [vmem:[#allocation5 + $0xc8] sm:$0xff]
      %v4206 = vld [vmem:[#allocation5 + $0xd0] sm:$0xff]
      %v4207 = vld [vmem:[#allocation5 + $0xd8] sm:$0xff]
      %v4208 = vld [vmem:[#allocation5 + $0xe0] sm:$0xff]
      %v4209 = vld [vmem:[#allocation5 + $0xe8] sm:$0xff]
      %v4210 = vld [vmem:[#allocation5 + $0xf0] sm:$0xff]
      %v4211 = vld [vmem:[#allocation5 + $0xf8] sm:$0xff]
      %v4212 = vld [vmem:[%s4] sm:$0xff]
      %v4213 = vld [vmem:[%s4 + $0x8] sm:$0xff]
      %v4214 = vld [vmem:[%s4 + $0x10] sm:$0xff]
      %v4215 = vld [vmem:[%s4 + $0x18] sm:$0xff]
      %v4216 = vld [vmem:[%s4 + $0x20] sm:$0xff]
      %v4217 = vld [vmem:[%s4 + $0x28] sm:$0xff]
      %v4218 = vld [vmem:[%s4 + $0x30] sm:$0xff]
      %v4219 = vld [vmem:[%s4 + $0x38] sm:$0xff]
      %v4220 = vld [vmem:[%s4 + $0x40] sm:$0xff]
      %vm4221 = vcmask 588800
      %v4223 = vsel %vm4221, %v4180, 0
      %v4226 = vsel %vm4221, %v4181, 0
      %v4229 = vsel %vm4221, %v4182, 0
      %v4232 = vsel %vm4221, %v4183, 0
      %v4235 = vsel %vm4221, %v4184, 0
      %v4238 = vsel %vm4221, %v4185, 0
      %v4241 = vsel %vm4221, %v4186, 0
      %v4244 = vsel %vm4221, %v4187, 0
      %v4247 = vsel %vm4221, %v4188, 0
      %v4250 = vsel %vm4221, %v4189, 0
      %v4253 = vsel %vm4221, %v4190, 0
      %v4256 = vsel %vm4221, %v4191, 0
      %v4259 = vsel %vm4221, %v4192, 0
      %v4262 = vsel %vm4221, %v4193, 0
      %v4265 = vsel %vm4221, %v4194, 0
      %v4268 = vsel %vm4221, %v4195, 0
      %v4271 = vsel %vm4221, %v4196, 0
      %v4274 = vsel %vm4221, %v4197, 0
      %v4277 = vsel %vm4221, %v4198, 0
      %v4280 = vsel %vm4221, %v4199, 0
      %v4283 = vsel %vm4221, %v4200, 0
      %v4286 = vsel %vm4221, %v4201, 0
      %v4289 = vsel %vm4221, %v4202, 0
      %v4292 = vsel %vm4221, %v4203, 0
      %v4295 = vsel %vm4221, %v4204, 0
      %v4298 = vsel %vm4221, %v4205, 0
      %v4301 = vsel %vm4221, %v4206, 0
      %v4304 = vsel %vm4221, %v4207, 0
      %v4307 = vsel %vm4221, %v4208, 0
      %v4310 = vsel %vm4221, %v4209, 0
      %v4313 = vsel %vm4221, %v4210, 0
      %v4316 = vsel %vm4221, %v4211, 0
      %4318 = vmatprep.subr.mxu0 0.0
      %4319 = vmatpush1.msra.mxu0 0.0
      %4320 = vmatprep.subr.mxu0 0.0
      %4321 = vmatpush1.msra.mxu0 0.0
      %4322 = vmatprep.subr.mxu0 0.0
      %4323 = vmatpush1.msra.mxu0 0.0
      %4324 = vmatprep.subr.mxu0 0.0
      %4325 = vmatpush1.msra.mxu0 0.0
      %4326 = vmatprep.subr.mxu0 0.0
      %4327 = vmatpush1.msra.mxu0 0.0
      %4328 = vmatprep.subr.mxu0 0.0
      %4329 = vmatpush1.msra.mxu0 0.0
      %4330 = vmatprep.subr.mxu0 0.0
      %4331 = vmatpush1.msra.mxu0 0.0
      %4332 = vmatprep.subr.mxu0 0.0
      %4333 = vmatpush1.msra.mxu0 %v4220
      %4334 = vmatprep.subr.mxu0 0.0
      %4335 = vmatpush1.msra.mxu0 %v4219
      %4336 = vmatprep.subr.mxu0 0.0
      %4337 = vmatpush1.msra.mxu0 %v4218
      %4338 = vmatprep.subr.mxu0 0.0
      %4339 = vmatpush1.msra.mxu0 %v4217
      %4340 = vmatprep.subr.mxu0 0.0
      %4341 = vmatpush1.msra.mxu0 %v4216
      %4342 = vmatprep.subr.mxu0 0.0
      %4343 = vmatpush1.msra.mxu0 %v4215
      %4344 = vmatprep.subr.mxu0 0.0
      %4345 = vmatpush1.msra.mxu0 %v4214
      %4346 = vmatprep.subr.mxu0 0.0
      %4347 = vmatpush1.msra.mxu0 %v4213
      %4348 = vmatprep.subr.mxu0 0.0
      %4349 = vmatpush1.msra.mxu0 %v4212
      %4350 = vmatprep.subr.mxu0 0.0
      %4351 = vmatpush2.msra.mxu0 0.0
      %4352 = vmatprep.subr.mxu0 0.0
      %4353 = vmatpush2.msra.mxu0 0.0
      %4354 = vmatprep.subr.mxu0 0.0
      %4355 = vmatpush2.msra.mxu0 0.0
      %4356 = vmatprep.subr.mxu0 0.0
      %4357 = vmatpush2.msra.mxu0 0.0
      %4358 = vmatprep.subr.mxu0 0.0
      %4359 = vmatpush2.msra.mxu0 0.0
      %4360 = vmatprep.subr.mxu0 0.0
      %4361 = vmatpush2.msra.mxu0 0.0
      %4362 = vmatprep.subr.mxu0 0.0
      %4363 = vmatpush2.msra.mxu0 0.0
      %4364 = vmatprep.subr.mxu0 0.0
      %4365 = vmatpush2.msra.mxu0 0.0
      %4366 = vmatprep.subr.mxu0 0.0
      %4367 = vmatpush2.msra.mxu0 0.0
      %4368 = vmatprep.subr.mxu0 0.0
      %4369 = vmatpush2.msra.mxu0 0.0
      %4370 = vmatprep.subr.mxu0 0.0
      %4371 = vmatpush2.msra.mxu0 0.0
      %4372 = vmatprep.subr.mxu0 0.0
      %4373 = vmatpush2.msra.mxu0 0.0
      %4374 = vmatprep.subr.mxu0 0.0
      %4375 = vmatpush2.msra.mxu0 0.0
      %4376 = vmatprep.subr.mxu0 0.0
      %4377 = vmatpush2.msra.mxu0 0.0
      %4378 = vmatprep.subr.mxu0 0.0
      %4379 = vmatpush2.msra.mxu0 0.0
      %4380 = vmatprep.subr.mxu0 0.0
      %4381 = vmatpush2.msra.mxu0 0.0
      %4382 = vmatprep.mubr.f32.mxu0 0.0
      %4383 = vmatmul.mubr.f32.gmra.mxu0 %v4223
      %v4384 = vpop.f32.mrf.mxu0
      %v4385 = vadd.f32 0.0, %v4384
      %v4386 = vpop.f32.mrf.mxu0
      %4387 = vmatprep.mubr.f32.mxu0 0.0
      %4388 = vmatmul.mubr.f32.gmra.mxu0 %v4226
      %v4389 = vpop.f32.mrf.mxu0
      %v4390 = vadd.f32 0.0, %v4389
      %v4391 = vpop.f32.mrf.mxu0
      %4392 = vmatprep.mubr.f32.mxu0 0.0
      %4393 = vmatmul.mubr.f32.gmra.mxu0 %v4229
      %v4394 = vpop.f32.mrf.mxu0
      %v4395 = vadd.f32 0.0, %v4394
      %v4396 = vpop.f32.mrf.mxu0
      %4397 = vmatprep.mubr.f32.mxu0 0.0
      %4398 = vmatmul.mubr.f32.gmra.mxu0 %v4232
      %v4399 = vpop.f32.mrf.mxu0
      %v4400 = vadd.f32 0.0, %v4399
      %v4401 = vpop.f32.mrf.mxu0
      %4402 = vmatprep.mubr.f32.mxu0 0.0
      %4403 = vmatmul.mubr.f32.gmra.mxu0 %v4235
      %v4404 = vpop.f32.mrf.mxu0
      %v4405 = vadd.f32 0.0, %v4404
      %v4406 = vpop.f32.mrf.mxu0
      %4407 = vmatprep.mubr.f32.mxu0 0.0
      %4408 = vmatmul.mubr.f32.gmra.mxu0 %v4238
      %v4409 = vpop.f32.mrf.mxu0
      %v4410 = vadd.f32 0.0, %v4409
      %v4411 = vpop.f32.mrf.mxu0
      %4412 = vmatprep.mubr.f32.mxu0 0.0
      %4413 = vmatmul.mubr.f32.gmra.mxu0 %v4241
      %v4414 = vpop.f32.mrf.mxu0
      %v4415 = vadd.f32 0.0, %v4414
      %v4416 = vpop.f32.mrf.mxu0
      %4417 = vmatprep.mubr.f32.mxu0 0.0
      %4418 = vmatmul.mubr.f32.gmra.mxu0 %v4244
      %v4419 = vpop.f32.mrf.mxu0
      %v4420 = vadd.f32 0.0, %v4419
      %v4421 = vpop.f32.mrf.mxu0
      %4422 = vmatprep.mubr.f32.mxu0 0.0
      %4423 = vmatmul.mubr.f32.gmra.mxu0 %v4247
      %v4424 = vpop.f32.mrf.mxu0
      %v4425 = vadd.f32 0.0, %v4424
      %v4426 = vpop.f32.mrf.mxu0
      %4427 = vmatprep.mubr.f32.mxu0 0.0
      %4428 = vmatmul.mubr.f32.gmra.mxu0 %v4250
      %v4429 = vpop.f32.mrf.mxu0
      %v4430 = vadd.f32 0.0, %v4429
      %v4431 = vpop.f32.mrf.mxu0
      %4432 = vmatprep.mubr.f32.mxu0 0.0
      %4433 = vmatmul.mubr.f32.gmra.mxu0 %v4253
      %v4434 = vpop.f32.mrf.mxu0
      %v4435 = vadd.f32 0.0, %v4434
      %v4436 = vpop.f32.mrf.mxu0
      %4437 = vmatprep.mubr.f32.mxu0 0.0
      %4438 = vmatmul.mubr.f32.gmra.mxu0 %v4256
      %v4439 = vpop.f32.mrf.mxu0
      %v4440 = vadd.f32 0.0, %v4439
      %v4441 = vpop.f32.mrf.mxu0
      %4442 = vmatprep.mubr.f32.mxu0 0.0
      %4443 = vmatmul.mubr.f32.gmra.mxu0 %v4259
      %v4444 = vpop.f32.mrf.mxu0
      %v4445 = vadd.f32 0.0, %v4444
      %v4446 = vpop.f32.mrf.mxu0
      %4447 = vmatprep.mubr.f32.mxu0 0.0
      %4448 = vmatmul.mubr.f32.gmra.mxu0 %v4262
      %v4449 = vpop.f32.mrf.mxu0
      %v4450 = vadd.f32 0.0, %v4449
      %v4451 = vpop.f32.mrf.mxu0
      %4452 = vmatprep.mubr.f32.mxu0 0.0
      %4453 = vmatmul.mubr.f32.gmra.mxu0 %v4265
      %v4454 = vpop.f32.mrf.mxu0
      %v4455 = vadd.f32 0.0, %v4454
      %v4456 = vpop.f32.mrf.mxu0
      %4457 = vmatprep.mubr.f32.mxu0 0.0
      %4458 = vmatmul.mubr.f32.gmra.mxu0 %v4268
      %v4459 = vpop.f32.mrf.mxu0
      %v4460 = vadd.f32 0.0, %v4459
      %v4461 = vpop.f32.mrf.mxu0
      %4462 = vmatprep.mubr.f32.mxu0 0.0
      %4463 = vmatmul.mubr.f32.gmra.mxu0 %v4271
      %v4464 = vpop.f32.mrf.mxu0
      %v4465 = vadd.f32 0.0, %v4464
      %v4466 = vpop.f32.mrf.mxu0
      %4467 = vmatprep.mubr.f32.mxu0 0.0
      %4468 = vmatmul.mubr.f32.gmra.mxu0 %v4274
      %v4469 = vpop.f32.mrf.mxu0
      %v4470 = vadd.f32 0.0, %v4469
      %v4471 = vpop.f32.mrf.mxu0
      %4472 = vmatprep.mubr.f32.mxu0 0.0
      %4473 = vmatmul.mubr.f32.gmra.mxu0 %v4277
      %v4474 = vpop.f32.mrf.mxu0
      %v4475 = vadd.f32 0.0, %v4474
      %v4476 = vpop.f32.mrf.mxu0
      %4477 = vmatprep.mubr.f32.mxu0 0.0
      %4478 = vmatmul.mubr.f32.gmra.mxu0 %v4280
      %v4479 = vpop.f32.mrf.mxu0
      %v4480 = vadd.f32 0.0, %v4479
      %v4481 = vpop.f32.mrf.mxu0
      %4482 = vmatprep.mubr.f32.mxu0 0.0
      %4483 = vmatmul.mubr.f32.gmra.mxu0 %v4283
      %v4484 = vpop.f32.mrf.mxu0
      %v4485 = vadd.f32 0.0, %v4484
      %v4486 = vpop.f32.mrf.mxu0
      %4487 = vmatprep.mubr.f32.mxu0 0.0
      %4488 = vmatmul.mubr.f32.gmra.mxu0 %v4286
      %v4489 = vpop.f32.mrf.mxu0
      %v4490 = vadd.f32 0.0, %v4489
      %v4491 = vpop.f32.mrf.mxu0
      %4492 = vmatprep.mubr.f32.mxu0 0.0
      %4493 = vmatmul.mubr.f32.gmra.mxu0 %v4289
      %v4494 = vpop.f32.mrf.mxu0
      %v4495 = vadd.f32 0.0, %v4494
      %v4496 = vpop.f32.mrf.mxu0
      %4497 = vmatprep.mubr.f32.mxu0 0.0
      %4498 = vmatmul.mubr.f32.gmra.mxu0 %v4292
      %v4499 = vpop.f32.mrf.mxu0
      %v4500 = vadd.f32 0.0, %v4499
      %v4501 = vpop.f32.mrf.mxu0
      %4502 = vmatprep.mubr.f32.mxu0 0.0
      %4503 = vmatmul.mubr.f32.gmra.mxu0 %v4295
      %v4504 = vpop.f32.mrf.mxu0
      %v4505 = vadd.f32 0.0, %v4504
      %v4506 = vpop.f32.mrf.mxu0
      %4507 = vmatprep.mubr.f32.mxu0 0.0
      %4508 = vmatmul.mubr.f32.gmra.mxu0 %v4298
      %v4509 = vpop.f32.mrf.mxu0
      %v4510 = vadd.f32 0.0, %v4509
      %v4511 = vpop.f32.mrf.mxu0
      %4512 = vmatprep.mubr.f32.mxu0 0.0
      %4513 = vmatmul.mubr.f32.gmra.mxu0 %v4301
      %v4514 = vpop.f32.mrf.mxu0
      %v4515 = vadd.f32 0.0, %v4514
      %v4516 = vpop.f32.mrf.mxu0
      %4517 = vmatprep.mubr.f32.mxu0 0.0
      %4518 = vmatmul.mubr.f32.gmra.mxu0 %v4304
      %v4519 = vpop.f32.mrf.mxu0
      %v4520 = vadd.f32 0.0, %v4519
      %v4521 = vpop.f32.mrf.mxu0
      %4522 = vmatprep.mubr.f32.mxu0 0.0
      %4523 = vmatmul.mubr.f32.gmra.mxu0 %v4307
      %v4524 = vpop.f32.mrf.mxu0
      %v4525 = vadd.f32 0.0, %v4524
      %v4526 = vpop.f32.mrf.mxu0
      %4527 = vmatprep.mubr.f32.mxu0 0.0
      %4528 = vmatmul.mubr.f32.gmra.mxu0 %v4310
      %v4529 = vpop.f32.mrf.mxu0
      %v4530 = vadd.f32 0.0, %v4529
      %v4531 = vpop.f32.mrf.mxu0
      %4532 = vmatprep.mubr.f32.mxu0 0.0
      %4533 = vmatmul.mubr.f32.gmra.mxu0 %v4313
      %v4534 = vpop.f32.mrf.mxu0
      %v4535 = vadd.f32 0.0, %v4534
      %v4536 = vpop.f32.mrf.mxu0
      %4537 = vmatprep.mubr.f32.mxu0 0.0
      %4538 = vmatmul.mubr.f32.gmra.mxu0 %v4316
      %v4539 = vpop.f32.mrf.mxu0
      %v4540 = vadd.f32 0.0, %v4539
      %v4541 = vpop.f32.mrf.mxu0
      %4542 = vdwg.mxu0
      %v4543 = vld [vmem:[%s5] sm:$0x1]
      %v4545 = vlaneseq
      %v4546 = vshrl.u32 %v4545, 7
      %v4547 = vsub.s32 0, %v4546
      %v4548 = vrot.slane %v4543, %v4547
      %v4550 = vmul.f32 %v4385, %v4548
      %v4551 = vmul.f32 %v4390, %v4548
      %v4552 = vmul.f32 %v4395, %v4548
      %v4553 = vmul.f32 %v4400, %v4548
      %v4554 = vmul.f32 %v4405, %v4548
      %v4555 = vmul.f32 %v4410, %v4548
      %v4556 = vmul.f32 %v4415, %v4548
      %v4557 = vmul.f32 %v4420, %v4548
      %v4558 = vmul.f32 %v4425, %v4548
      %v4559 = vmul.f32 %v4430, %v4548
      %v4560 = vmul.f32 %v4435, %v4548
      %v4561 = vmul.f32 %v4440, %v4548
      %v4562 = vmul.f32 %v4445, %v4548
      %v4563 = vmul.f32 %v4450, %v4548
      %v4564 = vmul.f32 %v4455, %v4548
      %v4565 = vmul.f32 %v4460, %v4548
      %v4566 = vmul.f32 %v4465, %v4548
      %v4567 = vmul.f32 %v4470, %v4548
      %v4568 = vmul.f32 %v4475, %v4548
      %v4569 = vmul.f32 %v4480, %v4548
      %v4570 = vmul.f32 %v4485, %v4548
      %v4571 = vmul.f32 %v4490, %v4548
      %v4572 = vmul.f32 %v4495, %v4548
      %v4573 = vmul.f32 %v4500, %v4548
      %v4574 = vmul.f32 %v4505, %v4548
      %v4575 = vmul.f32 %v4510, %v4548
      %v4576 = vmul.f32 %v4515, %v4548
      %v4577 = vmul.f32 %v4520, %v4548
      %v4578 = vmul.f32 %v4525, %v4548
      %v4579 = vmul.f32 %v4530, %v4548
      %v4580 = vmul.f32 %v4535, %v4548
      %v4581 = vmul.f32 %v4540, %v4548
      %v4582 = vld [vmem:[%s6] sm:$0x1]
      %v4584 = vlaneseq
      %v4585 = vshrl.u32 %v4584, 7
      %v4586 = vsub.s32 0, %v4585
      %v4587 = vrot.slane %v4582, %v4586
      %v4589 = vadd.f32 %v4550, %v4587
      %v4590 = vadd.f32 %v4551, %v4587
      %v4591 = vadd.f32 %v4552, %v4587
      %v4592 = vadd.f32 %v4553, %v4587
      %v4593 = vadd.f32 %v4554, %v4587
      %v4594 = vadd.f32 %v4555, %v4587
      %v4595 = vadd.f32 %v4556, %v4587
      %v4596 = vadd.f32 %v4557, %v4587
      %v4597 = vadd.f32 %v4558, %v4587
      %v4598 = vadd.f32 %v4559, %v4587
      %v4599 = vadd.f32 %v4560, %v4587
      %v4600 = vadd.f32 %v4561, %v4587
      %v4601 = vadd.f32 %v4562, %v4587
      %v4602 = vadd.f32 %v4563, %v4587
      %v4603 = vadd.f32 %v4564, %v4587
      %v4604 = vadd.f32 %v4565, %v4587
      %v4605 = vadd.f32 %v4566, %v4587
      %v4606 = vadd.f32 %v4567, %v4587
      %v4607 = vadd.f32 %v4568, %v4587
      %v4608 = vadd.f32 %v4569, %v4587
      %v4609 = vadd.f32 %v4570, %v4587
      %v4610 = vadd.f32 %v4571, %v4587
      %v4611 = vadd.f32 %v4572, %v4587
      %v4612 = vadd.f32 %v4573, %v4587
      %v4613 = vadd.f32 %v4574, %v4587
      %v4614 = vadd.f32 %v4575, %v4587
      %v4615 = vadd.f32 %v4576, %v4587
      %v4616 = vadd.f32 %v4577, %v4587
      %v4617 = vadd.f32 %v4578, %v4587
      %v4618 = vadd.f32 %v4579, %v4587
      %v4619 = vadd.f32 %v4580, %v4587
      %v4620 = vadd.f32 %v4581, %v4587
      %v4621 = vmax.f32 %v4589, 0.0
      %v4622 = vmax.f32 %v4590, 0.0
      %v4623 = vmax.f32 %v4591, 0.0
      %v4624 = vmax.f32 %v4592, 0.0
      %v4625 = vmax.f32 %v4593, 0.0
      %v4626 = vmax.f32 %v4594, 0.0
      %v4627 = vmax.f32 %v4595, 0.0
      %v4628 = vmax.f32 %v4596, 0.0
      %v4629 = vmax.f32 %v4597, 0.0
      %v4630 = vmax.f32 %v4598, 0.0
      %v4631 = vmax.f32 %v4599, 0.0
      %v4632 = vmax.f32 %v4600, 0.0
      %v4633 = vmax.f32 %v4601, 0.0
      %v4634 = vmax.f32 %v4602, 0.0
      %v4635 = vmax.f32 %v4603, 0.0
      %v4636 = vmax.f32 %v4604, 0.0
      %v4637 = vmax.f32 %v4605, 0.0
      %v4638 = vmax.f32 %v4606, 0.0
      %v4639 = vmax.f32 %v4607, 0.0
      %v4640 = vmax.f32 %v4608, 0.0
      %v4641 = vmax.f32 %v4609, 0.0
      %v4642 = vmax.f32 %v4610, 0.0
      %v4643 = vmax.f32 %v4611, 0.0
      %v4644 = vmax.f32 %v4612, 0.0
      %v4645 = vmax.f32 %v4613, 0.0
      %v4646 = vmax.f32 %v4614, 0.0
      %v4647 = vmax.f32 %v4615, 0.0
      %v4648 = vmax.f32 %v4616, 0.0
      %v4649 = vmax.f32 %v4617, 0.0
      %v4650 = vmax.f32 %v4618, 0.0
      %v4651 = vmax.f32 %v4619, 0.0
      %v4652 = vmax.f32 %v4620, 0.0
      %4653 = vst.msk [vmem:[%s278] sm:$0xff] %vm2482, %v4621
      %4654 = vst.msk [vmem:[%s278 + $0x8] sm:$0xff] %vm2482, %v4622
      %4655 = vst.msk [vmem:[%s278 + $0x10] sm:$0xff] %vm2482, %v4623
      %4656 = vst.msk [vmem:[%s278 + $0x18] sm:$0xff] %vm2482, %v4624
      %4657 = vst.msk [vmem:[%s278 + $0x20] sm:$0xff] %vm2482, %v4625
      %4658 = vst.msk [vmem:[%s278 + $0x28] sm:$0xff] %vm2482, %v4626
      %4659 = vst.msk [vmem:[%s278 + $0x30] sm:$0xff] %vm2482, %v4627
      %4660 = vst.msk [vmem:[%s278 + $0x38] sm:$0xff] %vm2482, %v4628
      %4661 = vst.msk [vmem:[%s278 + $0x40] sm:$0xff] %vm2482, %v4629
      %4662 = vst.msk [vmem:[%s278 + $0x48] sm:$0xff] %vm2482, %v4630
      %4663 = vst.msk [vmem:[%s278 + $0x50] sm:$0xff] %vm2482, %v4631
      %4664 = vst.msk [vmem:[%s278 + $0x58] sm:$0xff] %vm2482, %v4632
      %4665 = vst.msk [vmem:[%s278 + $0x60] sm:$0xff] %vm2482, %v4633
      %4666 = vst.msk [vmem:[%s278 + $0x68] sm:$0xff] %vm2482, %v4634
      %4667 = vst.msk [vmem:[%s278 + $0x70] sm:$0xff] %vm2482, %v4635
      %4668 = vst.msk [vmem:[%s278 + $0x78] sm:$0xff] %vm2482, %v4636
      %4669 = vst.msk [vmem:[%s278 + $0x80] sm:$0xff] %vm2482, %v4637
      %4670 = vst.msk [vmem:[%s278 + $0x88] sm:$0xff] %vm2482, %v4638
      %4671 = vst.msk [vmem:[%s278 + $0x90] sm:$0xff] %vm2482, %v4639
      %4672 = vst.msk [vmem:[%s278 + $0x98] sm:$0xff] %vm2482, %v4640
      %4673 = vst.msk [vmem:[%s278 + $0xa0] sm:$0xff] %vm2482, %v4641
      %4674 = vst.msk [vmem:[%s278 + $0xa8] sm:$0xff] %vm2482, %v4642
      %4675 = vst.msk [vmem:[%s278 + $0xb0] sm:$0xff] %vm2482, %v4643
      %4676 = vst.msk [vmem:[%s278 + $0xb8] sm:$0xff] %vm2482, %v4644
      %4677 = vst.msk [vmem:[%s278 + $0xc0] sm:$0xff] %vm2482, %v4645
      %4678 = vst.msk [vmem:[%s278 + $0xc8] sm:$0xff] %vm2482, %v4646
      %4679 = vst.msk [vmem:[%s278 + $0xd0] sm:$0xff] %vm2482, %v4647
      %4680 = vst.msk [vmem:[%s278 + $0xd8] sm:$0xff] %vm2482, %v4648
      %4681 = vst.msk [vmem:[%s278 + $0xe0] sm:$0xff] %vm2482, %v4649
      %4682 = vst.msk [vmem:[%s278 + $0xe8] sm:$0xff] %vm2482, %v4650
      %4683 = vst.msk [vmem:[%s278 + $0xf0] sm:$0xff] %vm2482, %v4651
      %4684 = vst.msk [vmem:[%s278 + $0xf8] sm:$0xff] %vm2482, %v4652
      %p4685 = scmp.lt.s32.totalorder %s18, 1
      %s4686 = scalar_select %p4685, %s18, 1
      %s4687 = smul.addr %s4686, 32
      %s4688 = smul.addr %s4687, 8
      %s4689 = scalar_lea.vmem %s7, %s4688
      // Predicated region
      $region49: #{double_conv_forward.1} parent=47 // pred_check
        %p4690 = pneg %p188
      $region50: #{double_conv_forward.1} parent=47 // pred_check_branch
        %4692 = sbr.rel (%p4690) target = $region52
      $region51: #{double_conv_forward.1} parent=47 // pred_region
        _
      $region52: #{double_conv_forward.1} parent=47 // pred_fallthru
        _
    $region48: #{double_conv_forward.1} parent=5 // pred_fallthru
      _
    %p4693 = scmp.le.s32.totalorder 2, %s13
    // Predicated region
    $region53: #{double_conv_forward.1} parent=5 // pred_check
      %p4694 = pneg %p4693
    $region54: #{double_conv_forward.1} parent=5 // pred_check_branch
      %4696 = sbr.rel (%p4694) target = $region56
    $region55: #{double_conv_forward.1} parent=5 // pred_region
      %s4697 = ssub.s32 %s13, 2
      // Predicated region
      $region57: #{double_conv_forward.1} parent=55 // pred_check
        %p4698 = pneg %p194
      $region58: #{double_conv_forward.1} parent=55 // pred_check_branch
        %4700 = sbr.rel (%p4698) target = $region60
      $region59: #{double_conv_forward.1} parent=55 // pred_region
        %p4701 = scmp.lt.s32.totalorder %s19, 1
        %s4702 = scalar_select %p4701, %s19, 1
        %s4703 = smul.addr %s4702, 32
        %s4704 = smul.addr %s4703, 8
        %s4705 = scalar_lea.vmem %s7, %s4704
      $region60: #{double_conv_forward.1} parent=55 // pred_fallthru
        _
    $region56: #{double_conv_forward.1} parent=5 // pred_fallthru
      _
  $region6: #{double_conv_forward.1} parent=0 // loop_footer
    %s17 = sadd.s32 1, %s13
  $region7: #{double_conv_forward.1} parent=0 // loop_footer_branch
    %12 = sbr.rel target = $region3
  $region8: #{double_conv_forward.1} parent=0 // loop_exit
    _

</llo_original>
